<compile_context>
chip_gen: v6e
topology: v6e:2x2x1
jax: 0.10.0
libtpu: 0.0.40
codegen_flags: <defaults>
</compile_context>

<pallas_src>
import math

import jax
import jax.numpy as jnp
from jax.experimental import pallas as pl
from jax.experimental.pallas import tpu as pltpu

# ---- scaled-down ViT-B/16 config ----
PATCH = 16                      # B_16 patch size
IMG = 64                        # 4x4 = 16 patches
C_IN = 3
B = 2                           # batch (static in the kernel)
D = 128                         # hidden dim (768 in real B/16)
H = 4                           # heads (12 in real B/16)
DH = D // H
MLP = 256                       # mlp dim (3072 in real B/16)
LAYERS = 2                      # depth (12 in real B/16)
NCLS = 2                        # model.fc = nn.Linear(in_features, 2)
NCLS_PAD = 128                  # lane-dense padded logits
N_PATCH = (IMG // PATCH) ** 2   # 16
S = N_PATCH + 1                 # 17 tokens (cls + patches)
S_PAD = ((S + 7) // 8) * 8      # 24 (sublane multiple)
BS = B * S_PAD                  # 48 flattened rows
CPP = C_IN * PATCH * PATCH      # 768
EPS = 1e-6                      # LayerNorm eps used by pytorch_pretrained_vit

F32 = jnp.float32
BF16 = jnp.bfloat16


def _layernorm(x, g, b):
    mu = jnp.mean(x, axis=-1, keepdims=True)
    xc = x - mu
    var = jnp.mean(xc * xc, axis=-1, keepdims=True)
    return xc * jax.lax.rsqrt(var + EPS) * g + b


# ---------------- fully fused ViT forward kernel (single grid step) ----------------

def vit_kernel(patches_ref, mask_ref, pw_ref, pb_ref, cls_ref, pos_ref,
               ln1w_ref, ln1b_ref, wqkv_ref, bqkv_ref, wo_ref, bo_ref,
               ln2w_ref, ln2b_ref, w1_ref, b1_ref, w2_ref, b2_ref,
               lnfw_ref, lnfb_ref, fcw_ref, fcb_ref,
               out_ref):
    # ---- patch embed + cls token + positional embed (vectorized build) ----
    pe = jnp.dot(patches_ref[...], pw_ref[...],
                 preferred_element_type=F32) + pb_ref[...]           # (B*N_PATCH, D)
    pe = pe.reshape(B, N_PATCH, D)
    cls_b = jnp.broadcast_to(cls_ref[...].reshape(1, 1, D), (B, 1, D))
    pad = jnp.zeros((B, S_PAD - S, D), F32)
    tok = jnp.concatenate([cls_b, pe, pad], axis=1)                  # (B, S_PAD, D)
    tok = tok + pos_ref[...][None, :, :]                             # pos padded, pad rows 0
    x = tok.reshape(BS, D)                                           # resident acts, f32

    neg_mask = mask_ref[...]            # (BS, BS): 0 in-batch & valid key, -1e30 elsewhere
    scale = 1.0 / math.sqrt(DH)

    for l in range(LAYERS):                                          # static layer loop
        # ---- multi-head self-attention (batch merged into the row/key dims) ----
        h1 = _layernorm(x, ln1w_ref[l], ln1b_ref[l])
        qkv = jnp.dot(h1.astype(BF16), wqkv_ref[l],
                      preferred_element_type=F32) + bqkv_ref[l]      # (BS, 3D)
        q = qkv[:, 0 * D:1 * D] * scale
        k = qkv[:, 1 * D:2 * D]
        v = qkv[:, 2 * D:3 * D]

        head_outs = []
        for hh in range(H):                                          # static head loop
            sl = slice(hh * DH, (hh + 1) * DH)
            qh = q[:, sl].astype(BF16)                               # (BS, DH)
            kh = k[:, sl].astype(BF16)
            vh = v[:, sl].astype(BF16)
            s = jax.lax.dot_general(qh, kh, (((1,), (1,)), ((), ())),
                                    preferred_element_type=F32)      # (BS, BS) = q @ k^T
            s = s + neg_mask
            s = s - jnp.max(s, axis=-1, keepdims=True)
            pr = jnp.exp(s)
            pr = pr * pl.reciprocal(jnp.sum(pr, axis=-1, keepdims=True),
                                    approx=True)
            head_outs.append(jnp.dot(pr.astype(BF16), vh,
                                     preferred_element_type=F32))    # (BS, DH)
        att = jnp.concatenate(head_outs, axis=-1).astype(BF16)       # (BS, D)
        # single fused output projection (K=128) instead of 4 K=32 passes
        x = x + jnp.dot(att, wo_ref[l], preferred_element_type=F32) + bo_ref[l]

        # ---- MLP ----
        h2 = _layernorm(x, ln2w_ref[l], ln2b_ref[l])
        m = jnp.dot(h2.astype(BF16), w1_ref[l],
                    preferred_element_type=F32) + b1_ref[l]
        # TODO(synk): PyTorch F.gelu defaults to exact erf; tanh approximation used here.
        m = jax.nn.gelu(m, approximate=True)
        m = jnp.dot(m.astype(BF16), w2_ref[l],
                    preferred_element_type=F32) + b2_ref[l]
        x = x + m

    # ---- final LN + classifier head on the cls token ----
    cls_tok = x.reshape(B, S_PAD, D)[:, 0, :]                        # (B, D) direct read
    hf = _layernorm(cls_tok, lnfw_ref[...], lnfb_ref[...])
    out_ref[...] = jnp.dot(hf.astype(BF16), fcw_ref[...],
                           preferred_element_type=F32) + fcb_ref[...]


# ---------------- wrapper ----------------

def vit_forward(x, params):
    assert x.shape == (B, C_IN, IMG, IMG)
    gh = IMG // PATCH
    # patch extraction glue: conv stride=P == unfold + matmul, (C,P,P) flatten order
    p = x.reshape(B, C_IN, gh, PATCH, gh, PATCH)
    p = p.transpose(0, 2, 4, 1, 3, 5).reshape(B * N_PATCH, CPP).astype(BF16)

    # block-diagonal (per-image) attention mask with padded key columns disabled,
    # computed once outside the kernel (hoisted broadcast, no in-kernel div/mod)
    row_b = jnp.arange(BS)[:, None] // S_PAD
    col = jnp.arange(BS)[None, :]
    valid = (row_b == col // S_PAD) & ((col % S_PAD) < S)
    neg_mask = jnp.where(valid, 0.0, -1e30).astype(jnp.float32)

    names = ['patch_w', 'patch_b', 'cls', 'pos',
             'ln1_w', 'ln1_b', 'w_qkv', 'b_qkv', 'w_o', 'b_o',
             'ln2_w', 'ln2_b', 'w_mlp1', 'b_mlp1', 'w_mlp2', 'b_mlp2',
             'lnf_w', 'lnf_b', 'fc_w', 'fc_b']

    def const_spec(a):                     # whole array resident for the single step
        n = a.ndim
        return pl.BlockSpec(a.shape, lambda i, _n=n: (0,) * _n)

    args = [p, neg_mask] + [params[n] for n in names]
    in_specs = [const_spec(a) for a in args]

    logits = pl.pallas_call(
        vit_kernel,
        grid=(1,),
        in_specs=in_specs,
        out_specs=pl.BlockSpec((B, NCLS_PAD), lambda i: (0, 0)),
        out_shape=jax.ShapeDtypeStruct((B, NCLS_PAD), jnp.float32),
        compiler_params=pltpu.CompilerParams(
            dimension_semantics=("arbitrary",)),
    )(*args)
    return logits[:, :NCLS]


def init_params(key):
    ks = iter(jax.random.split(key, 16))

    def dense(shape, scale=0.02, dtype=BF16):
        return (scale * jax.random.normal(next(ks), shape, jnp.float32)).astype(dtype)

    fc_w = jnp.zeros((D, NCLS_PAD), jnp.float32)
    fc_w = fc_w.at[:, :NCLS].set(
        0.02 * jax.random.normal(next(ks), (D, NCLS), jnp.float32)).astype(BF16)

    # positional embedding padded to S_PAD rows (pad rows zero) so the kernel
    # adds it with a single full broadcast store, no odd-offset sublane slices
    pos = 0.02 * jax.random.normal(next(ks), (S, D), jnp.float32)
    pos = jnp.concatenate([pos, jnp.zeros((S_PAD - S, D), jnp.float32)], axis=0)

    return {
        'patch_w': dense((CPP, D)),                              # bf16
        'patch_b': jnp.zeros((1, D), F32),
        'cls': (0.02 * jax.random.normal(next(ks), (1, D), jnp.float32)),
        'pos': pos,                                              # (S_PAD, D) f32
        'ln1_w': jnp.ones((LAYERS, 1, D), F32),
        'ln1_b': jnp.zeros((LAYERS, 1, D), F32),
        'w_qkv': dense((LAYERS, D, 3 * D)),                      # bf16, fused q|k|v
        'b_qkv': jnp.zeros((LAYERS, 1, 3 * D), F32),
        'w_o': dense((LAYERS, D, D)),                            # bf16
        'b_o': jnp.zeros((LAYERS, 1, D), F32),
        'ln2_w': jnp.ones((LAYERS, 1, D), F32),
        'ln2_b': jnp.zeros((LAYERS, 1, D), F32),
        'w_mlp1': dense((LAYERS, D, MLP)),                       # bf16
        'b_mlp1': jnp.zeros((LAYERS, 1, MLP), F32),
        'w_mlp2': dense((LAYERS, MLP, D)),                       # bf16
        'b_mlp2': jnp.zeros((LAYERS, 1, D), F32),
        'lnf_w': jnp.ones((1, D), F32),
        'lnf_b': jnp.zeros((1, D), F32),
        'fc_w': fc_w,                                            # bf16, lane-padded
        'fc_b': jnp.zeros((1, NCLS_PAD), F32),
    }


if __name__ == "__main__":
    key = jax.random.PRNGKey(0)
    kx, kp = jax.random.split(key)
    x = jax.random.normal(kx, (B, C_IN, IMG, IMG), jnp.float32)  # NCHW like PyTorch
    params = init_params(kp)

    fwd = jax.jit(vit_forward)
    out = jax.block_until_ready(fwd(x, params))
    assert out.shape == (B, NCLS) and out.dtype == jnp.float32
    assert bool(jnp.all(jnp.isfinite(out)))
    print("KERNEL_OK")
</pallas_src>

<mosaic_0001>
module attributes {stable_mosaic.version = 11 : i64} {
  func.func @vit_kernel(%arg0: i32, %arg1: memref<32x768xbf16, #tpu.memory_space<vmem>>, %arg2: memref<48x48xf32, #tpu.memory_space<vmem>>, %arg3: memref<768x128xbf16, #tpu.memory_space<vmem>>, %arg4: memref<1x128xf32, #tpu.memory_space<vmem>>, %arg5: memref<1x128xf32, #tpu.memory_space<vmem>>, %arg6: memref<24x128xf32, #tpu.memory_space<vmem>>, %arg7: memref<2x1x128xf32, #tpu.memory_space<vmem>>, %arg8: memref<2x1x128xf32, #tpu.memory_space<vmem>>, %arg9: memref<2x128x384xbf16, #tpu.memory_space<vmem>>, %arg10: memref<2x1x384xf32, #tpu.memory_space<vmem>>, %arg11: memref<2x128x128xbf16, #tpu.memory_space<vmem>>, %arg12: memref<2x1x128xf32, #tpu.memory_space<vmem>>, %arg13: memref<2x1x128xf32, #tpu.memory_space<vmem>>, %arg14: memref<2x1x128xf32, #tpu.memory_space<vmem>>, %arg15: memref<2x128x256xbf16, #tpu.memory_space<vmem>>, %arg16: memref<2x1x256xf32, #tpu.memory_space<vmem>>, %arg17: memref<2x256x128xbf16, #tpu.memory_space<vmem>>, %arg18: memref<2x1x128xf32, #tpu.memory_space<vmem>>, %arg19: memref<1x128xf32, #tpu.memory_space<vmem>>, %arg20: memref<1x128xf32, #tpu.memory_space<vmem>>, %arg21: memref<128x128xbf16, #tpu.memory_space<vmem>>, %arg22: memref<1x128xf32, #tpu.memory_space<vmem>>, %arg23: memref<2x128xf32, #tpu.memory_space<vmem>>) attributes {dimension_semantics = [#tpu.dimension_semantics<arbitrary>], iteration_bounds = array<i64: 1>, scalar_prefetch = 0 : i64, scratch_operands = 0 : i64, tpu.core_type = #tpu.core_type<tc>, window_params = [{pipeline_mode = #tpu.pipeline_mode<synchronous>, transform_indices = @transform_0, window_bounds = array<i64: 32, 768>}, {pipeline_mode = #tpu.pipeline_mode<synchronous>, transform_indices = @transform_1, window_bounds = array<i64: 48, 48>}, {pipeline_mode = #tpu.pipeline_mode<synchronous>, transform_indices = @transform_2, window_bounds = array<i64: 768, 128>}, {pipeline_mode = #tpu.pipeline_mode<synchronous>, transform_indices = @transform_3, window_bounds = array<i64: 1, 128>}, {pipeline_mode = #tpu.pipeline_mode<synchronous>, transform_indices = @transform_4, window_bounds = array<i64: 1, 128>}, {pipeline_mode = #tpu.pipeline_mode<synchronous>, transform_indices = @transform_5, window_bounds = array<i64: 24, 128>}, {pipeline_mode = #tpu.pipeline_mode<synchronous>, transform_indices = @transform_6, window_bounds = array<i64: 2, 1, 128>}, {pipeline_mode = #tpu.pipeline_mode<synchronous>, transform_indices = @transform_7, window_bounds = array<i64: 2, 1, 128>}, {pipeline_mode = #tpu.pipeline_mode<synchronous>, transform_indices = @transform_8, window_bounds = array<i64: 2, 128, 384>}, {pipeline_mode = #tpu.pipeline_mode<synchronous>, transform_indices = @transform_9, window_bounds = array<i64: 2, 1, 384>}, {pipeline_mode = #tpu.pipeline_mode<synchronous>, transform_indices = @transform_10, window_bounds = array<i64: 2, 128, 128>}, {pipeline_mode = #tpu.pipeline_mode<synchronous>, transform_indices = @transform_11, window_bounds = array<i64: 2, 1, 128>}, {pipeline_mode = #tpu.pipeline_mode<synchronous>, transform_indices = @transform_12, window_bounds = array<i64: 2, 1, 128>}, {pipeline_mode = #tpu.pipeline_mode<synchronous>, transform_indices = @transform_13, window_bounds = array<i64: 2, 1, 128>}, {pipeline_mode = #tpu.pipeline_mode<synchronous>, transform_indices = @transform_14, window_bounds = array<i64: 2, 128, 256>}, {pipeline_mode = #tpu.pipeline_mode<synchronous>, transform_indices = @transform_15, window_bounds = array<i64: 2, 1, 256>}, {pipeline_mode = #tpu.pipeline_mode<synchronous>, transform_indices = @transform_16, window_bounds = array<i64: 2, 256, 128>}, {pipeline_mode = #tpu.pipeline_mode<synchronous>, transform_indices = @transform_17, window_bounds = array<i64: 2, 1, 128>}, {pipeline_mode = #tpu.pipeline_mode<synchronous>, transform_indices = @transform_18, window_bounds = array<i64: 1, 128>}, {pipeline_mode = #tpu.pipeline_mode<synchronous>, transform_indices = @transform_19, window_bounds = array<i64: 1, 128>}, {pipeline_mode = #tpu.pipeline_mode<synchronous>, transform_indices = @transform_20, window_bounds = array<i64: 128, 128>}, {pipeline_mode = #tpu.pipeline_mode<synchronous>, transform_indices = @transform_21, window_bounds = array<i64: 1, 128>}, {pipeline_mode = #tpu.pipeline_mode<synchronous>, transform_indices = @transform_22, window_bounds = array<i64: 2, 128>}]} {
    %c0 = arith.constant 0 : index
    %c0_0 = arith.constant 0 : index
    %0 = vector.load %arg1[%c0, %c0_0] : memref<32x768xbf16, #tpu.memory_space<vmem>>, vector<32x768xbf16>
    %c0_1 = arith.constant 0 : index
    %c0_2 = arith.constant 0 : index
    %1 = vector.load %arg3[%c0_1, %c0_2] : memref<768x128xbf16, #tpu.memory_space<vmem>>, vector<768x128xbf16>
    %cst = arith.constant dense<0.000000e+00> : vector<32x128xf32>
    %2 = tpu.matmul %0, %1, %cst {dimension_numbers = #tpu.dot_dimension_numbers<[1], [0], [0], [1], [0, 0, 1, 1], [], []>} : vector<32x768xbf16>, vector<768x128xbf16>, vector<32x128xf32> -> vector<32x128xf32>
    %c0_3 = arith.constant 0 : index
    %c0_4 = arith.constant 0 : index
    %3 = vector.load %arg4[%c0_3, %c0_4] : memref<1x128xf32, #tpu.memory_space<vmem>>, vector<1x128xf32>
    %4 = vector.broadcast %3 : vector<1x128xf32> to vector<32x128xf32>
    %5 = arith.addf %2, %4 : vector<32x128xf32>
    %6 = vector.shape_cast %5 : vector<32x128xf32> to vector<2x16x128xf32>
    %c0_5 = arith.constant 0 : index
    %c0_6 = arith.constant 0 : index
    %7 = vector.load %arg5[%c0_5, %c0_6] : memref<1x128xf32, #tpu.memory_space<vmem>>, vector<1x128xf32>
    %8 = vector.shape_cast %7 : vector<1x128xf32> to vector<1x1x128xf32>
    %9 = vector.shape_cast %8 : vector<1x1x128xf32> to vector<1x1x128xf32>
    %10 = vector.broadcast %9 : vector<1x1x128xf32> to vector<2x1x128xf32>
    %cst_7 = arith.constant 0.000000e+00 : f32
    %11 = vector.broadcast %cst_7 : f32 to vector<2x7x128xf32>
    %12 = tpu.concatenate %10, %6, %11 in 1 : vector<2x1x128xf32>, vector<2x16x128xf32>, vector<2x7x128xf32> -> vector<2x24x128xf32>
    %c0_8 = arith.constant 0 : index
    %c0_9 = arith.constant 0 : index
    %13 = vector.load %arg6[%c0_8, %c0_9] : memref<24x128xf32, #tpu.memory_space<vmem>>, vector<24x128xf32>
    %14 = vector.shape_cast %13 : vector<24x128xf32> to vector<1x24x128xf32>
    %15 = vector.broadcast %14 : vector<1x24x128xf32> to vector<2x24x128xf32>
    %16 = arith.addf %12, %15 : vector<2x24x128xf32>
    %17 = vector.shape_cast %16 : vector<2x24x128xf32> to vector<48x128xf32>
    %c0_10 = arith.constant 0 : index
    %c0_11 = arith.constant 0 : index
    %18 = vector.load %arg2[%c0_10, %c0_11] : memref<48x48xf32, #tpu.memory_space<vmem>>, vector<48x48xf32>
    %c0_12 = arith.constant 0 : index
    %c0_13 = arith.constant 0 : index
    %c0_14 = arith.constant 0 : index
    %19 = vector.load %arg7[%c0_12, %c0_13, %c0_14] : memref<2x1x128xf32, #tpu.memory_space<vmem>>, vector<1x1x128xf32>
    %20 = vector.shape_cast %19 : vector<1x1x128xf32> to vector<1x128xf32>
    %c0_15 = arith.constant 0 : index
    %c0_16 = arith.constant 0 : index
    %c0_17 = arith.constant 0 : index
    %21 = vector.load %arg8[%c0_15, %c0_16, %c0_17] : memref<2x1x128xf32, #tpu.memory_space<vmem>>, vector<1x1x128xf32>
    %22 = vector.shape_cast %21 : vector<1x1x128xf32> to vector<1x128xf32>
    %cst_18 = arith.constant dense<0.000000e+00> : vector<48xf32>
    %23 = vector.multi_reduction <add>, %17, %cst_18 [1] : vector<48x128xf32> to vector<48xf32>
    %24 = vector.shape_cast %23 : vector<48xf32> to vector<48x1xf32>
    %cst_19 = arith.constant 1.280000e+02 : f32
    %25 = vector.broadcast %cst_19 : f32 to vector<48x1xf32>
    %26 = arith.divf %24, %25 : vector<48x1xf32>
    %27 = vector.broadcast %26 : vector<48x1xf32> to vector<48x128xf32>
    %28 = arith.subf %17, %27 : vector<48x128xf32>
    %29 = arith.mulf %28, %28 : vector<48x128xf32>
    %cst_20 = arith.constant dense<0.000000e+00> : vector<48xf32>
    %30 = vector.multi_reduction <add>, %29, %cst_20 [1] : vector<48x128xf32> to vector<48xf32>
    %31 = vector.shape_cast %30 : vector<48xf32> to vector<48x1xf32>
    %cst_21 = arith.constant 1.280000e+02 : f32
    %32 = vector.broadcast %cst_21 : f32 to vector<48x1xf32>
    %33 = arith.divf %31, %32 : vector<48x1xf32>
    %cst_22 = arith.constant 9.99999997E-7 : f32
    %34 = vector.broadcast %cst_22 : f32 to vector<48x1xf32>
    %35 = arith.addf %33, %34 : vector<48x1xf32>
    %36 = math.rsqrt %35 : vector<48x1xf32>
    %37 = vector.broadcast %36 : vector<48x1xf32> to vector<48x128xf32>
    %38 = arith.mulf %28, %37 : vector<48x128xf32>
    %39 = vector.broadcast %20 : vector<1x128xf32> to vector<48x128xf32>
    %40 = arith.mulf %38, %39 : vector<48x128xf32>
    %41 = vector.broadcast %22 : vector<1x128xf32> to vector<48x128xf32>
    %42 = arith.addf %40, %41 : vector<48x128xf32>
    %43 = arith.truncf %42 : vector<48x128xf32> to vector<48x128xbf16>
    %c0_23 = arith.constant 0 : index
    %c0_24 = arith.constant 0 : index
    %c0_25 = arith.constant 0 : index
    %44 = vector.load %arg9[%c0_23, %c0_24, %c0_25] : memref<2x128x384xbf16, #tpu.memory_space<vmem>>, vector<1x128x384xbf16>
    %45 = vector.shape_cast %44 : vector<1x128x384xbf16> to vector<128x384xbf16>
    %cst_26 = arith.constant dense<0.000000e+00> : vector<48x384xf32>
    %46 = tpu.matmul %43, %45, %cst_26 {dimension_numbers = #tpu.dot_dimension_numbers<[1], [0], [0], [1], [0, 0, 1, 1], [], []>} : vector<48x128xbf16>, vector<128x384xbf16>, vector<48x384xf32> -> vector<48x384xf32>
    %c0_27 = arith.constant 0 : index
    %c0_28 = arith.constant 0 : index
    %c0_29 = arith.constant 0 : index
    %47 = vector.load %arg10[%c0_27, %c0_28, %c0_29] : memref<2x1x384xf32, #tpu.memory_space<vmem>>, vector<1x1x384xf32>
    %48 = vector.shape_cast %47 : vector<1x1x384xf32> to vector<1x384xf32>
    %49 = vector.broadcast %48 : vector<1x384xf32> to vector<48x384xf32>
    %50 = arith.addf %46, %49 : vector<48x384xf32>
    %51 = vector.extract_strided_slice %50 {offsets = [0, 0], sizes = [48, 128], strides = [1, 1]} : vector<48x384xf32> to vector<48x128xf32>
    %cst_30 = arith.constant 0.176776692 : f32
    %52 = vector.broadcast %cst_30 : f32 to vector<48x128xf32>
    %53 = arith.mulf %51, %52 : vector<48x128xf32>
    %54 = vector.extract_strided_slice %50 {offsets = [0, 128], sizes = [48, 128], strides = [1, 1]} : vector<48x384xf32> to vector<48x128xf32>
    %55 = vector.extract_strided_slice %50 {offsets = [0, 256], sizes = [48, 128], strides = [1, 1]} : vector<48x384xf32> to vector<48x128xf32>
    %56 = vector.extract_strided_slice %53 {offsets = [0, 0], sizes = [48, 32], strides = [1, 1]} : vector<48x128xf32> to vector<48x32xf32>
    %57 = arith.truncf %56 : vector<48x32xf32> to vector<48x32xbf16>
    %58 = vector.extract_strided_slice %54 {offsets = [0, 0], sizes = [48, 32], strides = [1, 1]} : vector<48x128xf32> to vector<48x32xf32>
    %59 = arith.truncf %58 : vector<48x32xf32> to vector<48x32xbf16>
    %60 = vector.extract_strided_slice %55 {offsets = [0, 0], sizes = [48, 32], strides = [1, 1]} : vector<48x128xf32> to vector<48x32xf32>
    %61 = arith.truncf %60 : vector<48x32xf32> to vector<48x32xbf16>
    %cst_31 = arith.constant dense<0.000000e+00> : vector<48x48xf32>
    %62 = tpu.matmul %57, %59, %cst_31 {dimension_numbers = #tpu.dot_dimension_numbers<[1], [1], [0], [0], [0, 0, 1, 0], [], []>} : vector<48x32xbf16>, vector<48x32xbf16>, vector<48x48xf32> -> vector<48x48xf32>
    %63 = arith.addf %62, %18 : vector<48x48xf32>
    %cst_32 = arith.constant dense<0xFF800000> : vector<48xf32>
    %64 = vector.multi_reduction <maximumf>, %63, %cst_32 [1] : vector<48x48xf32> to vector<48xf32>
    %65 = vector.shape_cast %64 : vector<48xf32> to vector<48x1xf32>
    %66 = vector.broadcast %65 : vector<48x1xf32> to vector<48x48xf32>
    %67 = arith.subf %63, %66 : vector<48x48xf32>
    %68 = math.exp %67 : vector<48x48xf32>
    %cst_33 = arith.constant dense<0.000000e+00> : vector<48xf32>
    %69 = vector.multi_reduction <add>, %68, %cst_33 [1] : vector<48x48xf32> to vector<48xf32>
    %70 = vector.shape_cast %69 : vector<48xf32> to vector<48x1xf32>
    %71 = tpu.reciprocal %70 {approx = true} : vector<48x1xf32> -> vector<48x1xf32>
    %72 = vector.broadcast %71 : vector<48x1xf32> to vector<48x48xf32>
    %73 = arith.mulf %68, %72 : vector<48x48xf32>
    %74 = arith.truncf %73 : vector<48x48xf32> to vector<48x48xbf16>
    %cst_34 = arith.constant dense<0.000000e+00> : vector<48x32xf32>
    %75 = tpu.matmul %74, %61, %cst_34 {dimension_numbers = #tpu.dot_dimension_numbers<[1], [0], [0], [1], [0, 0, 1, 1], [], []>} : vector<48x48xbf16>, vector<48x32xbf16>, vector<48x32xf32> -> vector<48x32xf32>
    %76 = vector.extract_strided_slice %53 {offsets = [0, 32], sizes = [48, 32], strides = [1, 1]} : vector<48x128xf32> to vector<48x32xf32>
    %77 = arith.truncf %76 : vector<48x32xf32> to vector<48x32xbf16>
    %78 = vector.extract_strided_slice %54 {offsets = [0, 32], sizes = [48, 32], strides = [1, 1]} : vector<48x128xf32> to vector<48x32xf32>
    %79 = arith.truncf %78 : vector<48x32xf32> to vector<48x32xbf16>
    %80 = vector.extract_strided_slice %55 {offsets = [0, 32], sizes = [48, 32], strides = [1, 1]} : vector<48x128xf32> to vector<48x32xf32>
    %81 = arith.truncf %80 : vector<48x32xf32> to vector<48x32xbf16>
    %cst_35 = arith.constant dense<0.000000e+00> : vector<48x48xf32>
    %82 = tpu.matmul %77, %79, %cst_35 {dimension_numbers = #tpu.dot_dimension_numbers<[1], [1], [0], [0], [0, 0, 1, 0], [], []>} : vector<48x32xbf16>, vector<48x32xbf16>, vector<48x48xf32> -> vector<48x48xf32>
    %83 = arith.addf %82, %18 : vector<48x48xf32>
    %cst_36 = arith.constant dense<0xFF800000> : vector<48xf32>
    %84 = vector.multi_reduction <maximumf>, %83, %cst_36 [1] : vector<48x48xf32> to vector<48xf32>
    %85 = vector.shape_cast %84 : vector<48xf32> to vector<48x1xf32>
    %86 = vector.broadcast %85 : vector<48x1xf32> to vector<48x48xf32>
    %87 = arith.subf %83, %86 : vector<48x48xf32>
    %88 = math.exp %87 : vector<48x48xf32>
    %cst_37 = arith.constant dense<0.000000e+00> : vector<48xf32>
    %89 = vector.multi_reduction <add>, %88, %cst_37 [1] : vector<48x48xf32> to vector<48xf32>
    %90 = vector.shape_cast %89 : vector<48xf32> to vector<48x1xf32>
    %91 = tpu.reciprocal %90 {approx = true} : vector<48x1xf32> -> vector<48x1xf32>
    %92 = vector.broadcast %91 : vector<48x1xf32> to vector<48x48xf32>
    %93 = arith.mulf %88, %92 : vector<48x48xf32>
    %94 = arith.truncf %93 : vector<48x48xf32> to vector<48x48xbf16>
    %cst_38 = arith.constant dense<0.000000e+00> : vector<48x32xf32>
    %95 = tpu.matmul %94, %81, %cst_38 {dimension_numbers = #tpu.dot_dimension_numbers<[1], [0], [0], [1], [0, 0, 1, 1], [], []>} : vector<48x48xbf16>, vector<48x32xbf16>, vector<48x32xf32> -> vector<48x32xf32>
    %96 = vector.extract_strided_slice %53 {offsets = [0, 64], sizes = [48, 32], strides = [1, 1]} : vector<48x128xf32> to vector<48x32xf32>
    %97 = arith.truncf %96 : vector<48x32xf32> to vector<48x32xbf16>
    %98 = vector.extract_strided_slice %54 {offsets = [0, 64], sizes = [48, 32], strides = [1, 1]} : vector<48x128xf32> to vector<48x32xf32>
    %99 = arith.truncf %98 : vector<48x32xf32> to vector<48x32xbf16>
    %100 = vector.extract_strided_slice %55 {offsets = [0, 64], sizes = [48, 32], strides = [1, 1]} : vector<48x128xf32> to vector<48x32xf32>
    %101 = arith.truncf %100 : vector<48x32xf32> to vector<48x32xbf16>
    %cst_39 = arith.constant dense<0.000000e+00> : vector<48x48xf32>
    %102 = tpu.matmul %97, %99, %cst_39 {dimension_numbers = #tpu.dot_dimension_numbers<[1], [1], [0], [0], [0, 0, 1, 0], [], []>} : vector<48x32xbf16>, vector<48x32xbf16>, vector<48x48xf32> -> vector<48x48xf32>
    %103 = arith.addf %102, %18 : vector<48x48xf32>
    %cst_40 = arith.constant dense<0xFF800000> : vector<48xf32>
    %104 = vector.multi_reduction <maximumf>, %103, %cst_40 [1] : vector<48x48xf32> to vector<48xf32>
    %105 = vector.shape_cast %104 : vector<48xf32> to vector<48x1xf32>
    %106 = vector.broadcast %105 : vector<48x1xf32> to vector<48x48xf32>
    %107 = arith.subf %103, %106 : vector<48x48xf32>
    %108 = math.exp %107 : vector<48x48xf32>
    %cst_41 = arith.constant dense<0.000000e+00> : vector<48xf32>
    %109 = vector.multi_reduction <add>, %108, %cst_41 [1] : vector<48x48xf32> to vector<48xf32>
    %110 = vector.shape_cast %109 : vector<48xf32> to vector<48x1xf32>
    %111 = tpu.reciprocal %110 {approx = true} : vector<48x1xf32> -> vector<48x1xf32>
    %112 = vector.broadcast %111 : vector<48x1xf32> to vector<48x48xf32>
    %113 = arith.mulf %108, %112 : vector<48x48xf32>
    %114 = arith.truncf %113 : vector<48x48xf32> to vector<48x48xbf16>
    %cst_42 = arith.constant dense<0.000000e+00> : vector<48x32xf32>
    %115 = tpu.matmul %114, %101, %cst_42 {dimension_numbers = #tpu.dot_dimension_numbers<[1], [0], [0], [1], [0, 0, 1, 1], [], []>} : vector<48x48xbf16>, vector<48x32xbf16>, vector<48x32xf32> -> vector<48x32xf32>
    %116 = vector.extract_strided_slice %53 {offsets = [0, 96], sizes = [48, 32], strides = [1, 1]} : vector<48x128xf32> to vector<48x32xf32>
    %117 = arith.truncf %116 : vector<48x32xf32> to vector<48x32xbf16>
    %118 = vector.extract_strided_slice %54 {offsets = [0, 96], sizes = [48, 32], strides = [1, 1]} : vector<48x128xf32> to vector<48x32xf32>
    %119 = arith.truncf %118 : vector<48x32xf32> to vector<48x32xbf16>
    %120 = vector.extract_strided_slice %55 {offsets = [0, 96], sizes = [48, 32], strides = [1, 1]} : vector<48x128xf32> to vector<48x32xf32>
    %121 = arith.truncf %120 : vector<48x32xf32> to vector<48x32xbf16>
    %cst_43 = arith.constant dense<0.000000e+00> : vector<48x48xf32>
    %122 = tpu.matmul %117, %119, %cst_43 {dimension_numbers = #tpu.dot_dimension_numbers<[1], [1], [0], [0], [0, 0, 1, 0], [], []>} : vector<48x32xbf16>, vector<48x32xbf16>, vector<48x48xf32> -> vector<48x48xf32>
    %123 = arith.addf %122, %18 : vector<48x48xf32>
    %cst_44 = arith.constant dense<0xFF800000> : vector<48xf32>
    %124 = vector.multi_reduction <maximumf>, %123, %cst_44 [1] : vector<48x48xf32> to vector<48xf32>
    %125 = vector.shape_cast %124 : vector<48xf32> to vector<48x1xf32>
    %126 = vector.broadcast %125 : vector<48x1xf32> to vector<48x48xf32>
    %127 = arith.subf %123, %126 : vector<48x48xf32>
    %128 = math.exp %127 : vector<48x48xf32>
    %cst_45 = arith.constant dense<0.000000e+00> : vector<48xf32>
    %129 = vector.multi_reduction <add>, %128, %cst_45 [1] : vector<48x48xf32> to vector<48xf32>
    %130 = vector.shape_cast %129 : vector<48xf32> to vector<48x1xf32>
    %131 = tpu.reciprocal %130 {approx = true} : vector<48x1xf32> -> vector<48x1xf32>
    %132 = vector.broadcast %131 : vector<48x1xf32> to vector<48x48xf32>
    %133 = arith.mulf %128, %132 : vector<48x48xf32>
    %134 = arith.truncf %133 : vector<48x48xf32> to vector<48x48xbf16>
    %cst_46 = arith.constant dense<0.000000e+00> : vector<48x32xf32>
    %135 = tpu.matmul %134, %121, %cst_46 {dimension_numbers = #tpu.dot_dimension_numbers<[1], [0], [0], [1], [0, 0, 1, 1], [], []>} : vector<48x48xbf16>, vector<48x32xbf16>, vector<48x32xf32> -> vector<48x32xf32>
    %136 = tpu.concatenate %75, %95, %115, %135 in 1 : vector<48x32xf32>, vector<48x32xf32>, vector<48x32xf32>, vector<48x32xf32> -> vector<48x128xf32>
    %137 = arith.truncf %136 : vector<48x128xf32> to vector<48x128xbf16>
    %c0_47 = arith.constant 0 : index
    %c0_48 = arith.constant 0 : index
    %c0_49 = arith.constant 0 : index
    %138 = vector.load %arg11[%c0_47, %c0_48, %c0_49] : memref<2x128x128xbf16, #tpu.memory_space<vmem>>, vector<1x128x128xbf16>
    %139 = vector.shape_cast %138 : vector<1x128x128xbf16> to vector<128x128xbf16>
    %cst_50 = arith.constant dense<0.000000e+00> : vector<48x128xf32>
    %140 = tpu.matmul %137, %139, %cst_50 {dimension_numbers = #tpu.dot_dimension_numbers<[1], [0], [0], [1], [0, 0, 1, 1], [], []>} : vector<48x128xbf16>, vector<128x128xbf16>, vector<48x128xf32> -> vector<48x128xf32>
    %141 = arith.addf %17, %140 : vector<48x128xf32>
    %c0_51 = arith.constant 0 : index
    %c0_52 = arith.constant 0 : index
    %c0_53 = arith.constant 0 : index
    %142 = vector.load %arg12[%c0_51, %c0_52, %c0_53] : memref<2x1x128xf32, #tpu.memory_space<vmem>>, vector<1x1x128xf32>
    %143 = vector.shape_cast %142 : vector<1x1x128xf32> to vector<1x128xf32>
    %144 = vector.broadcast %143 : vector<1x128xf32> to vector<48x128xf32>
    %145 = arith.addf %141, %144 : vector<48x128xf32>
    %c0_54 = arith.constant 0 : index
    %c0_55 = arith.constant 0 : index
    %c0_56 = arith.constant 0 : index
    %146 = vector.load %arg13[%c0_54, %c0_55, %c0_56] : memref<2x1x128xf32, #tpu.memory_space<vmem>>, vector<1x1x128xf32>
    %147 = vector.shape_cast %146 : vector<1x1x128xf32> to vector<1x128xf32>
    %c0_57 = arith.constant 0 : index
    %c0_58 = arith.constant 0 : index
    %c0_59 = arith.constant 0 : index
    %148 = vector.load %arg14[%c0_57, %c0_58, %c0_59] : memref<2x1x128xf32, #tpu.memory_space<vmem>>, vector<1x1x128xf32>
    %149 = vector.shape_cast %148 : vector<1x1x128xf32> to vector<1x128xf32>
    %cst_60 = arith.constant dense<0.000000e+00> : vector<48xf32>
    %150 = vector.multi_reduction <add>, %145, %cst_60 [1] : vector<48x128xf32> to vector<48xf32>
    %151 = vector.shape_cast %150 : vector<48xf32> to vector<48x1xf32>
    %cst_61 = arith.constant 1.280000e+02 : f32
    %152 = vector.broadcast %cst_61 : f32 to vector<48x1xf32>
    %153 = arith.divf %151, %152 : vector<48x1xf32>
    %154 = vector.broadcast %153 : vector<48x1xf32> to vector<48x128xf32>
    %155 = arith.subf %145, %154 : vector<48x128xf32>
    %156 = arith.mulf %155, %155 : vector<48x128xf32>
    %cst_62 = arith.constant dense<0.000000e+00> : vector<48xf32>
    %157 = vector.multi_reduction <add>, %156, %cst_62 [1] : vector<48x128xf32> to vector<48xf32>
    %158 = vector.shape_cast %157 : vector<48xf32> to vector<48x1xf32>
    %cst_63 = arith.constant 1.280000e+02 : f32
    %159 = vector.broadcast %cst_63 : f32 to vector<48x1xf32>
    %160 = arith.divf %158, %159 : vector<48x1xf32>
    %cst_64 = arith.constant 9.99999997E-7 : f32
    %161 = vector.broadcast %cst_64 : f32 to vector<48x1xf32>
    %162 = arith.addf %160, %161 : vector<48x1xf32>
    %163 = math.rsqrt %162 : vector<48x1xf32>
    %164 = vector.broadcast %163 : vector<48x1xf32> to vector<48x128xf32>
    %165 = arith.mulf %155, %164 : vector<48x128xf32>
    %166 = vector.broadcast %147 : vector<1x128xf32> to vector<48x128xf32>
    %167 = arith.mulf %165, %166 : vector<48x128xf32>
    %168 = vector.broadcast %149 : vector<1x128xf32> to vector<48x128xf32>
    %169 = arith.addf %167, %168 : vector<48x128xf32>
    %170 = arith.truncf %169 : vector<48x128xf32> to vector<48x128xbf16>
    %c0_65 = arith.constant 0 : index
    %c0_66 = arith.constant 0 : index
    %c0_67 = arith.constant 0 : index
    %171 = vector.load %arg15[%c0_65, %c0_66, %c0_67] : memref<2x128x256xbf16, #tpu.memory_space<vmem>>, vector<1x128x256xbf16>
    %172 = vector.shape_cast %171 : vector<1x128x256xbf16> to vector<128x256xbf16>
    %cst_68 = arith.constant dense<0.000000e+00> : vector<48x256xf32>
    %173 = tpu.matmul %170, %172, %cst_68 {dimension_numbers = #tpu.dot_dimension_numbers<[1], [0], [0], [1], [0, 0, 1, 1], [], []>} : vector<48x128xbf16>, vector<128x256xbf16>, vector<48x256xf32> -> vector<48x256xf32>
    %c0_69 = arith.constant 0 : index
    %c0_70 = arith.constant 0 : index
    %c0_71 = arith.constant 0 : index
    %174 = vector.load %arg16[%c0_69, %c0_70, %c0_71] : memref<2x1x256xf32, #tpu.memory_space<vmem>>, vector<1x1x256xf32>
    %175 = vector.shape_cast %174 : vector<1x1x256xf32> to vector<1x256xf32>
    %176 = vector.broadcast %175 : vector<1x256xf32> to vector<48x256xf32>
    %177 = arith.addf %173, %176 : vector<48x256xf32>
    %178 = arith.mulf %177, %177 : vector<48x256xf32>
    %179 = arith.mulf %177, %178 : vector<48x256xf32>
    %cst_72 = arith.constant 4.471500e-02 : f32
    %180 = vector.broadcast %cst_72 : f32 to vector<48x256xf32>
    %181 = arith.mulf %180, %179 : vector<48x256xf32>
    %182 = arith.addf %177, %181 : vector<48x256xf32>
    %cst_73 = arith.constant 0.797884583 : f32
    %183 = vector.broadcast %cst_73 : f32 to vector<48x256xf32>
    %184 = arith.mulf %183, %182 : vector<48x256xf32>
    %185 = math.tanh %184 : vector<48x256xf32>
    %cst_74 = arith.constant 1.000000e+00 : f32
    %186 = vector.broadcast %cst_74 : f32 to vector<48x256xf32>
    %187 = arith.addf %186, %185 : vector<48x256xf32>
    %cst_75 = arith.constant 5.000000e-01 : f32
    %188 = vector.broadcast %cst_75 : f32 to vector<48x256xf32>
    %189 = arith.mulf %188, %187 : vector<48x256xf32>
    %190 = arith.mulf %177, %189 : vector<48x256xf32>
    %191 = arith.truncf %190 : vector<48x256xf32> to vector<48x256xbf16>
    %c0_76 = arith.constant 0 : index
    %c0_77 = arith.constant 0 : index
    %c0_78 = arith.constant 0 : index
    %192 = vector.load %arg17[%c0_76, %c0_77, %c0_78] : memref<2x256x128xbf16, #tpu.memory_space<vmem>>, vector<1x256x128xbf16>
    %193 = vector.shape_cast %192 : vector<1x256x128xbf16> to vector<256x128xbf16>
    %cst_79 = arith.constant dense<0.000000e+00> : vector<48x128xf32>
    %194 = tpu.matmul %191, %193, %cst_79 {dimension_numbers = #tpu.dot_dimension_numbers<[1], [0], [0], [1], [0, 0, 1, 1], [], []>} : vector<48x256xbf16>, vector<256x128xbf16>, vector<48x128xf32> -> vector<48x128xf32>
    %c0_80 = arith.constant 0 : index
    %c0_81 = arith.constant 0 : index
    %c0_82 = arith.constant 0 : index
    %195 = vector.load %arg18[%c0_80, %c0_81, %c0_82] : memref<2x1x128xf32, #tpu.memory_space<vmem>>, vector<1x1x128xf32>
    %196 = vector.shape_cast %195 : vector<1x1x128xf32> to vector<1x128xf32>
    %197 = vector.broadcast %196 : vector<1x128xf32> to vector<48x128xf32>
    %198 = arith.addf %194, %197 : vector<48x128xf32>
    %199 = arith.addf %145, %198 : vector<48x128xf32>
    %c1 = arith.constant 1 : index
    %c0_83 = arith.constant 0 : index
    %c0_84 = arith.constant 0 : index
    %200 = vector.load %arg7[%c1, %c0_83, %c0_84] : memref<2x1x128xf32, #tpu.memory_space<vmem>>, vector<1x1x128xf32>
    %201 = vector.shape_cast %200 : vector<1x1x128xf32> to vector<1x128xf32>
    %c1_85 = arith.constant 1 : index
    %c0_86 = arith.constant 0 : index
    %c0_87 = arith.constant 0 : index
    %202 = vector.load %arg8[%c1_85, %c0_86, %c0_87] : memref<2x1x128xf32, #tpu.memory_space<vmem>>, vector<1x1x128xf32>
    %203 = vector.shape_cast %202 : vector<1x1x128xf32> to vector<1x128xf32>
    %cst_88 = arith.constant dense<0.000000e+00> : vector<48xf32>
    %204 = vector.multi_reduction <add>, %199, %cst_88 [1] : vector<48x128xf32> to vector<48xf32>
    %205 = vector.shape_cast %204 : vector<48xf32> to vector<48x1xf32>
    %cst_89 = arith.constant 1.280000e+02 : f32
    %206 = vector.broadcast %cst_89 : f32 to vector<48x1xf32>
    %207 = arith.divf %205, %206 : vector<48x1xf32>
    %208 = vector.broadcast %207 : vector<48x1xf32> to vector<48x128xf32>
    %209 = arith.subf %199, %208 : vector<48x128xf32>
    %210 = arith.mulf %209, %209 : vector<48x128xf32>
    %cst_90 = arith.constant dense<0.000000e+00> : vector<48xf32>
    %211 = vector.multi_reduction <add>, %210, %cst_90 [1] : vector<48x128xf32> to vector<48xf32>
    %212 = vector.shape_cast %211 : vector<48xf32> to vector<48x1xf32>
    %cst_91 = arith.constant 1.280000e+02 : f32
    %213 = vector.broadcast %cst_91 : f32 to vector<48x1xf32>
    %214 = arith.divf %212, %213 : vector<48x1xf32>
    %cst_92 = arith.constant 9.99999997E-7 : f32
    %215 = vector.broadcast %cst_92 : f32 to vector<48x1xf32>
    %216 = arith.addf %214, %215 : vector<48x1xf32>
    %217 = math.rsqrt %216 : vector<48x1xf32>
    %218 = vector.broadcast %217 : vector<48x1xf32> to vector<48x128xf32>
    %219 = arith.mulf %209, %218 : vector<48x128xf32>
    %220 = vector.broadcast %201 : vector<1x128xf32> to vector<48x128xf32>
    %221 = arith.mulf %219, %220 : vector<48x128xf32>
    %222 = vector.broadcast %203 : vector<1x128xf32> to vector<48x128xf32>
    %223 = arith.addf %221, %222 : vector<48x128xf32>
    %224 = arith.truncf %223 : vector<48x128xf32> to vector<48x128xbf16>
    %c1_93 = arith.constant 1 : index
    %c0_94 = arith.constant 0 : index
    %c0_95 = arith.constant 0 : index
    %225 = vector.load %arg9[%c1_93, %c0_94, %c0_95] : memref<2x128x384xbf16, #tpu.memory_space<vmem>>, vector<1x128x384xbf16>
    %226 = vector.shape_cast %225 : vector<1x128x384xbf16> to vector<128x384xbf16>
    %cst_96 = arith.constant dense<0.000000e+00> : vector<48x384xf32>
    %227 = tpu.matmul %224, %226, %cst_96 {dimension_numbers = #tpu.dot_dimension_numbers<[1], [0], [0], [1], [0, 0, 1, 1], [], []>} : vector<48x128xbf16>, vector<128x384xbf16>, vector<48x384xf32> -> vector<48x384xf32>
    %c1_97 = arith.constant 1 : index
    %c0_98 = arith.constant 0 : index
    %c0_99 = arith.constant 0 : index
    %228 = vector.load %arg10[%c1_97, %c0_98, %c0_99] : memref<2x1x384xf32, #tpu.memory_space<vmem>>, vector<1x1x384xf32>
    %229 = vector.shape_cast %228 : vector<1x1x384xf32> to vector<1x384xf32>
    %230 = vector.broadcast %229 : vector<1x384xf32> to vector<48x384xf32>
    %231 = arith.addf %227, %230 : vector<48x384xf32>
    %232 = vector.extract_strided_slice %231 {offsets = [0, 0], sizes = [48, 128], strides = [1, 1]} : vector<48x384xf32> to vector<48x128xf32>
    %cst_100 = arith.constant 0.176776692 : f32
    %233 = vector.broadcast %cst_100 : f32 to vector<48x128xf32>
    %234 = arith.mulf %232, %233 : vector<48x128xf32>
    %235 = vector.extract_strided_slice %231 {offsets = [0, 128], sizes = [48, 128], strides = [1, 1]} : vector<48x384xf32> to vector<48x128xf32>
    %236 = vector.extract_strided_slice %231 {offsets = [0, 256], sizes = [48, 128], strides = [1, 1]} : vector<48x384xf32> to vector<48x128xf32>
    %237 = vector.extract_strided_slice %234 {offsets = [0, 0], sizes = [48, 32], strides = [1, 1]} : vector<48x128xf32> to vector<48x32xf32>
    %238 = arith.truncf %237 : vector<48x32xf32> to vector<48x32xbf16>
    %239 = vector.extract_strided_slice %235 {offsets = [0, 0], sizes = [48, 32], strides = [1, 1]} : vector<48x128xf32> to vector<48x32xf32>
    %240 = arith.truncf %239 : vector<48x32xf32> to vector<48x32xbf16>
    %241 = vector.extract_strided_slice %236 {offsets = [0, 0], sizes = [48, 32], strides = [1, 1]} : vector<48x128xf32> to vector<48x32xf32>
    %242 = arith.truncf %241 : vector<48x32xf32> to vector<48x32xbf16>
    %cst_101 = arith.constant dense<0.000000e+00> : vector<48x48xf32>
    %243 = tpu.matmul %238, %240, %cst_101 {dimension_numbers = #tpu.dot_dimension_numbers<[1], [1], [0], [0], [0, 0, 1, 0], [], []>} : vector<48x32xbf16>, vector<48x32xbf16>, vector<48x48xf32> -> vector<48x48xf32>
    %244 = arith.addf %243, %18 : vector<48x48xf32>
    %cst_102 = arith.constant dense<0xFF800000> : vector<48xf32>
    %245 = vector.multi_reduction <maximumf>, %244, %cst_102 [1] : vector<48x48xf32> to vector<48xf32>
    %246 = vector.shape_cast %245 : vector<48xf32> to vector<48x1xf32>
    %247 = vector.broadcast %246 : vector<48x1xf32> to vector<48x48xf32>
    %248 = arith.subf %244, %247 : vector<48x48xf32>
    %249 = math.exp %248 : vector<48x48xf32>
    %cst_103 = arith.constant dense<0.000000e+00> : vector<48xf32>
    %250 = vector.multi_reduction <add>, %249, %cst_103 [1] : vector<48x48xf32> to vector<48xf32>
    %251 = vector.shape_cast %250 : vector<48xf32> to vector<48x1xf32>
    %252 = tpu.reciprocal %251 {approx = true} : vector<48x1xf32> -> vector<48x1xf32>
    %253 = vector.broadcast %252 : vector<48x1xf32> to vector<48x48xf32>
    %254 = arith.mulf %249, %253 : vector<48x48xf32>
    %255 = arith.truncf %254 : vector<48x48xf32> to vector<48x48xbf16>
    %cst_104 = arith.constant dense<0.000000e+00> : vector<48x32xf32>
    %256 = tpu.matmul %255, %242, %cst_104 {dimension_numbers = #tpu.dot_dimension_numbers<[1], [0], [0], [1], [0, 0, 1, 1], [], []>} : vector<48x48xbf16>, vector<48x32xbf16>, vector<48x32xf32> -> vector<48x32xf32>
    %257 = vector.extract_strided_slice %234 {offsets = [0, 32], sizes = [48, 32], strides = [1, 1]} : vector<48x128xf32> to vector<48x32xf32>
    %258 = arith.truncf %257 : vector<48x32xf32> to vector<48x32xbf16>
    %259 = vector.extract_strided_slice %235 {offsets = [0, 32], sizes = [48, 32], strides = [1, 1]} : vector<48x128xf32> to vector<48x32xf32>
    %260 = arith.truncf %259 : vector<48x32xf32> to vector<48x32xbf16>
    %261 = vector.extract_strided_slice %236 {offsets = [0, 32], sizes = [48, 32], strides = [1, 1]} : vector<48x128xf32> to vector<48x32xf32>
    %262 = arith.truncf %261 : vector<48x32xf32> to vector<48x32xbf16>
    %cst_105 = arith.constant dense<0.000000e+00> : vector<48x48xf32>
    %263 = tpu.matmul %258, %260, %cst_105 {dimension_numbers = #tpu.dot_dimension_numbers<[1], [1], [0], [0], [0, 0, 1, 0], [], []>} : vector<48x32xbf16>, vector<48x32xbf16>, vector<48x48xf32> -> vector<48x48xf32>
    %264 = arith.addf %263, %18 : vector<48x48xf32>
    %cst_106 = arith.constant dense<0xFF800000> : vector<48xf32>
    %265 = vector.multi_reduction <maximumf>, %264, %cst_106 [1] : vector<48x48xf32> to vector<48xf32>
    %266 = vector.shape_cast %265 : vector<48xf32> to vector<48x1xf32>
    %267 = vector.broadcast %266 : vector<48x1xf32> to vector<48x48xf32>
    %268 = arith.subf %264, %267 : vector<48x48xf32>
    %269 = math.exp %268 : vector<48x48xf32>
    %cst_107 = arith.constant dense<0.000000e+00> : vector<48xf32>
    %270 = vector.multi_reduction <add>, %269, %cst_107 [1] : vector<48x48xf32> to vector<48xf32>
    %271 = vector.shape_cast %270 : vector<48xf32> to vector<48x1xf32>
    %272 = tpu.reciprocal %271 {approx = true} : vector<48x1xf32> -> vector<48x1xf32>
    %273 = vector.broadcast %272 : vector<48x1xf32> to vector<48x48xf32>
    %274 = arith.mulf %269, %273 : vector<48x48xf32>
    %275 = arith.truncf %274 : vector<48x48xf32> to vector<48x48xbf16>
    %cst_108 = arith.constant dense<0.000000e+00> : vector<48x32xf32>
    %276 = tpu.matmul %275, %262, %cst_108 {dimension_numbers = #tpu.dot_dimension_numbers<[1], [0], [0], [1], [0, 0, 1, 1], [], []>} : vector<48x48xbf16>, vector<48x32xbf16>, vector<48x32xf32> -> vector<48x32xf32>
    %277 = vector.extract_strided_slice %234 {offsets = [0, 64], sizes = [48, 32], strides = [1, 1]} : vector<48x128xf32> to vector<48x32xf32>
    %278 = arith.truncf %277 : vector<48x32xf32> to vector<48x32xbf16>
    %279 = vector.extract_strided_slice %235 {offsets = [0, 64], sizes = [48, 32], strides = [1, 1]} : vector<48x128xf32> to vector<48x32xf32>
    %280 = arith.truncf %279 : vector<48x32xf32> to vector<48x32xbf16>
    %281 = vector.extract_strided_slice %236 {offsets = [0, 64], sizes = [48, 32], strides = [1, 1]} : vector<48x128xf32> to vector<48x32xf32>
    %282 = arith.truncf %281 : vector<48x32xf32> to vector<48x32xbf16>
    %cst_109 = arith.constant dense<0.000000e+00> : vector<48x48xf32>
    %283 = tpu.matmul %278, %280, %cst_109 {dimension_numbers = #tpu.dot_dimension_numbers<[1], [1], [0], [0], [0, 0, 1, 0], [], []>} : vector<48x32xbf16>, vector<48x32xbf16>, vector<48x48xf32> -> vector<48x48xf32>
    %284 = arith.addf %283, %18 : vector<48x48xf32>
    %cst_110 = arith.constant dense<0xFF800000> : vector<48xf32>
    %285 = vector.multi_reduction <maximumf>, %284, %cst_110 [1] : vector<48x48xf32> to vector<48xf32>
    %286 = vector.shape_cast %285 : vector<48xf32> to vector<48x1xf32>
    %287 = vector.broadcast %286 : vector<48x1xf32> to vector<48x48xf32>
    %288 = arith.subf %284, %287 : vector<48x48xf32>
    %289 = math.exp %288 : vector<48x48xf32>
    %cst_111 = arith.constant dense<0.000000e+00> : vector<48xf32>
    %290 = vector.multi_reduction <add>, %289, %cst_111 [1] : vector<48x48xf32> to vector<48xf32>
    %291 = vector.shape_cast %290 : vector<48xf32> to vector<48x1xf32>
    %292 = tpu.reciprocal %291 {approx = true} : vector<48x1xf32> -> vector<48x1xf32>
    %293 = vector.broadcast %292 : vector<48x1xf32> to vector<48x48xf32>
    %294 = arith.mulf %289, %293 : vector<48x48xf32>
    %295 = arith.truncf %294 : vector<48x48xf32> to vector<48x48xbf16>
    %cst_112 = arith.constant dense<0.000000e+00> : vector<48x32xf32>
    %296 = tpu.matmul %295, %282, %cst_112 {dimension_numbers = #tpu.dot_dimension_numbers<[1], [0], [0], [1], [0, 0, 1, 1], [], []>} : vector<48x48xbf16>, vector<48x32xbf16>, vector<48x32xf32> -> vector<48x32xf32>
    %297 = vector.extract_strided_slice %234 {offsets = [0, 96], sizes = [48, 32], strides = [1, 1]} : vector<48x128xf32> to vector<48x32xf32>
    %298 = arith.truncf %297 : vector<48x32xf32> to vector<48x32xbf16>
    %299 = vector.extract_strided_slice %235 {offsets = [0, 96], sizes = [48, 32], strides = [1, 1]} : vector<48x128xf32> to vector<48x32xf32>
    %300 = arith.truncf %299 : vector<48x32xf32> to vector<48x32xbf16>
    %301 = vector.extract_strided_slice %236 {offsets = [0, 96], sizes = [48, 32], strides = [1, 1]} : vector<48x128xf32> to vector<48x32xf32>
    %302 = arith.truncf %301 : vector<48x32xf32> to vector<48x32xbf16>
    %cst_113 = arith.constant dense<0.000000e+00> : vector<48x48xf32>
    %303 = tpu.matmul %298, %300, %cst_113 {dimension_numbers = #tpu.dot_dimension_numbers<[1], [1], [0], [0], [0, 0, 1, 0], [], []>} : vector<48x32xbf16>, vector<48x32xbf16>, vector<48x48xf32> -> vector<48x48xf32>
    %304 = arith.addf %303, %18 : vector<48x48xf32>
    %cst_114 = arith.constant dense<0xFF800000> : vector<48xf32>
    %305 = vector.multi_reduction <maximumf>, %304, %cst_114 [1] : vector<48x48xf32> to vector<48xf32>
    %306 = vector.shape_cast %305 : vector<48xf32> to vector<48x1xf32>
    %307 = vector.broadcast %306 : vector<48x1xf32> to vector<48x48xf32>
    %308 = arith.subf %304, %307 : vector<48x48xf32>
    %309 = math.exp %308 : vector<48x48xf32>
    %cst_115 = arith.constant dense<0.000000e+00> : vector<48xf32>
    %310 = vector.multi_reduction <add>, %309, %cst_115 [1] : vector<48x48xf32> to vector<48xf32>
    %311 = vector.shape_cast %310 : vector<48xf32> to vector<48x1xf32>
    %312 = tpu.reciprocal %311 {approx = true} : vector<48x1xf32> -> vector<48x1xf32>
    %313 = vector.broadcast %312 : vector<48x1xf32> to vector<48x48xf32>
    %314 = arith.mulf %309, %313 : vector<48x48xf32>
    %315 = arith.truncf %314 : vector<48x48xf32> to vector<48x48xbf16>
    %cst_116 = arith.constant dense<0.000000e+00> : vector<48x32xf32>
    %316 = tpu.matmul %315, %302, %cst_116 {dimension_numbers = #tpu.dot_dimension_numbers<[1], [0], [0], [1], [0, 0, 1, 1], [], []>} : vector<48x48xbf16>, vector<48x32xbf16>, vector<48x32xf32> -> vector<48x32xf32>
    %317 = tpu.concatenate %256, %276, %296, %316 in 1 : vector<48x32xf32>, vector<48x32xf32>, vector<48x32xf32>, vector<48x32xf32> -> vector<48x128xf32>
    %318 = arith.truncf %317 : vector<48x128xf32> to vector<48x128xbf16>
    %c1_117 = arith.constant 1 : index
    %c0_118 = arith.constant 0 : index
    %c0_119 = arith.constant 0 : index
    %319 = vector.load %arg11[%c1_117, %c0_118, %c0_119] : memref<2x128x128xbf16, #tpu.memory_space<vmem>>, vector<1x128x128xbf16>
    %320 = vector.shape_cast %319 : vector<1x128x128xbf16> to vector<128x128xbf16>
    %cst_120 = arith.constant dense<0.000000e+00> : vector<48x128xf32>
    %321 = tpu.matmul %318, %320, %cst_120 {dimension_numbers = #tpu.dot_dimension_numbers<[1], [0], [0], [1], [0, 0, 1, 1], [], []>} : vector<48x128xbf16>, vector<128x128xbf16>, vector<48x128xf32> -> vector<48x128xf32>
    %322 = arith.addf %199, %321 : vector<48x128xf32>
    %c1_121 = arith.constant 1 : index
    %c0_122 = arith.constant 0 : index
    %c0_123 = arith.constant 0 : index
    %323 = vector.load %arg12[%c1_121, %c0_122, %c0_123] : memref<2x1x128xf32, #tpu.memory_space<vmem>>, vector<1x1x128xf32>
    %324 = vector.shape_cast %323 : vector<1x1x128xf32> to vector<1x128xf32>
    %325 = vector.broadcast %324 : vector<1x128xf32> to vector<48x128xf32>
    %326 = arith.addf %322, %325 : vector<48x128xf32>
    %c1_124 = arith.constant 1 : index
    %c0_125 = arith.constant 0 : index
    %c0_126 = arith.constant 0 : index
    %327 = vector.load %arg13[%c1_124, %c0_125, %c0_126] : memref<2x1x128xf32, #tpu.memory_space<vmem>>, vector<1x1x128xf32>
    %328 = vector.shape_cast %327 : vector<1x1x128xf32> to vector<1x128xf32>
    %c1_127 = arith.constant 1 : index
    %c0_128 = arith.constant 0 : index
    %c0_129 = arith.constant 0 : index
    %329 = vector.load %arg14[%c1_127, %c0_128, %c0_129] : memref<2x1x128xf32, #tpu.memory_space<vmem>>, vector<1x1x128xf32>
    %330 = vector.shape_cast %329 : vector<1x1x128xf32> to vector<1x128xf32>
    %cst_130 = arith.constant dense<0.000000e+00> : vector<48xf32>
    %331 = vector.multi_reduction <add>, %326, %cst_130 [1] : vector<48x128xf32> to vector<48xf32>
    %332 = vector.shape_cast %331 : vector<48xf32> to vector<48x1xf32>
    %cst_131 = arith.constant 1.280000e+02 : f32
    %333 = vector.broadcast %cst_131 : f32 to vector<48x1xf32>
    %334 = arith.divf %332, %333 : vector<48x1xf32>
    %335 = vector.broadcast %334 : vector<48x1xf32> to vector<48x128xf32>
    %336 = arith.subf %326, %335 : vector<48x128xf32>
    %337 = arith.mulf %336, %336 : vector<48x128xf32>
    %cst_132 = arith.constant dense<0.000000e+00> : vector<48xf32>
    %338 = vector.multi_reduction <add>, %337, %cst_132 [1] : vector<48x128xf32> to vector<48xf32>
    %339 = vector.shape_cast %338 : vector<48xf32> to vector<48x1xf32>
    %cst_133 = arith.constant 1.280000e+02 : f32
    %340 = vector.broadcast %cst_133 : f32 to vector<48x1xf32>
    %341 = arith.divf %339, %340 : vector<48x1xf32>
    %cst_134 = arith.constant 9.99999997E-7 : f32
    %342 = vector.broadcast %cst_134 : f32 to vector<48x1xf32>
    %343 = arith.addf %341, %342 : vector<48x1xf32>
    %344 = math.rsqrt %343 : vector<48x1xf32>
    %345 = vector.broadcast %344 : vector<48x1xf32> to vector<48x128xf32>
    %346 = arith.mulf %336, %345 : vector<48x128xf32>
    %347 = vector.broadcast %328 : vector<1x128xf32> to vector<48x128xf32>
    %348 = arith.mulf %346, %347 : vector<48x128xf32>
    %349 = vector.broadcast %330 : vector<1x128xf32> to vector<48x128xf32>
    %350 = arith.addf %348, %349 : vector<48x128xf32>
    %351 = arith.truncf %350 : vector<48x128xf32> to vector<48x128xbf16>
    %c1_135 = arith.constant 1 : index
    %c0_136 = arith.constant 0 : index
    %c0_137 = arith.constant 0 : index
    %352 = vector.load %arg15[%c1_135, %c0_136, %c0_137] : memref<2x128x256xbf16, #tpu.memory_space<vmem>>, vector<1x128x256xbf16>
    %353 = vector.shape_cast %352 : vector<1x128x256xbf16> to vector<128x256xbf16>
    %cst_138 = arith.constant dense<0.000000e+00> : vector<48x256xf32>
    %354 = tpu.matmul %351, %353, %cst_138 {dimension_numbers = #tpu.dot_dimension_numbers<[1], [0], [0], [1], [0, 0, 1, 1], [], []>} : vector<48x128xbf16>, vector<128x256xbf16>, vector<48x256xf32> -> vector<48x256xf32>
    %c1_139 = arith.constant 1 : index
    %c0_140 = arith.constant 0 : index
    %c0_141 = arith.constant 0 : index
    %355 = vector.load %arg16[%c1_139, %c0_140, %c0_141] : memref<2x1x256xf32, #tpu.memory_space<vmem>>, vector<1x1x256xf32>
    %356 = vector.shape_cast %355 : vector<1x1x256xf32> to vector<1x256xf32>
    %357 = vector.broadcast %356 : vector<1x256xf32> to vector<48x256xf32>
    %358 = arith.addf %354, %357 : vector<48x256xf32>
    %359 = arith.mulf %358, %358 : vector<48x256xf32>
    %360 = arith.mulf %358, %359 : vector<48x256xf32>
    %cst_142 = arith.constant 4.471500e-02 : f32
    %361 = vector.broadcast %cst_142 : f32 to vector<48x256xf32>
    %362 = arith.mulf %361, %360 : vector<48x256xf32>
    %363 = arith.addf %358, %362 : vector<48x256xf32>
    %cst_143 = arith.constant 0.797884583 : f32
    %364 = vector.broadcast %cst_143 : f32 to vector<48x256xf32>
    %365 = arith.mulf %364, %363 : vector<48x256xf32>
    %366 = math.tanh %365 : vector<48x256xf32>
    %cst_144 = arith.constant 1.000000e+00 : f32
    %367 = vector.broadcast %cst_144 : f32 to vector<48x256xf32>
    %368 = arith.addf %367, %366 : vector<48x256xf32>
    %cst_145 = arith.constant 5.000000e-01 : f32
    %369 = vector.broadcast %cst_145 : f32 to vector<48x256xf32>
    %370 = arith.mulf %369, %368 : vector<48x256xf32>
    %371 = arith.mulf %358, %370 : vector<48x256xf32>
    %372 = arith.truncf %371 : vector<48x256xf32> to vector<48x256xbf16>
    %c1_146 = arith.constant 1 : index
    %c0_147 = arith.constant 0 : index
    %c0_148 = arith.constant 0 : index
    %373 = vector.load %arg17[%c1_146, %c0_147, %c0_148] : memref<2x256x128xbf16, #tpu.memory_space<vmem>>, vector<1x256x128xbf16>
    %374 = vector.shape_cast %373 : vector<1x256x128xbf16> to vector<256x128xbf16>
    %cst_149 = arith.constant dense<0.000000e+00> : vector<48x128xf32>
    %375 = tpu.matmul %372, %374, %cst_149 {dimension_numbers = #tpu.dot_dimension_numbers<[1], [0], [0], [1], [0, 0, 1, 1], [], []>} : vector<48x256xbf16>, vector<256x128xbf16>, vector<48x128xf32> -> vector<48x128xf32>
    %c1_150 = arith.constant 1 : index
    %c0_151 = arith.constant 0 : index
    %c0_152 = arith.constant 0 : index
    %376 = vector.load %arg18[%c1_150, %c0_151, %c0_152] : memref<2x1x128xf32, #tpu.memory_space<vmem>>, vector<1x1x128xf32>
    %377 = vector.shape_cast %376 : vector<1x1x128xf32> to vector<1x128xf32>
    %378 = vector.broadcast %377 : vector<1x128xf32> to vector<48x128xf32>
    %379 = arith.addf %375, %378 : vector<48x128xf32>
    %380 = arith.addf %326, %379 : vector<48x128xf32>
    %381 = vector.shape_cast %380 : vector<48x128xf32> to vector<2x24x128xf32>
    %382 = vector.extract_strided_slice %381 {offsets = [0, 0, 0], sizes = [2, 1, 128], strides = [1, 1, 1]} : vector<2x24x128xf32> to vector<2x1x128xf32>
    %383 = vector.shape_cast %382 : vector<2x1x128xf32> to vector<2x128xf32>
    %c0_153 = arith.constant 0 : index
    %c0_154 = arith.constant 0 : index
    %384 = vector.load %arg19[%c0_153, %c0_154] : memref<1x128xf32, #tpu.memory_space<vmem>>, vector<1x128xf32>
    %c0_155 = arith.constant 0 : index
    %c0_156 = arith.constant 0 : index
    %385 = vector.load %arg20[%c0_155, %c0_156] : memref<1x128xf32, #tpu.memory_space<vmem>>, vector<1x128xf32>
    %cst_157 = arith.constant dense<0.000000e+00> : vector<2xf32>
    %386 = vector.multi_reduction <add>, %383, %cst_157 [1] : vector<2x128xf32> to vector<2xf32>
    %387 = vector.shape_cast %386 : vector<2xf32> to vector<2x1xf32>
    %cst_158 = arith.constant 1.280000e+02 : f32
    %388 = vector.broadcast %cst_158 : f32 to vector<2x1xf32>
    %389 = arith.divf %387, %388 : vector<2x1xf32>
    %390 = vector.broadcast %389 : vector<2x1xf32> to vector<2x128xf32>
    %391 = arith.subf %383, %390 : vector<2x128xf32>
    %392 = arith.mulf %391, %391 : vector<2x128xf32>
    %cst_159 = arith.constant dense<0.000000e+00> : vector<2xf32>
    %393 = vector.multi_reduction <add>, %392, %cst_159 [1] : vector<2x128xf32> to vector<2xf32>
    %394 = vector.shape_cast %393 : vector<2xf32> to vector<2x1xf32>
    %cst_160 = arith.constant 1.280000e+02 : f32
    %395 = vector.broadcast %cst_160 : f32 to vector<2x1xf32>
    %396 = arith.divf %394, %395 : vector<2x1xf32>
    %cst_161 = arith.constant 9.99999997E-7 : f32
    %397 = vector.broadcast %cst_161 : f32 to vector<2x1xf32>
    %398 = arith.addf %396, %397 : vector<2x1xf32>
    %399 = math.rsqrt %398 : vector<2x1xf32>
    %400 = vector.broadcast %399 : vector<2x1xf32> to vector<2x128xf32>
    %401 = arith.mulf %391, %400 : vector<2x128xf32>
    %402 = vector.broadcast %384 : vector<1x128xf32> to vector<2x128xf32>
    %403 = arith.mulf %401, %402 : vector<2x128xf32>
    %404 = vector.broadcast %385 : vector<1x128xf32> to vector<2x128xf32>
    %405 = arith.addf %403, %404 : vector<2x128xf32>
    %406 = arith.truncf %405 : vector<2x128xf32> to vector<2x128xbf16>
    %c0_162 = arith.constant 0 : index
    %c0_163 = arith.constant 0 : index
    %407 = vector.load %arg21[%c0_162, %c0_163] : memref<128x128xbf16, #tpu.memory_space<vmem>>, vector<128x128xbf16>
    %cst_164 = arith.constant dense<0.000000e+00> : vector<2x128xf32>
    %408 = tpu.matmul %406, %407, %cst_164 {dimension_numbers = #tpu.dot_dimension_numbers<[1], [0], [0], [1], [0, 0, 1, 1], [], []>} : vector<2x128xbf16>, vector<128x128xbf16>, vector<2x128xf32> -> vector<2x128xf32>
    %c0_165 = arith.constant 0 : index
    %c0_166 = arith.constant 0 : index
    %409 = vector.load %arg22[%c0_165, %c0_166] : memref<1x128xf32, #tpu.memory_space<vmem>>, vector<1x128xf32>
    %410 = vector.broadcast %409 : vector<1x128xf32> to vector<2x128xf32>
    %411 = arith.addf %408, %410 : vector<2x128xf32>
    %c0_167 = arith.constant 0 : index
    %c0_168 = arith.constant 0 : index
    %412 = vector.load %arg23[%c0_167, %c0_168] : memref<2x128xf32, #tpu.memory_space<vmem>>, vector<2x128xf32>
    tpu.vector_store %arg23[%c0_167, %c0_168], %411 {strides = array<i32>} : memref<2x128xf32, #tpu.memory_space<vmem>>, vector<2x128xf32>,
    return
  }
  func.func @transform_0(%arg0: i32) -> (i32, i32) {
    %c0_i32 = arith.constant 0 : i32
    %c0_i32_0 = arith.constant 0 : i32
    %c0_i32_1 = arith.constant 0 : i32
    return %c0_i32, %c0_i32_0 : i32, i32
  }
  func.func @transform_1(%arg0: i32) -> (i32, i32) {
    %c0_i32 = arith.constant 0 : i32
    %c0_i32_0 = arith.constant 0 : i32
    %c0_i32_1 = arith.constant 0 : i32
    return %c0_i32, %c0_i32_0 : i32, i32
  }
  func.func @transform_2(%arg0: i32) -> (i32, i32) {
    %c0_i32 = arith.constant 0 : i32
    %c0_i32_0 = arith.constant 0 : i32
    %c0_i32_1 = arith.constant 0 : i32
    return %c0_i32, %c0_i32_0 : i32, i32
  }
  func.func @transform_3(%arg0: i32) -> (i32, i32) {
    %c0_i32 = arith.constant 0 : i32
    %c0_i32_0 = arith.constant 0 : i32
    %c0_i32_1 = arith.constant 0 : i32
    return %c0_i32, %c0_i32_0 : i32, i32
  }
  func.func @transform_4(%arg0: i32) -> (i32, i32) {
    %c0_i32 = arith.constant 0 : i32
    %c0_i32_0 = arith.constant 0 : i32
    %c0_i32_1 = arith.constant 0 : i32
    return %c0_i32, %c0_i32_0 : i32, i32
  }
  func.func @transform_5(%arg0: i32) -> (i32, i32) {
    %c0_i32 = arith.constant 0 : i32
    %c0_i32_0 = arith.constant 0 : i32
    %c0_i32_1 = arith.constant 0 : i32
    return %c0_i32, %c0_i32_0 : i32, i32
  }
  func.func @transform_6(%arg0: i32) -> (i32, i32, i32) {
    %c0_i32 = arith.constant 0 : i32
    %c0_i32_0 = arith.constant 0 : i32
    %c0_i32_1 = arith.constant 0 : i32
    %c0_i32_2 = arith.constant 0 : i32
    return %c0_i32, %c0_i32_0, %c0_i32_1 : i32, i32, i32
  }
  func.func @transform_7(%arg0: i32) -> (i32, i32, i32) {
    %c0_i32 = arith.constant 0 : i32
    %c0_i32_0 = arith.constant 0 : i32
    %c0_i32_1 = arith.constant 0 : i32
    %c0_i32_2 = arith.constant 0 : i32
    return %c0_i32, %c0_i32_0, %c0_i32_1 : i32, i32, i32
  }
  func.func @transform_8(%arg0: i32) -> (i32, i32, i32) {
    %c0_i32 = arith.constant 0 : i32
    %c0_i32_0 = arith.constant 0 : i32
    %c0_i32_1 = arith.constant 0 : i32
    %c0_i32_2 = arith.constant 0 : i32
    return %c0_i32, %c0_i32_0, %c0_i32_1 : i32, i32, i32
  }
  func.func @transform_9(%arg0: i32) -> (i32, i32, i32) {
    %c0_i32 = arith.constant 0 : i32
    %c0_i32_0 = arith.constant 0 : i32
    %c0_i32_1 = arith.constant 0 : i32
    %c0_i32_2 = arith.constant 0 : i32
    return %c0_i32, %c0_i32_0, %c0_i32_1 : i32, i32, i32
  }
  func.func @transform_10(%arg0: i32) -> (i32, i32, i32) {
    %c0_i32 = arith.constant 0 : i32
    %c0_i32_0 = arith.constant 0 : i32
    %c0_i32_1 = arith.constant 0 : i32
    %c0_i32_2 = arith.constant 0 : i32
    return %c0_i32, %c0_i32_0, %c0_i32_1 : i32, i32, i32
  }
  func.func @transform_11(%arg0: i32) -> (i32, i32, i32) {
    %c0_i32 = arith.constant 0 : i32
    %c0_i32_0 = arith.constant 0 : i32
    %c0_i32_1 = arith.constant 0 : i32
    %c0_i32_2 = arith.constant 0 : i32
    return %c0_i32, %c0_i32_0, %c0_i32_1 : i32, i32, i32
  }
  func.func @transform_12(%arg0: i32) -> (i32, i32, i32) {
    %c0_i32 = arith.constant 0 : i32
    %c0_i32_0 = arith.constant 0 : i32
    %c0_i32_1 = arith.constant 0 : i32
    %c0_i32_2 = arith.constant 0 : i32
    return %c0_i32, %c0_i32_0, %c0_i32_1 : i32, i32, i32
  }
  func.func @transform_13(%arg0: i32) -> (i32, i32, i32) {
    %c0_i32 = arith.constant 0 : i32
    %c0_i32_0 = arith.constant 0 : i32
    %c0_i32_1 = arith.constant 0 : i32
    %c0_i32_2 = arith.constant 0 : i32
    return %c0_i32, %c0_i32_0, %c0_i32_1 : i32, i32, i32
  }
  func.func @transform_14(%arg0: i32) -> (i32, i32, i32) {
    %c0_i32 = arith.constant 0 : i32
    %c0_i32_0 = arith.constant 0 : i32
    %c0_i32_1 = arith.constant 0 : i32
    %c0_i32_2 = arith.constant 0 : i32
    return %c0_i32, %c0_i32_0, %c0_i32_1 : i32, i32, i32
  }
  func.func @transform_15(%arg0: i32) -> (i32, i32, i32) {
    %c0_i32 = arith.constant 0 : i32
    %c0_i32_0 = arith.constant 0 : i32
    %c0_i32_1 = arith.constant 0 : i32
    %c0_i32_2 = arith.constant 0 : i32
    return %c0_i32, %c0_i32_0, %c0_i32_1 : i32, i32, i32
  }
  func.func @transform_16(%arg0: i32) -> (i32, i32, i32) {
    %c0_i32 = arith.constant 0 : i32
    %c0_i32_0 = arith.constant 0 : i32
    %c0_i32_1 = arith.constant 0 : i32
    %c0_i32_2 = arith.constant 0 : i32
    return %c0_i32, %c0_i32_0, %c0_i32_1 : i32, i32, i32
  }
  func.func @transform_17(%arg0: i32) -> (i32, i32, i32) {
    %c0_i32 = arith.constant 0 : i32
    %c0_i32_0 = arith.constant 0 : i32
    %c0_i32_1 = arith.constant 0 : i32
    %c0_i32_2 = arith.constant 0 : i32
    return %c0_i32, %c0_i32_0, %c0_i32_1 : i32, i32, i32
  }
  func.func @transform_18(%arg0: i32) -> (i32, i32) {
    %c0_i32 = arith.constant 0 : i32
    %c0_i32_0 = arith.constant 0 : i32
    %c0_i32_1 = arith.constant 0 : i32
    return %c0_i32, %c0_i32_0 : i32, i32
  }
  func.func @transform_19(%arg0: i32) -> (i32, i32) {
    %c0_i32 = arith.constant 0 : i32
    %c0_i32_0 = arith.constant 0 : i32
    %c0_i32_1 = arith.constant 0 : i32
    return %c0_i32, %c0_i32_0 : i32, i32
  }
  func.func @transform_20(%arg0: i32) -> (i32, i32) {
    %c0_i32 = arith.constant 0 : i32
    %c0_i32_0 = arith.constant 0 : i32
    %c0_i32_1 = arith.constant 0 : i32
    return %c0_i32, %c0_i32_0 : i32, i32
  }
  func.func @transform_21(%arg0: i32) -> (i32, i32) {
    %c0_i32 = arith.constant 0 : i32
    %c0_i32_0 = arith.constant 0 : i32
    %c0_i32_1 = arith.constant 0 : i32
    return %c0_i32, %c0_i32_0 : i32, i32
  }
  func.func @transform_22(%arg0: i32) -> (i32, i32) {
    %c0_i32 = arith.constant 0 : i32
    %c0_i32_0 = arith.constant 0 : i32
    %c0_i32_1 = arith.constant 0 : i32
    return %c0_i32, %c0_i32_0 : i32, i32
  }
}

</mosaic_0001>

<llo_original>
// kernel: vit_forward.1
$region0: #{vit_forward.1}
  #allocation0 [shape = 'u32[]', space=smem, size = 0x4, offset = 0x4, fixed_abs, tag = 'smem constant byte address 0x4 - core index']
  #allocation1 [shape = 'u32[144,128]{1,0:T(1,128)}', space=vmem, size = 0x12000, scoped, tag = 'internal scratch']
  %s0 = inlined_call_operand.vmem [shape: bf16[32,768], index: 0, kind: input, shape index: {}]
  %s1 = inlined_call_operand.vmem [shape: f32[48,48], index: 1, kind: input, shape index: {}]
  %s2 = inlined_call_operand.vmem [shape: bf16[768,128], index: 2, kind: input, shape index: {}]
  %s3 = inlined_call_operand.vmem [shape: f32[1,128], index: 3, kind: input, shape index: {}]
  %s4 = inlined_call_operand.vmem [shape: f32[1,128], index: 4, kind: input, shape index: {}]
  %s5 = inlined_call_operand.vmem [shape: f32[24,128], index: 5, kind: input, shape index: {}]
  %s6 = inlined_call_operand.vmem [shape: f32[2,1,128], index: 6, kind: input, shape index: {}]
  %s7 = inlined_call_operand.vmem [shape: f32[2,1,128], index: 7, kind: input, shape index: {}]
  %s8 = inlined_call_operand.vmem [shape: bf16[2,128,384], index: 8, kind: input, shape index: {}]
  %s9 = inlined_call_operand.vmem [shape: f32[2,1,384], index: 9, kind: input, shape index: {}]
  %s10 = inlined_call_operand.vmem [shape: bf16[2,128,128], index: 10, kind: input, shape index: {}]
  %s11 = inlined_call_operand.vmem [shape: f32[2,1,128], index: 11, kind: input, shape index: {}]
  %s12 = inlined_call_operand.vmem [shape: f32[2,1,128], index: 12, kind: input, shape index: {}]
  %s13 = inlined_call_operand.vmem [shape: f32[2,1,128], index: 13, kind: input, shape index: {}]
  %s14 = inlined_call_operand.vmem [shape: bf16[2,128,256], index: 14, kind: input, shape index: {}]
  %s15 = inlined_call_operand.vmem [shape: f32[2,1,256], index: 15, kind: input, shape index: {}]
  %s16 = inlined_call_operand.vmem [shape: bf16[2,256,128], index: 16, kind: input, shape index: {}]
  %s17 = inlined_call_operand.vmem [shape: f32[2,1,128], index: 17, kind: input, shape index: {}]
  %s18 = inlined_call_operand.vmem [shape: f32[1,128], index: 18, kind: input, shape index: {}]
  %s19 = inlined_call_operand.vmem [shape: f32[1,128], index: 19, kind: input, shape index: {}]
  %s20 = inlined_call_operand.vmem [shape: bf16[128,128], index: 20, kind: input, shape index: {}]
  %s21 = inlined_call_operand.vmem [shape: f32[1,128], index: 21, kind: input, shape index: {}]
  %s22 = inlined_call_operand.hbm [shape: f32[2,128], index: 22, kind: output, shape index: {}]
  %s23 = sld [smem:[#allocation0]]
  $region98: #{vit_forward.1} parent=0
    _
  %s25 = ssub.s32 1, %s23
  %s26 = scalar_select 0, %s25, %s23
  $region1: #{vit_forward.1} parent=0
    #allocation2 [shape = 'u8[1024]{0}', space=vmem, size = 0x400, scoped, tag = 'output window, operand 0, single buffered']
    #allocation3 [shape = 's32[1]{0}', space=sflag, size = 0x4, scoped, tag = 'scoped memory for vit_forward.1']
    %27 = vsyncpa [#allocation3], 0
    // Predicated region
    $region2: #{vit_forward.1} parent=1 // pred_check
      _
    $region3: #{vit_forward.1} parent=1 // pred_check_branch
      %29 = sbr.rel (0) target = $region5
    $region4: #{vit_forward.1} parent=1 // pred_region
      _
    $region5: #{vit_forward.1} parent=1 // pred_fallthru
      _
    // Predicated region
    $region6: #{vit_forward.1} parent=1 // pred_check
      _
    $region7: #{vit_forward.1} parent=1 // pred_check_branch
      %31 = sbr.rel (0) target = $region9
    $region8: #{vit_forward.1} parent=1 // pred_region
      _
    $region9: #{vit_forward.1} parent=1 // pred_fallthru
      _
    // Predicated region
    $region10: #{vit_forward.1} parent=1 // pred_check
      _
    $region11: #{vit_forward.1} parent=1 // pred_check_branch
      %33 = sbr.rel (0) target = $region13
    $region12: #{vit_forward.1} parent=1 // pred_region
      _
    $region13: #{vit_forward.1} parent=1 // pred_fallthru
      _
    // Predicated region
    $region14: #{vit_forward.1} parent=1 // pred_check
      _
    $region15: #{vit_forward.1} parent=1 // pred_check_branch
      %35 = sbr.rel (0) target = $region17
    $region16: #{vit_forward.1} parent=1 // pred_region
      _
    $region17: #{vit_forward.1} parent=1 // pred_fallthru
      _
    // Predicated region
    $region18: #{vit_forward.1} parent=1 // pred_check
      _
    $region19: #{vit_forward.1} parent=1 // pred_check_branch
      %37 = sbr.rel (0) target = $region21
    $region20: #{vit_forward.1} parent=1 // pred_region
      _
    $region21: #{vit_forward.1} parent=1 // pred_fallthru
      _
    // Predicated region
    $region22: #{vit_forward.1} parent=1 // pred_check
      _
    $region23: #{vit_forward.1} parent=1 // pred_check_branch
      %39 = sbr.rel (0) target = $region25
    $region24: #{vit_forward.1} parent=1 // pred_region
      _
    $region25: #{vit_forward.1} parent=1 // pred_fallthru
      _
    // Predicated region
    $region26: #{vit_forward.1} parent=1 // pred_check
      _
    $region27: #{vit_forward.1} parent=1 // pred_check_branch
      %41 = sbr.rel (0) target = $region29
    $region28: #{vit_forward.1} parent=1 // pred_region
      _
    $region29: #{vit_forward.1} parent=1 // pred_fallthru
      _
    // Predicated region
    $region30: #{vit_forward.1} parent=1 // pred_check
      _
    $region31: #{vit_forward.1} parent=1 // pred_check_branch
      %43 = sbr.rel (0) target = $region33
    $region32: #{vit_forward.1} parent=1 // pred_region
      _
    $region33: #{vit_forward.1} parent=1 // pred_fallthru
      _
    // Predicated region
    $region34: #{vit_forward.1} parent=1 // pred_check
      _
    $region35: #{vit_forward.1} parent=1 // pred_check_branch
      %45 = sbr.rel (0) target = $region37
    $region36: #{vit_forward.1} parent=1 // pred_region
      _
    $region37: #{vit_forward.1} parent=1 // pred_fallthru
      _
    // Predicated region
    $region38: #{vit_forward.1} parent=1 // pred_check
      _
    $region39: #{vit_forward.1} parent=1 // pred_check_branch
      %47 = sbr.rel (0) target = $region41
    $region40: #{vit_forward.1} parent=1 // pred_region
      _
    $region41: #{vit_forward.1} parent=1 // pred_fallthru
      _
    // Predicated region
    $region42: #{vit_forward.1} parent=1 // pred_check
      _
    $region43: #{vit_forward.1} parent=1 // pred_check_branch
      %49 = sbr.rel (0) target = $region45
    $region44: #{vit_forward.1} parent=1 // pred_region
      _
    $region45: #{vit_forward.1} parent=1 // pred_fallthru
      _
    // Predicated region
    $region46: #{vit_forward.1} parent=1 // pred_check
      _
    $region47: #{vit_forward.1} parent=1 // pred_check_branch
      %51 = sbr.rel (0) target = $region49
    $region48: #{vit_forward.1} parent=1 // pred_region
      _
    $region49: #{vit_forward.1} parent=1 // pred_fallthru
      _
    // Predicated region
    $region50: #{vit_forward.1} parent=1 // pred_check
      _
    $region51: #{vit_forward.1} parent=1 // pred_check_branch
      %53 = sbr.rel (0) target = $region53
    $region52: #{vit_forward.1} parent=1 // pred_region
      _
    $region53: #{vit_forward.1} parent=1 // pred_fallthru
      _
    // Predicated region
    $region54: #{vit_forward.1} parent=1 // pred_check
      _
    $region55: #{vit_forward.1} parent=1 // pred_check_branch
      %55 = sbr.rel (0) target = $region57
    $region56: #{vit_forward.1} parent=1 // pred_region
      _
    $region57: #{vit_forward.1} parent=1 // pred_fallthru
      _
    // Predicated region
    $region58: #{vit_forward.1} parent=1 // pred_check
      _
    $region59: #{vit_forward.1} parent=1 // pred_check_branch
      %57 = sbr.rel (0) target = $region61
    $region60: #{vit_forward.1} parent=1 // pred_region
      _
    $region61: #{vit_forward.1} parent=1 // pred_fallthru
      _
    // Predicated region
    $region62: #{vit_forward.1} parent=1 // pred_check
      _
    $region63: #{vit_forward.1} parent=1 // pred_check_branch
      %59 = sbr.rel (0) target = $region65
    $region64: #{vit_forward.1} parent=1 // pred_region
      _
    $region65: #{vit_forward.1} parent=1 // pred_fallthru
      _
    // Predicated region
    $region66: #{vit_forward.1} parent=1 // pred_check
      _
    $region67: #{vit_forward.1} parent=1 // pred_check_branch
      %61 = sbr.rel (0) target = $region69
    $region68: #{vit_forward.1} parent=1 // pred_region
      _
    $region69: #{vit_forward.1} parent=1 // pred_fallthru
      _
    // Predicated region
    $region70: #{vit_forward.1} parent=1 // pred_check
      _
    $region71: #{vit_forward.1} parent=1 // pred_check_branch
      %63 = sbr.rel (0) target = $region73
    $region72: #{vit_forward.1} parent=1 // pred_region
      _
    $region73: #{vit_forward.1} parent=1 // pred_fallthru
      _
    // Predicated region
    $region74: #{vit_forward.1} parent=1 // pred_check
      _
    $region75: #{vit_forward.1} parent=1 // pred_check_branch
      %65 = sbr.rel (0) target = $region77
    $region76: #{vit_forward.1} parent=1 // pred_region
      _
    $region77: #{vit_forward.1} parent=1 // pred_fallthru
      _
    // Predicated region
    $region78: #{vit_forward.1} parent=1 // pred_check
      _
    $region79: #{vit_forward.1} parent=1 // pred_check_branch
      %67 = sbr.rel (0) target = $region81
    $region80: #{vit_forward.1} parent=1 // pred_region
      _
    $region81: #{vit_forward.1} parent=1 // pred_fallthru
      _
    // Predicated region
    $region82: #{vit_forward.1} parent=1 // pred_check
      _
    $region83: #{vit_forward.1} parent=1 // pred_check_branch
      %69 = sbr.rel (0) target = $region85
    $region84: #{vit_forward.1} parent=1 // pred_region
      _
    $region85: #{vit_forward.1} parent=1 // pred_fallthru
      _
    // Predicated region
    $region86: #{vit_forward.1} parent=1 // pred_check
      _
    $region87: #{vit_forward.1} parent=1 // pred_check_branch
      %71 = sbr.rel (0) target = $region89
    $region88: #{vit_forward.1} parent=1 // pred_region
      _
    $region89: #{vit_forward.1} parent=1 // pred_fallthru
      _
    %v73 = vld [vmem:[%s0] sm:$0xff]
    %v74 = vld [vmem:[%s0 + $0x8] sm:$0xff]
    %v75 = vld [vmem:[%s0 + $0x10] sm:$0xff]
    %v76 = vld [vmem:[%s0 + $0x18] sm:$0xff]
    %v77 = vld [vmem:[%s0 + $0x20] sm:$0xff]
    %v78 = vld [vmem:[%s0 + $0x28] sm:$0xff]
    %v79 = vld [vmem:[%s0 + $0x30] sm:$0xff]
    %v80 = vld [vmem:[%s0 + $0x38] sm:$0xff]
    %v81 = vld [vmem:[%s0 + $0x40] sm:$0xff]
    %v82 = vld [vmem:[%s0 + $0x48] sm:$0xff]
    %v83 = vld [vmem:[%s0 + $0x50] sm:$0xff]
    %v84 = vld [vmem:[%s0 + $0x58] sm:$0xff]
    %v85 = vld [vmem:[%s2] sm:$0xf]
    %v86 = vld [vmem:[%s2 + $0x4] sm:$0xf]
    %v87 = vld [vmem:[%s2 + $0x8] sm:$0xf]
    %v88 = vld [vmem:[%s2 + $0xc] sm:$0xf]
    %v89 = vld [vmem:[%s2 + $0x10] sm:$0xf]
    %v90 = vld [vmem:[%s2 + $0x14] sm:$0xf]
    %v91 = vld [vmem:[%s2 + $0x18] sm:$0xf]
    %v92 = vld [vmem:[%s2 + $0x1c] sm:$0xf]
    %v93 = vld [vmem:[%s2 + $0x20] sm:$0xf]
    %v94 = vld [vmem:[%s2 + $0x24] sm:$0xf]
    %v95 = vld [vmem:[%s2 + $0x28] sm:$0xf]
    %v96 = vld [vmem:[%s2 + $0x2c] sm:$0xf]
    %v97 = vld [vmem:[%s2 + $0x30] sm:$0xf]
    %v98 = vld [vmem:[%s2 + $0x34] sm:$0xf]
    %v99 = vld [vmem:[%s2 + $0x38] sm:$0xf]
    %v100 = vld [vmem:[%s2 + $0x3c] sm:$0xf]
    %v101 = vld [vmem:[%s2 + $0x40] sm:$0xf]
    %v102 = vld [vmem:[%s2 + $0x44] sm:$0xf]
    %v103 = vld [vmem:[%s2 + $0x48] sm:$0xf]
    %v104 = vld [vmem:[%s2 + $0x4c] sm:$0xf]
    %v105 = vld [vmem:[%s2 + $0x50] sm:$0xf]
    %v106 = vld [vmem:[%s2 + $0x54] sm:$0xf]
    %v107 = vld [vmem:[%s2 + $0x58] sm:$0xf]
    %v108 = vld [vmem:[%s2 + $0x5c] sm:$0xf]
    %v109 = vld [vmem:[%s2 + $0x60] sm:$0xf]
    %v110 = vld [vmem:[%s2 + $0x64] sm:$0xf]
    %v111 = vld [vmem:[%s2 + $0x68] sm:$0xf]
    %v112 = vld [vmem:[%s2 + $0x6c] sm:$0xf]
    %v113 = vld [vmem:[%s2 + $0x70] sm:$0xf]
    %v114 = vld [vmem:[%s2 + $0x74] sm:$0xf]
    %v115 = vld [vmem:[%s2 + $0x78] sm:$0xf]
    %v116 = vld [vmem:[%s2 + $0x7c] sm:$0xf]
    %v117 = vld [vmem:[%s2 + $0x80] sm:$0xf]
    %v118 = vld [vmem:[%s2 + $0x84] sm:$0xf]
    %v119 = vld [vmem:[%s2 + $0x88] sm:$0xf]
    %v120 = vld [vmem:[%s2 + $0x8c] sm:$0xf]
    %v121 = vld [vmem:[%s2 + $0x90] sm:$0xf]
    %v122 = vld [vmem:[%s2 + $0x94] sm:$0xf]
    %v123 = vld [vmem:[%s2 + $0x98] sm:$0xf]
    %v124 = vld [vmem:[%s2 + $0x9c] sm:$0xf]
    %v125 = vld [vmem:[%s2 + $0xa0] sm:$0xf]
    %v126 = vld [vmem:[%s2 + $0xa4] sm:$0xf]
    %v127 = vld [vmem:[%s2 + $0xa8] sm:$0xf]
    %v128 = vld [vmem:[%s2 + $0xac] sm:$0xf]
    %v129 = vld [vmem:[%s2 + $0xb0] sm:$0xf]
    %v130 = vld [vmem:[%s2 + $0xb4] sm:$0xf]
    %v131 = vld [vmem:[%s2 + $0xb8] sm:$0xf]
    %v132 = vld [vmem:[%s2 + $0xbc] sm:$0xf]
    %v133 = vld [vmem:[%s2 + $0xc0] sm:$0xf]
    %v134 = vld [vmem:[%s2 + $0xc4] sm:$0xf]
    %v135 = vld [vmem:[%s2 + $0xc8] sm:$0xf]
    %v136 = vld [vmem:[%s2 + $0xcc] sm:$0xf]
    %v137 = vld [vmem:[%s2 + $0xd0] sm:$0xf]
    %v138 = vld [vmem:[%s2 + $0xd4] sm:$0xf]
    %v139 = vld [vmem:[%s2 + $0xd8] sm:$0xf]
    %v140 = vld [vmem:[%s2 + $0xdc] sm:$0xf]
    %v141 = vld [vmem:[%s2 + $0xe0] sm:$0xf]
    %v142 = vld [vmem:[%s2 + $0xe4] sm:$0xf]
    %v143 = vld [vmem:[%s2 + $0xe8] sm:$0xf]
    %v144 = vld [vmem:[%s2 + $0xec] sm:$0xf]
    %v145 = vld [vmem:[%s2 + $0xf0] sm:$0xf]
    %v146 = vld [vmem:[%s2 + $0xf4] sm:$0xf]
    %v147 = vld [vmem:[%s2 + $0xf8] sm:$0xf]
    %v148 = vld [vmem:[%s2 + $0xfc] sm:$0xf]
    %v149 = vld [vmem:[%s2 + $0x100] sm:$0xf]
    %v150 = vld [vmem:[%s2 + $0x104] sm:$0xf]
    %v151 = vld [vmem:[%s2 + $0x108] sm:$0xf]
    %v152 = vld [vmem:[%s2 + $0x10c] sm:$0xf]
    %v153 = vld [vmem:[%s2 + $0x110] sm:$0xf]
    %v154 = vld [vmem:[%s2 + $0x114] sm:$0xf]
    %v155 = vld [vmem:[%s2 + $0x118] sm:$0xf]
    %v156 = vld [vmem:[%s2 + $0x11c] sm:$0xf]
    %v157 = vld [vmem:[%s2 + $0x120] sm:$0xf]
    %v158 = vld [vmem:[%s2 + $0x124] sm:$0xf]
    %v159 = vld [vmem:[%s2 + $0x128] sm:$0xf]
    %v160 = vld [vmem:[%s2 + $0x12c] sm:$0xf]
    %v161 = vld [vmem:[%s2 + $0x130] sm:$0xf]
    %v162 = vld [vmem:[%s2 + $0x134] sm:$0xf]
    %v163 = vld [vmem:[%s2 + $0x138] sm:$0xf]
    %v164 = vld [vmem:[%s2 + $0x13c] sm:$0xf]
    %v165 = vld [vmem:[%s2 + $0x140] sm:$0xf]
    %v166 = vld [vmem:[%s2 + $0x144] sm:$0xf]
    %v167 = vld [vmem:[%s2 + $0x148] sm:$0xf]
    %v168 = vld [vmem:[%s2 + $0x14c] sm:$0xf]
    %v169 = vld [vmem:[%s2 + $0x150] sm:$0xf]
    %v170 = vld [vmem:[%s2 + $0x154] sm:$0xf]
    %v171 = vld [vmem:[%s2 + $0x158] sm:$0xf]
    %v172 = vld [vmem:[%s2 + $0x15c] sm:$0xf]
    %v173 = vld [vmem:[%s2 + $0x160] sm:$0xf]
    %v174 = vld [vmem:[%s2 + $0x164] sm:$0xf]
    %v175 = vld [vmem:[%s2 + $0x168] sm:$0xf]
    %v176 = vld [vmem:[%s2 + $0x16c] sm:$0xf]
    %v177 = vld [vmem:[%s2 + $0x170] sm:$0xf]
    %v178 = vld [vmem:[%s2 + $0x174] sm:$0xf]
    %v179 = vld [vmem:[%s2 + $0x178] sm:$0xf]
    %v180 = vld [vmem:[%s2 + $0x17c] sm:$0xf]
    %v181 = vld [vmem:[%s3] sm:$0x1]
    %v183 = vlaneseq
    %v184 = vshrl.u32 %v183, 7
    %v185 = vsub.s32 0, %v184
    %v186 = vrot.slane %v181, %v185
    %v200 = vunpack.c.l.b16 %v73
    %v201 = vunpack.c.h.b16 %v73
    %v202 = vunpack.c.l.b16 %v74
    %v203 = vunpack.c.h.b16 %v74
    %v204 = vunpack.c.l.b16 %v75
    %v205 = vunpack.c.h.b16 %v75
    %v206 = vunpack.c.l.b16 %v76
    %v207 = vunpack.c.h.b16 %v76
    %v208 = vunpack.c.l.b16 %v77
    %v209 = vunpack.c.h.b16 %v77
    %v210 = vunpack.c.l.b16 %v78
    %v211 = vunpack.c.h.b16 %v78
    %v212 = vunpack.c.l.b16 %v79
    %v213 = vunpack.c.h.b16 %v79
    %v214 = vunpack.c.l.b16 %v80
    %v215 = vunpack.c.h.b16 %v80
    %v216 = vunpack.c.l.b16 %v81
    %v217 = vunpack.c.h.b16 %v81
    %v218 = vunpack.c.l.b16 %v82
    %v219 = vunpack.c.h.b16 %v82
    %v220 = vunpack.c.l.b16 %v83
    %v221 = vunpack.c.h.b16 %v83
    %v222 = vunpack.c.l.b16 %v84
    %v223 = vunpack.c.h.b16 %v84
    %v224 = vpack.c.b16 %v206, %v200
    %v225 = vpack.c.b16 %v207, %v201
    %v226 = vpack.c.b16 %v208, %v202
    %v227 = vpack.c.b16 %v209, %v203
    %v228 = vpack.c.b16 %v210, %v204
    %v229 = vpack.c.b16 %v211, %v205
    %v230 = vpack.c.b16 %v218, %v212
    %v231 = vpack.c.b16 %v219, %v213
    %v232 = vpack.c.b16 %v220, %v214
    %v233 = vpack.c.b16 %v221, %v215
    %v234 = vpack.c.b16 %v222, %v216
    %v235 = vpack.c.b16 %v223, %v217
    %v344 = vunpack.c.l.b16 %v85
    %v345 = vunpack.c.l.b16 %v86
    %v346 = vunpack.c.l.b16 %v87
    %v347 = vunpack.c.l.b16 %v88
    %v348 = vunpack.c.l.b16 %v89
    %v349 = vunpack.c.l.b16 %v90
    %v350 = vunpack.c.l.b16 %v91
    %v351 = vunpack.c.l.b16 %v92
    %v352 = vunpack.c.l.b16 %v93
    %v353 = vunpack.c.l.b16 %v94
    %v354 = vunpack.c.l.b16 %v95
    %v355 = vunpack.c.l.b16 %v96
    %v356 = vunpack.c.l.b16 %v97
    %v357 = vunpack.c.l.b16 %v98
    %v358 = vunpack.c.l.b16 %v99
    %v359 = vunpack.c.l.b16 %v100
    %v360 = vunpack.c.l.b16 %v101
    %v361 = vunpack.c.l.b16 %v102
    %v362 = vunpack.c.l.b16 %v103
    %v363 = vunpack.c.l.b16 %v104
    %v364 = vunpack.c.l.b16 %v105
    %v365 = vunpack.c.l.b16 %v106
    %v366 = vunpack.c.l.b16 %v107
    %v367 = vunpack.c.l.b16 %v108
    %v368 = vunpack.c.l.b16 %v109
    %v369 = vunpack.c.l.b16 %v110
    %v370 = vunpack.c.l.b16 %v111
    %v371 = vunpack.c.l.b16 %v112
    %v372 = vunpack.c.l.b16 %v113
    %v373 = vunpack.c.l.b16 %v114
    %v374 = vunpack.c.l.b16 %v115
    %v375 = vunpack.c.l.b16 %v116
    %v376 = vunpack.c.l.b16 %v117
    %v377 = vunpack.c.l.b16 %v118
    %v378 = vunpack.c.l.b16 %v119
    %v379 = vunpack.c.l.b16 %v120
    %v380 = vunpack.c.l.b16 %v121
    %v381 = vunpack.c.l.b16 %v122
    %v382 = vunpack.c.l.b16 %v123
    %v383 = vunpack.c.l.b16 %v124
    %v384 = vunpack.c.l.b16 %v125
    %v385 = vunpack.c.l.b16 %v126
    %v386 = vunpack.c.l.b16 %v127
    %v387 = vunpack.c.l.b16 %v128
    %v388 = vunpack.c.l.b16 %v129
    %v389 = vunpack.c.l.b16 %v130
    %v390 = vunpack.c.l.b16 %v131
    %v391 = vunpack.c.l.b16 %v132
    %v392 = vunpack.c.l.b16 %v133
    %v393 = vunpack.c.l.b16 %v134
    %v394 = vunpack.c.l.b16 %v135
    %v395 = vunpack.c.l.b16 %v136
    %v396 = vunpack.c.l.b16 %v137
    %v397 = vunpack.c.l.b16 %v138
    %v398 = vunpack.c.l.b16 %v139
    %v399 = vunpack.c.l.b16 %v140
    %v400 = vunpack.c.l.b16 %v141
    %v401 = vunpack.c.l.b16 %v142
    %v402 = vunpack.c.l.b16 %v143
    %v403 = vunpack.c.l.b16 %v144
    %v404 = vunpack.c.l.b16 %v145
    %v405 = vunpack.c.l.b16 %v146
    %v406 = vunpack.c.l.b16 %v147
    %v407 = vunpack.c.l.b16 %v148
    %v408 = vunpack.c.l.b16 %v149
    %v409 = vunpack.c.l.b16 %v150
    %v410 = vunpack.c.l.b16 %v151
    %v411 = vunpack.c.l.b16 %v152
    %v412 = vunpack.c.l.b16 %v153
    %v413 = vunpack.c.l.b16 %v154
    %v414 = vunpack.c.l.b16 %v155
    %v415 = vunpack.c.l.b16 %v156
    %v416 = vunpack.c.l.b16 %v157
    %v417 = vunpack.c.l.b16 %v158
    %v418 = vunpack.c.l.b16 %v159
    %v419 = vunpack.c.l.b16 %v160
    %v420 = vunpack.c.l.b16 %v161
    %v421 = vunpack.c.l.b16 %v162
    %v422 = vunpack.c.l.b16 %v163
    %v423 = vunpack.c.l.b16 %v164
    %v424 = vunpack.c.l.b16 %v165
    %v425 = vunpack.c.l.b16 %v166
    %v426 = vunpack.c.l.b16 %v167
    %v427 = vunpack.c.l.b16 %v168
    %v428 = vunpack.c.l.b16 %v169
    %v429 = vunpack.c.l.b16 %v170
    %v430 = vunpack.c.l.b16 %v171
    %v431 = vunpack.c.l.b16 %v172
    %v432 = vunpack.c.l.b16 %v173
    %v433 = vunpack.c.l.b16 %v174
    %v434 = vunpack.c.l.b16 %v175
    %v435 = vunpack.c.l.b16 %v176
    %v436 = vunpack.c.l.b16 %v177
    %v437 = vunpack.c.l.b16 %v178
    %v438 = vunpack.c.l.b16 %v179
    %v439 = vunpack.c.l.b16 %v180
    %v440 = vpack.c.b16 %v345, %v344
    %v441 = vpack.c.b16 %v347, %v346
    %v442 = vpack.c.b16 %v349, %v348
    %v443 = vpack.c.b16 %v351, %v350
    %v444 = vpack.c.b16 %v353, %v352
    %v445 = vpack.c.b16 %v355, %v354
    %v446 = vpack.c.b16 %v357, %v356
    %v447 = vpack.c.b16 %v359, %v358
    %v448 = vpack.c.b16 %v361, %v360
    %v449 = vpack.c.b16 %v363, %v362
    %v450 = vpack.c.b16 %v365, %v364
    %v451 = vpack.c.b16 %v367, %v366
    %v452 = vpack.c.b16 %v369, %v368
    %v453 = vpack.c.b16 %v371, %v370
    %v454 = vpack.c.b16 %v373, %v372
    %v455 = vpack.c.b16 %v375, %v374
    %v456 = vpack.c.b16 %v377, %v376
    %v457 = vpack.c.b16 %v379, %v378
    %v458 = vpack.c.b16 %v381, %v380
    %v459 = vpack.c.b16 %v383, %v382
    %v460 = vpack.c.b16 %v385, %v384
    %v461 = vpack.c.b16 %v387, %v386
    %v462 = vpack.c.b16 %v389, %v388
    %v463 = vpack.c.b16 %v391, %v390
    %v464 = vpack.c.b16 %v393, %v392
    %v465 = vpack.c.b16 %v395, %v394
    %v466 = vpack.c.b16 %v397, %v396
    %v467 = vpack.c.b16 %v399, %v398
    %v468 = vpack.c.b16 %v401, %v400
    %v469 = vpack.c.b16 %v403, %v402
    %v470 = vpack.c.b16 %v405, %v404
    %v471 = vpack.c.b16 %v407, %v406
    %v472 = vpack.c.b16 %v409, %v408
    %v473 = vpack.c.b16 %v411, %v410
    %v474 = vpack.c.b16 %v413, %v412
    %v475 = vpack.c.b16 %v415, %v414
    %v476 = vpack.c.b16 %v417, %v416
    %v477 = vpack.c.b16 %v419, %v418
    %v478 = vpack.c.b16 %v421, %v420
    %v479 = vpack.c.b16 %v423, %v422
    %v480 = vpack.c.b16 %v425, %v424
    %v481 = vpack.c.b16 %v427, %v426
    %v482 = vpack.c.b16 %v429, %v428
    %v483 = vpack.c.b16 %v431, %v430
    %v484 = vpack.c.b16 %v433, %v432
    %v485 = vpack.c.b16 %v435, %v434
    %v486 = vpack.c.b16 %v437, %v436
    %v487 = vpack.c.b16 %v439, %v438
    %536 = vmatprep.subr.bf16.mxu0 0
    %537 = vmatpush1.bf16.msra.mxu0 %v447
    %538 = vmatprep.subr.bf16.mxu0 0
    %539 = vmatpush1.bf16.msra.mxu0 %v446
    %540 = vmatprep.subr.bf16.mxu0 0
    %541 = vmatpush1.bf16.msra.mxu0 %v445
    %542 = vmatprep.subr.bf16.mxu0 0
    %543 = vmatpush1.bf16.msra.mxu0 %v444
    %544 = vmatprep.subr.bf16.mxu0 0
    %545 = vmatpush1.bf16.msra.mxu0 %v443
    %546 = vmatprep.subr.bf16.mxu0 0
    %547 = vmatpush1.bf16.msra.mxu0 %v442
    %548 = vmatprep.subr.bf16.mxu0 0
    %549 = vmatpush1.bf16.msra.mxu0 %v441
    %550 = vmatprep.subr.bf16.mxu0 0
    %551 = vmatpush1.bf16.msra.mxu0 %v440
    %552 = vmatprep.subr.bf16.mxu0 0
    %553 = vmatpush2.bf16.msra.mxu0 %v455
    %554 = vmatprep.subr.bf16.mxu0 0
    %555 = vmatpush2.bf16.msra.mxu0 %v454
    %556 = vmatprep.subr.bf16.mxu0 0
    %557 = vmatpush2.bf16.msra.mxu0 %v453
    %558 = vmatprep.subr.bf16.mxu0 0
    %559 = vmatpush2.bf16.msra.mxu0 %v452
    %560 = vmatprep.subr.bf16.mxu0 0
    %561 = vmatpush2.bf16.msra.mxu0 %v451
    %562 = vmatprep.subr.bf16.mxu0 0
    %563 = vmatpush2.bf16.msra.mxu0 %v450
    %564 = vmatprep.subr.bf16.mxu0 0
    %565 = vmatpush2.bf16.msra.mxu0 %v449
    %566 = vmatprep.subr.bf16.mxu0 0
    %567 = vmatpush2.bf16.msra.mxu0 %v448
    %568 = vmatprep.mubr.bf16.mxu0 %v225
    %569 = vmatmul.mubr.bf16.gmra.mxu0 %v224
    %v570 = vpop.f32.mrf.mxu0
    %v571 = vadd.f32 %v186, %v570
    %v572 = vpop.f32.mrf.mxu0
    %v573 = vpop.f32.mrf.mxu0
    %v574 = vadd.f32 %v186, %v573
    %v575 = vpop.f32.mrf.mxu0
    %576 = vmatprep.mubr.bf16.mxu0 %v231
    %577 = vmatmul.mubr.bf16.gmra.mxu0 %v230
    %v578 = vpop.f32.mrf.mxu0
    %v579 = vadd.f32 %v186, %v578
    %v580 = vpop.f32.mrf.mxu0
    %v581 = vpop.f32.mrf.mxu0
    %v582 = vadd.f32 %v186, %v581
    %v583 = vpop.f32.mrf.mxu0
    %584 = vdwg.mxu0
    %585 = vmatprep.subr.bf16.mxu0 0
    %586 = vmatpush1.bf16.msra.mxu0 %v463
    %587 = vmatprep.subr.bf16.mxu0 0
    %588 = vmatpush1.bf16.msra.mxu0 %v462
    %589 = vmatprep.subr.bf16.mxu0 0
    %590 = vmatpush1.bf16.msra.mxu0 %v461
    %591 = vmatprep.subr.bf16.mxu0 0
    %592 = vmatpush1.bf16.msra.mxu0 %v460
    %593 = vmatprep.subr.bf16.mxu0 0
    %594 = vmatpush1.bf16.msra.mxu0 %v459
    %595 = vmatprep.subr.bf16.mxu0 0
    %596 = vmatpush1.bf16.msra.mxu0 %v458
    %597 = vmatprep.subr.bf16.mxu0 0
    %598 = vmatpush1.bf16.msra.mxu0 %v457
    %599 = vmatprep.subr.bf16.mxu0 0
    %600 = vmatpush1.bf16.msra.mxu0 %v456
    %601 = vmatprep.subr.bf16.mxu0 0
    %602 = vmatpush2.bf16.msra.mxu0 %v471
    %603 = vmatprep.subr.bf16.mxu0 0
    %604 = vmatpush2.bf16.msra.mxu0 %v470
    %605 = vmatprep.subr.bf16.mxu0 0
    %606 = vmatpush2.bf16.msra.mxu0 %v469
    %607 = vmatprep.subr.bf16.mxu0 0
    %608 = vmatpush2.bf16.msra.mxu0 %v468
    %609 = vmatprep.subr.bf16.mxu0 0
    %610 = vmatpush2.bf16.msra.mxu0 %v467
    %611 = vmatprep.subr.bf16.mxu0 0
    %612 = vmatpush2.bf16.msra.mxu0 %v466
    %613 = vmatprep.subr.bf16.mxu0 0
    %614 = vmatpush2.bf16.msra.mxu0 %v465
    %615 = vmatprep.subr.bf16.mxu0 0
    %616 = vmatpush2.bf16.msra.mxu0 %v464
    %617 = vmatprep.mubr.bf16.mxu0 %v227
    %618 = vmatmul.mubr.bf16.gmra.mxu0 %v226
    %v619 = vpop.f32.mrf.mxu0
    %v620 = vadd.f32 %v571, %v619
    %v621 = vpop.f32.mrf.mxu0
    %v622 = vpop.f32.mrf.mxu0
    %v623 = vadd.f32 %v574, %v622
    %v624 = vpop.f32.mrf.mxu0
    %625 = vmatprep.mubr.bf16.mxu0 %v233
    %626 = vmatmul.mubr.bf16.gmra.mxu0 %v232
    %v627 = vpop.f32.mrf.mxu0
    %v628 = vadd.f32 %v579, %v627
    %v629 = vpop.f32.mrf.mxu0
    %v630 = vpop.f32.mrf.mxu0
    %v631 = vadd.f32 %v582, %v630
    %v632 = vpop.f32.mrf.mxu0
    %633 = vdwg.mxu0
    %634 = vmatprep.subr.bf16.mxu0 0
    %635 = vmatpush1.bf16.msra.mxu0 %v479
    %636 = vmatprep.subr.bf16.mxu0 0
    %637 = vmatpush1.bf16.msra.mxu0 %v478
    %638 = vmatprep.subr.bf16.mxu0 0
    %639 = vmatpush1.bf16.msra.mxu0 %v477
    %640 = vmatprep.subr.bf16.mxu0 0
    %641 = vmatpush1.bf16.msra.mxu0 %v476
    %642 = vmatprep.subr.bf16.mxu0 0
    %643 = vmatpush1.bf16.msra.mxu0 %v475
    %644 = vmatprep.subr.bf16.mxu0 0
    %645 = vmatpush1.bf16.msra.mxu0 %v474
    %646 = vmatprep.subr.bf16.mxu0 0
    %647 = vmatpush1.bf16.msra.mxu0 %v473
    %648 = vmatprep.subr.bf16.mxu0 0
    %649 = vmatpush1.bf16.msra.mxu0 %v472
    %650 = vmatprep.subr.bf16.mxu0 0
    %651 = vmatpush2.bf16.msra.mxu0 %v487
    %652 = vmatprep.subr.bf16.mxu0 0
    %653 = vmatpush2.bf16.msra.mxu0 %v486
    %654 = vmatprep.subr.bf16.mxu0 0
    %655 = vmatpush2.bf16.msra.mxu0 %v485
    %656 = vmatprep.subr.bf16.mxu0 0
    %657 = vmatpush2.bf16.msra.mxu0 %v484
    %658 = vmatprep.subr.bf16.mxu0 0
    %659 = vmatpush2.bf16.msra.mxu0 %v483
    %660 = vmatprep.subr.bf16.mxu0 0
    %661 = vmatpush2.bf16.msra.mxu0 %v482
    %662 = vmatprep.subr.bf16.mxu0 0
    %663 = vmatpush2.bf16.msra.mxu0 %v481
    %664 = vmatprep.subr.bf16.mxu0 0
    %665 = vmatpush2.bf16.msra.mxu0 %v480
    %666 = vmatprep.mubr.bf16.mxu0 %v229
    %667 = vmatmul.mubr.bf16.gmra.mxu0 %v228
    %v668 = vpop.f32.mrf.mxu0
    %v669 = vadd.f32 %v620, %v668
    %v670 = vpop.f32.mrf.mxu0
    %v671 = vpop.f32.mrf.mxu0
    %v672 = vadd.f32 %v623, %v671
    %v673 = vpop.f32.mrf.mxu0
    %674 = vmatprep.mubr.bf16.mxu0 %v235
    %675 = vmatmul.mubr.bf16.gmra.mxu0 %v234
    %v676 = vpop.f32.mrf.mxu0
    %v677 = vadd.f32 %v628, %v676
    %v678 = vpop.f32.mrf.mxu0
    %v679 = vpop.f32.mrf.mxu0
    %v680 = vadd.f32 %v631, %v679
    %v681 = vpop.f32.mrf.mxu0
    %682 = vdwg.mxu0
    %v683 = vld [vmem:[%s4] sm:$0x1]
    %vm688 = vcmask 1040384
    %v689 = vrot.slane %v669, 7
    %v690 = vrot.slane %v672, 7
    %v691 = vsel %vm688, %v689, %v690
    %v692 = vrot.slane %v677, 7
    %v693 = vrot.slane %v680, 7
    %v694 = vsel %vm688, %v692, %v693
    %v701 = vsel %vm688, %v683, %v689
    %v702 = vsel %vm688, %v683, %v692
    %v703 = vsel %vm688, %v690, 0.0
    %v704 = vsel %vm688, %v693, 0.0
    %v705 = vld [vmem:[%s5] sm:$0xff]
    %v706 = vld [vmem:[%s5 + $0x8] sm:$0xff]
    %v707 = vld [vmem:[%s5 + $0x10] sm:$0xff]
    %v708 = vadd.f32 %v701, %v705
    %v709 = vadd.f32 %v691, %v706
    %v710 = vadd.f32 %v703, %v707
    %v711 = vadd.f32 %v702, %v705
    %v712 = vadd.f32 %v694, %v706
    %v713 = vadd.f32 %v704, %v707
    %v714 = vld [vmem:[%s1] sm:$0xff]
    %v715 = vld [vmem:[%s1 + $0x8] sm:$0xff]
    %v716 = vld [vmem:[%s1 + $0x10] sm:$0xff]
    %v717 = vld [vmem:[%s1 + $0x18] sm:$0xff]
    %v718 = vld [vmem:[%s1 + $0x20] sm:$0xff]
    %v719 = vld [vmem:[%s1 + $0x28] sm:$0xff]
    %v720 = vld [vmem:[%s6] sm:$0x1]
    %v721 = vld [vmem:[%s7] sm:$0x1]
    %722 = vadd.xlane.f32.xlu0 %v708
    %v723 = vpop.xlane.xlu0 %722
    %724 = vadd.xlane.f32.xlu0 %v709
    %v725 = vpop.xlane.xlu0 %724
    %726 = vadd.xlane.f32.xlu0 %v710
    %v727 = vpop.xlane.xlu0 %726
    %728 = vadd.xlane.f32.xlu0 %v711
    %v729 = vpop.xlane.xlu0 %728
    %730 = vadd.xlane.f32.xlu0 %v712
    %v731 = vpop.xlane.xlu0 %730
    %732 = vadd.xlane.f32.xlu0 %v713
    %v733 = vpop.xlane.xlu0 %732
    %v734 = vrcp.pop 128.0
    %v735 = vmul.f32 %v723, %v734
    %v736 = vmul.f32 %v725, %v734
    %v737 = vmul.f32 %v727, %v734
    %v738 = vmul.f32 %v729, %v734
    %v739 = vmul.f32 %v731, %v734
    %v740 = vmul.f32 %v733, %v734
    %v741 = vsub.f32 %v708, %v735
    %v742 = vsub.f32 %v709, %v736
    %v743 = vsub.f32 %v710, %v737
    %v744 = vsub.f32 %v711, %v738
    %v745 = vsub.f32 %v712, %v739
    %v746 = vsub.f32 %v713, %v740
    %v747 = vmul.f32 %v741, %v741
    %v748 = vmul.f32 %v742, %v742
    %v749 = vmul.f32 %v743, %v743
    %v750 = vmul.f32 %v744, %v744
    %v751 = vmul.f32 %v745, %v745
    %v752 = vmul.f32 %v746, %v746
    %753 = vadd.xlane.f32.xlu0 %v747
    %v754 = vpop.xlane.xlu0 %753
    %755 = vadd.xlane.f32.xlu0 %v748
    %v756 = vpop.xlane.xlu0 %755
    %757 = vadd.xlane.f32.xlu0 %v749
    %v758 = vpop.xlane.xlu0 %757
    %759 = vadd.xlane.f32.xlu0 %v750
    %v760 = vpop.xlane.xlu0 %759
    %761 = vadd.xlane.f32.xlu0 %v751
    %v762 = vpop.xlane.xlu0 %761
    %763 = vadd.xlane.f32.xlu0 %v752
    %v764 = vpop.xlane.xlu0 %763
    %v765 = vmul.f32 %v754, %v734
    %v766 = vmul.f32 %v756, %v734
    %v767 = vmul.f32 %v758, %v734
    %v768 = vmul.f32 %v760, %v734
    %v769 = vmul.f32 %v762, %v734
    %v770 = vmul.f32 %v764, %v734
    %v771 = vadd.f32 %v765, 1e-06
    %v772 = vadd.f32 %v766, 1e-06
    %v773 = vadd.f32 %v767, 1e-06
    %v774 = vadd.f32 %v768, 1e-06
    %v775 = vadd.f32 %v769, 1e-06
    %v776 = vadd.f32 %v770, 1e-06
    %v777 = vrsqrt.pop %v771
    %v778 = vrsqrt.pop %v772
    %v779 = vrsqrt.pop %v773
    %v780 = vrsqrt.pop %v774
    %v781 = vrsqrt.pop %v775
    %v782 = vrsqrt.pop %v776
    %v783 = vmul.f32 %v741, %v777
    %v784 = vmul.f32 %v742, %v778
    %v785 = vmul.f32 %v743, %v779
    %v786 = vmul.f32 %v744, %v780
    %v787 = vmul.f32 %v745, %v781
    %v788 = vmul.f32 %v746, %v782
    %v790 = vlaneseq
    %v791 = vshrl.u32 %v790, 7
    %v792 = vsub.s32 0, %v791
    %v793 = vrot.slane %v720, %v792
    %v795 = vmul.f32 %v783, %v793
    %v796 = vmul.f32 %v784, %v793
    %v797 = vmul.f32 %v785, %v793
    %v798 = vmul.f32 %v786, %v793
    %v799 = vmul.f32 %v787, %v793
    %v800 = vmul.f32 %v788, %v793
    %v802 = vlaneseq
    %v803 = vshrl.u32 %v802, 7
    %v804 = vsub.s32 0, %v803
    %v805 = vrot.slane %v721, %v804
    %v807 = vadd.f32 %v795, %v805
    %v808 = vadd.f32 %v796, %v805
    %v809 = vadd.f32 %v797, %v805
    %v810 = vadd.f32 %v798, %v805
    %v811 = vadd.f32 %v799, %v805
    %v812 = vadd.f32 %v800, %v805
    %v813 = vpack.c.bf16 %v808, %v807
    %v814 = vpack.c.bf16 %v810, %v809
    %v815 = vpack.c.bf16 %v812, %v811
    %v816 = vld [vmem:[%s8] sm:$0xff]
    %v817 = vld [vmem:[%s8 + $0x8] sm:$0xf]
    %v818 = vld [vmem:[%s8 + $0xc] sm:$0xff]
    %v819 = vld [vmem:[%s8 + $0x14] sm:$0xf]
    %v820 = vld [vmem:[%s8 + $0x18] sm:$0xff]
    %v821 = vld [vmem:[%s8 + $0x20] sm:$0xf]
    %v822 = vld [vmem:[%s8 + $0x24] sm:$0xff]
    %v823 = vld [vmem:[%s8 + $0x2c] sm:$0xf]
    %v824 = vld [vmem:[%s8 + $0x30] sm:$0xff]
    %v825 = vld [vmem:[%s8 + $0x38] sm:$0xf]
    %v826 = vld [vmem:[%s8 + $0x3c] sm:$0xff]
    %v827 = vld [vmem:[%s8 + $0x44] sm:$0xf]
    %v828 = vld [vmem:[%s8 + $0x48] sm:$0xff]
    %v829 = vld [vmem:[%s8 + $0x50] sm:$0xf]
    %v830 = vld [vmem:[%s8 + $0x54] sm:$0xff]
    %v831 = vld [vmem:[%s8 + $0x5c] sm:$0xf]
    %v832 = vld [vmem:[%s8 + $0x60] sm:$0xff]
    %v833 = vld [vmem:[%s8 + $0x68] sm:$0xf]
    %v834 = vld [vmem:[%s8 + $0x6c] sm:$0xff]
    %v835 = vld [vmem:[%s8 + $0x74] sm:$0xf]
    %v836 = vld [vmem:[%s8 + $0x78] sm:$0xff]
    %v837 = vld [vmem:[%s8 + $0x80] sm:$0xf]
    %v838 = vld [vmem:[%s8 + $0x84] sm:$0xff]
    %v839 = vld [vmem:[%s8 + $0x8c] sm:$0xf]
    %v840 = vld [vmem:[%s8 + $0x90] sm:$0xff]
    %v841 = vld [vmem:[%s8 + $0x98] sm:$0xf]
    %v842 = vld [vmem:[%s8 + $0x9c] sm:$0xff]
    %v843 = vld [vmem:[%s8 + $0xa4] sm:$0xf]
    %v844 = vld [vmem:[%s8 + $0xa8] sm:$0xff]
    %v845 = vld [vmem:[%s8 + $0xb0] sm:$0xf]
    %v846 = vld [vmem:[%s8 + $0xb4] sm:$0xff]
    %v847 = vld [vmem:[%s8 + $0xbc] sm:$0xf]
    %v848 = vld [vmem:[%s9] sm:$0x7]
    %v850 = vlaneseq
    %v851 = vshrl.u32 %v850, 7
    %v852 = vsub.s32 0, %v851
    %v853 = vrot.slane %v848, %v852
    %v854 = vlaneseq
    %v855 = vshrl.u32 %v854, 7
    %v856 = vsub.s32 1, %v855
    %v857 = vrot.slane %v848, %v856
    %v858 = vlaneseq
    %v859 = vshrl.u32 %v858, 7
    %v860 = vsub.s32 2, %v859
    %v861 = vrot.slane %v848, %v860
    %v897 = vunpack.c.l.b16 %v816
    %v898 = vunpack.c.h.b16 %v816
    %v899 = vunpack.c.l.b16 %v817
    %v900 = vunpack.c.l.b16 %v818
    %v901 = vunpack.c.h.b16 %v818
    %v902 = vunpack.c.l.b16 %v819
    %v903 = vunpack.c.l.b16 %v820
    %v904 = vunpack.c.h.b16 %v820
    %v905 = vunpack.c.l.b16 %v821
    %v906 = vunpack.c.l.b16 %v822
    %v907 = vunpack.c.h.b16 %v822
    %v908 = vunpack.c.l.b16 %v823
    %v909 = vunpack.c.l.b16 %v824
    %v910 = vunpack.c.h.b16 %v824
    %v911 = vunpack.c.l.b16 %v825
    %v912 = vunpack.c.l.b16 %v826
    %v913 = vunpack.c.h.b16 %v826
    %v914 = vunpack.c.l.b16 %v827
    %v915 = vunpack.c.l.b16 %v828
    %v916 = vunpack.c.h.b16 %v828
    %v917 = vunpack.c.l.b16 %v829
    %v918 = vunpack.c.l.b16 %v830
    %v919 = vunpack.c.h.b16 %v830
    %v920 = vunpack.c.l.b16 %v831
    %v921 = vunpack.c.l.b16 %v832
    %v922 = vunpack.c.h.b16 %v832
    %v923 = vunpack.c.l.b16 %v833
    %v924 = vunpack.c.l.b16 %v834
    %v925 = vunpack.c.h.b16 %v834
    %v926 = vunpack.c.l.b16 %v835
    %v927 = vunpack.c.l.b16 %v836
    %v928 = vunpack.c.h.b16 %v836
    %v929 = vunpack.c.l.b16 %v837
    %v930 = vunpack.c.l.b16 %v838
    %v931 = vunpack.c.h.b16 %v838
    %v932 = vunpack.c.l.b16 %v839
    %v933 = vunpack.c.l.b16 %v840
    %v934 = vunpack.c.h.b16 %v840
    %v935 = vunpack.c.l.b16 %v841
    %v936 = vunpack.c.l.b16 %v842
    %v937 = vunpack.c.h.b16 %v842
    %v938 = vunpack.c.l.b16 %v843
    %v939 = vunpack.c.l.b16 %v844
    %v940 = vunpack.c.h.b16 %v844
    %v941 = vunpack.c.l.b16 %v845
    %v942 = vunpack.c.l.b16 %v846
    %v943 = vunpack.c.h.b16 %v846
    %v944 = vunpack.c.l.b16 %v847
    %v945 = vpack.c.b16 %v900, %v897
    %v946 = vpack.c.b16 %v901, %v898
    %v947 = vpack.c.b16 %v902, %v899
    %v948 = vpack.c.b16 %v906, %v903
    %v949 = vpack.c.b16 %v907, %v904
    %v950 = vpack.c.b16 %v908, %v905
    %v951 = vpack.c.b16 %v912, %v909
    %v952 = vpack.c.b16 %v913, %v910
    %v953 = vpack.c.b16 %v914, %v911
    %v954 = vpack.c.b16 %v918, %v915
    %v955 = vpack.c.b16 %v919, %v916
    %v956 = vpack.c.b16 %v920, %v917
    %v957 = vpack.c.b16 %v924, %v921
    %v958 = vpack.c.b16 %v925, %v922
    %v959 = vpack.c.b16 %v926, %v923
    %v960 = vpack.c.b16 %v930, %v927
    %v961 = vpack.c.b16 %v931, %v928
    %v962 = vpack.c.b16 %v932, %v929
    %v963 = vpack.c.b16 %v936, %v933
    %v964 = vpack.c.b16 %v937, %v934
    %v965 = vpack.c.b16 %v938, %v935
    %v966 = vpack.c.b16 %v942, %v939
    %v967 = vpack.c.b16 %v943, %v940
    %v968 = vpack.c.b16 %v944, %v941
    %993 = vmatprep.subr.bf16.mxu0 %v967
    %994 = vmatpush1.bf16.msra.mxu0 %v966
    %995 = vmatprep.subr.bf16.mxu0 %v964
    %996 = vmatpush1.bf16.msra.mxu0 %v963
    %997 = vmatprep.subr.bf16.mxu0 %v961
    %998 = vmatpush1.bf16.msra.mxu0 %v960
    %999 = vmatprep.subr.bf16.mxu0 %v958
    %1000 = vmatpush1.bf16.msra.mxu0 %v957
    %1001 = vmatprep.subr.bf16.mxu0 %v955
    %1002 = vmatpush1.bf16.msra.mxu0 %v954
    %1003 = vmatprep.subr.bf16.mxu0 %v952
    %1004 = vmatpush1.bf16.msra.mxu0 %v951
    %1005 = vmatprep.subr.bf16.mxu0 %v949
    %1006 = vmatpush1.bf16.msra.mxu0 %v948
    %1007 = vmatprep.subr.bf16.mxu0 %v946
    %1008 = vmatpush1.bf16.msra.mxu0 %v945
    %1009 = vmatprep.subr.bf16.mxu0 0
    %1010 = vmatpush2.bf16.msra.mxu0 0
    %1011 = vmatprep.subr.bf16.mxu0 0
    %1012 = vmatpush2.bf16.msra.mxu0 0
    %1013 = vmatprep.subr.bf16.mxu0 0
    %1014 = vmatpush2.bf16.msra.mxu0 0
    %1015 = vmatprep.subr.bf16.mxu0 0
    %1016 = vmatpush2.bf16.msra.mxu0 0
    %1017 = vmatprep.subr.bf16.mxu0 0
    %1018 = vmatpush2.bf16.msra.mxu0 0
    %1019 = vmatprep.subr.bf16.mxu0 0
    %1020 = vmatpush2.bf16.msra.mxu0 0
    %1021 = vmatprep.subr.bf16.mxu0 0
    %1022 = vmatpush2.bf16.msra.mxu0 0
    %1023 = vmatprep.subr.bf16.mxu0 0
    %1024 = vmatpush2.bf16.msra.mxu0 0
    %1025 = vmatprep.mubr.bf16.mxu0 0
    %1026 = vmatmul.mubr.bf16.gmra.mxu0 %v813
    %v1027 = vpop.f32.mrf.mxu0
    %v1028 = vadd.f32 %v853, %v1027
    %v1029 = vpop.f32.mrf.mxu0
    %v1030 = vadd.f32 %v857, %v1029
    %v1031 = vpop.f32.mrf.mxu0
    %v1032 = vadd.f32 %v853, %v1031
    %v1033 = vpop.f32.mrf.mxu0
    %v1034 = vadd.f32 %v857, %v1033
    %1035 = vmatprep.mubr.bf16.mxu0 0
    %1036 = vmatmul.mubr.bf16.gmra.mxu0 %v814
    %v1037 = vpop.f32.mrf.mxu0
    %v1038 = vadd.f32 %v853, %v1037
    %v1039 = vpop.f32.mrf.mxu0
    %v1040 = vadd.f32 %v857, %v1039
    %v1041 = vpop.f32.mrf.mxu0
    %v1042 = vadd.f32 %v853, %v1041
    %v1043 = vpop.f32.mrf.mxu0
    %v1044 = vadd.f32 %v857, %v1043
    %1045 = vmatprep.mubr.bf16.mxu0 0
    %1046 = vmatmul.mubr.bf16.gmra.mxu0 %v815
    %v1047 = vpop.f32.mrf.mxu0
    %v1048 = vadd.f32 %v853, %v1047
    %v1049 = vpop.f32.mrf.mxu0
    %v1050 = vadd.f32 %v857, %v1049
    %v1051 = vpop.f32.mrf.mxu0
    %v1052 = vadd.f32 %v853, %v1051
    %v1053 = vpop.f32.mrf.mxu0
    %v1054 = vadd.f32 %v857, %v1053
    %1055 = vdwg.mxu0
    %1056 = vmatprep.subr.bf16.mxu0 0
    %1057 = vmatpush1.bf16.msra.mxu0 %v968
    %1058 = vmatprep.subr.bf16.mxu0 0
    %1059 = vmatpush1.bf16.msra.mxu0 %v965
    %1060 = vmatprep.subr.bf16.mxu0 0
    %1061 = vmatpush1.bf16.msra.mxu0 %v962
    %1062 = vmatprep.subr.bf16.mxu0 0
    %1063 = vmatpush1.bf16.msra.mxu0 %v959
    %1064 = vmatprep.subr.bf16.mxu0 0
    %1065 = vmatpush1.bf16.msra.mxu0 %v956
    %1066 = vmatprep.subr.bf16.mxu0 0
    %1067 = vmatpush1.bf16.msra.mxu0 %v953
    %1068 = vmatprep.subr.bf16.mxu0 0
    %1069 = vmatpush1.bf16.msra.mxu0 %v950
    %1070 = vmatprep.subr.bf16.mxu0 0
    %1071 = vmatpush1.bf16.msra.mxu0 %v947
    %1072 = vmatprep.subr.bf16.mxu0 0
    %1073 = vmatpush2.bf16.msra.mxu0 0
    %1074 = vmatprep.subr.bf16.mxu0 0
    %1075 = vmatpush2.bf16.msra.mxu0 0
    %1076 = vmatprep.subr.bf16.mxu0 0
    %1077 = vmatpush2.bf16.msra.mxu0 0
    %1078 = vmatprep.subr.bf16.mxu0 0
    %1079 = vmatpush2.bf16.msra.mxu0 0
    %1080 = vmatprep.subr.bf16.mxu0 0
    %1081 = vmatpush2.bf16.msra.mxu0 0
    %1082 = vmatprep.subr.bf16.mxu0 0
    %1083 = vmatpush2.bf16.msra.mxu0 0
    %1084 = vmatprep.subr.bf16.mxu0 0
    %1085 = vmatpush2.bf16.msra.mxu0 0
    %1086 = vmatprep.subr.bf16.mxu0 0
    %1087 = vmatpush2.bf16.msra.mxu0 0
    %1088 = vmatprep.mubr.bf16.mxu0 0
    %1089 = vmatmul.mubr.bf16.gmra.mxu0 %v813
    %v1090 = vpop.f32.mrf.mxu0
    %v1091 = vadd.f32 %v861, %v1090
    %v1092 = vpop.f32.mrf.mxu0
    %v1093 = vpop.f32.mrf.mxu0
    %v1094 = vadd.f32 %v861, %v1093
    %v1095 = vpop.f32.mrf.mxu0
    %1096 = vmatprep.mubr.bf16.mxu0 0
    %1097 = vmatmul.mubr.bf16.gmra.mxu0 %v814
    %v1098 = vpop.f32.mrf.mxu0
    %v1099 = vadd.f32 %v861, %v1098
    %v1100 = vpop.f32.mrf.mxu0
    %v1101 = vpop.f32.mrf.mxu0
    %v1102 = vadd.f32 %v861, %v1101
    %v1103 = vpop.f32.mrf.mxu0
    %1104 = vmatprep.mubr.bf16.mxu0 0
    %1105 = vmatmul.mubr.bf16.gmra.mxu0 %v815
    %v1106 = vpop.f32.mrf.mxu0
    %v1107 = vadd.f32 %v861, %v1106
    %v1108 = vpop.f32.mrf.mxu0
    %v1109 = vpop.f32.mrf.mxu0
    %v1110 = vadd.f32 %v861, %v1109
    %v1111 = vpop.f32.mrf.mxu0
    %1112 = vdwg.mxu0
    %v1113 = vmul.f32 %v1028, 0.17677669
    %v1114 = vmul.f32 %v1032, 0.17677669
    %v1115 = vmul.f32 %v1038, 0.17677669
    %v1116 = vmul.f32 %v1042, 0.17677669
    %v1117 = vmul.f32 %v1048, 0.17677669
    %v1118 = vmul.f32 %v1052, 0.17677669
    %v1119 = vpack.c.bf16 %v1114, %v1113
    %v1120 = vpack.c.bf16 %v1116, %v1115
    %v1121 = vpack.c.bf16 %v1118, %v1117
    %v1122 = vpack.c.bf16 %v1034, %v1030
    %v1123 = vpack.c.bf16 %v1044, %v1040
    %v1124 = vpack.c.bf16 %v1054, %v1050
    %v1125 = vpack.c.bf16 %v1094, %v1091
    %v1126 = vpack.c.bf16 %v1102, %v1099
    %v1127 = vpack.c.bf16 %v1110, %v1107
    %vm1128 = vcmask 261120
    %v1130 = vsel %vm1128, %v1119, 0
    %v1133 = vsel %vm1128, %v1120, 0
    %v1136 = vsel %vm1128, %v1121, 0
    %v1139 = vsel %vm1128, %v1122, 0
    %v1142 = vsel %vm1128, %v1123, 0
    %v1145 = vsel %vm1128, %v1124, 0
    %1147 = vmatprep.subr.bf16.mxu0 0
    %1148 = vmatpush1.bf16.xpose.msra.mxu0 0
    %1149 = vmatprep.subr.bf16.mxu0 0
    %1150 = vmatpush1.bf16.xpose.msra.mxu0 0
    %1151 = vmatprep.subr.bf16.mxu0 0
    %1152 = vmatpush1.bf16.xpose.msra.mxu0 0
    %1153 = vmatprep.subr.bf16.mxu0 0
    %1154 = vmatpush1.bf16.xpose.msra.mxu0 0
    %1155 = vmatprep.subr.bf16.mxu0 0
    %1156 = vmatpush1.bf16.xpose.msra.mxu0 0
    %1157 = vmatprep.subr.bf16.mxu0 0
    %1158 = vmatpush1.bf16.xpose.msra.mxu0 %v1145
    %1159 = vmatprep.subr.bf16.mxu0 0
    %1160 = vmatpush1.bf16.xpose.msra.mxu0 %v1142
    %1161 = vmatprep.subr.bf16.mxu0 0
    %1162 = vmatpush1.bf16.xpose.msra.mxu0 %v1139
    %1163 = vmatprep.subr.bf16.mxu0 0
    %1164 = vmatpush2.bf16.xpose.msra.mxu0 0
    %1165 = vmatprep.subr.bf16.mxu0 0
    %1166 = vmatpush2.bf16.xpose.msra.mxu0 0
    %1167 = vmatprep.subr.bf16.mxu0 0
    %1168 = vmatpush2.bf16.xpose.msra.mxu0 0
    %1169 = vmatprep.subr.bf16.mxu0 0
    %1170 = vmatpush2.bf16.xpose.msra.mxu0 0
    %1171 = vmatprep.subr.bf16.mxu0 0
    %1172 = vmatpush2.bf16.xpose.msra.mxu0 0
    %1173 = vmatprep.subr.bf16.mxu0 0
    %1174 = vmatpush2.bf16.xpose.msra.mxu0 0
    %1175 = vmatprep.subr.bf16.mxu0 0
    %1176 = vmatpush2.bf16.xpose.msra.mxu0 0
    %1177 = vmatprep.subr.bf16.mxu0 0
    %1178 = vmatpush2.bf16.xpose.msra.mxu0 0
    %1179 = vmatprep.mubr.bf16.mxu0 0
    %1180 = vmatmul.mubr.bf16.gmra.mxu0 %v1130
    %v1181 = vpop.f32.mrf.mxu0
    %v1182 = vadd.f32 %v714, %v1181
    %v1183 = vpop.f32.mrf.mxu0
    %v1184 = vpop.f32.mrf.mxu0
    %v1185 = vadd.f32 %v715, %v1184
    %v1186 = vpop.f32.mrf.mxu0
    %1187 = vmatprep.mubr.bf16.mxu0 0
    %1188 = vmatmul.mubr.bf16.gmra.mxu0 %v1133
    %v1189 = vpop.f32.mrf.mxu0
    %v1190 = vadd.f32 %v716, %v1189
    %v1191 = vpop.f32.mrf.mxu0
    %v1192 = vpop.f32.mrf.mxu0
    %v1193 = vadd.f32 %v717, %v1192
    %v1194 = vpop.f32.mrf.mxu0
    %1195 = vmatprep.mubr.bf16.mxu0 0
    %1196 = vmatmul.mubr.bf16.gmra.mxu0 %v1136
    %v1197 = vpop.f32.mrf.mxu0
    %v1198 = vadd.f32 %v718, %v1197
    %v1199 = vpop.f32.mrf.mxu0
    %v1200 = vpop.f32.mrf.mxu0
    %v1201 = vadd.f32 %v719, %v1200
    %v1202 = vpop.f32.mrf.mxu0
    %1203 = vdwg.mxu0
    %vm1204 = vcmask 392192
    %v1205 = vsel %vm1204, %v1182, -inf
    %1206 = vmax.xlane.f32.xlu0 %v1205
    %v1207 = vpop.xlane.xlu0 %1206
    %v1208 = vsel %vm1204, %v1185, -inf
    %1209 = vmax.xlane.f32.xlu0 %v1208
    %v1210 = vpop.xlane.xlu0 %1209
    %v1211 = vsel %vm1204, %v1190, -inf
    %1212 = vmax.xlane.f32.xlu0 %v1211
    %v1213 = vpop.xlane.xlu0 %1212
    %v1214 = vsel %vm1204, %v1193, -inf
    %1215 = vmax.xlane.f32.xlu0 %v1214
    %v1216 = vpop.xlane.xlu0 %1215
    %v1217 = vsel %vm1204, %v1198, -inf
    %1218 = vmax.xlane.f32.xlu0 %v1217
    %v1219 = vpop.xlane.xlu0 %1218
    %v1220 = vsel %vm1204, %v1201, -inf
    %1221 = vmax.xlane.f32.xlu0 %v1220
    %v1222 = vpop.xlane.xlu0 %1221
    %v1223 = vsub.f32 %v1182, %v1207
    %v1224 = vsub.f32 %v1185, %v1210
    %v1225 = vsub.f32 %v1190, %v1213
    %v1226 = vsub.f32 %v1193, %v1216
    %v1227 = vsub.f32 %v1198, %v1219
    %v1228 = vsub.f32 %v1201, %v1222
    %v1229 = vmul.f32 %v1223, 1.442695
    %v1230 = vpow.pop %v1229
    %v1231 = vmul.f32 %v1224, 1.442695
    %v1232 = vpow.pop %v1231
    %v1233 = vmul.f32 %v1225, 1.442695
    %v1234 = vpow.pop %v1233
    %v1235 = vmul.f32 %v1226, 1.442695
    %v1236 = vpow.pop %v1235
    %v1237 = vmul.f32 %v1227, 1.442695
    %v1238 = vpow.pop %v1237
    %v1239 = vmul.f32 %v1228, 1.442695
    %v1240 = vpow.pop %v1239
    %v1241 = vsel %vm1204, %v1230, 0.0
    %1242 = vadd.xlane.f32.xlu0 %v1241
    %v1243 = vpop.xlane.xlu0 %1242
    %v1244 = vsel %vm1204, %v1232, 0.0
    %1245 = vadd.xlane.f32.xlu0 %v1244
    %v1246 = vpop.xlane.xlu0 %1245
    %v1247 = vsel %vm1204, %v1234, 0.0
    %1248 = vadd.xlane.f32.xlu0 %v1247
    %v1249 = vpop.xlane.xlu0 %1248
    %v1250 = vsel %vm1204, %v1236, 0.0
    %1251 = vadd.xlane.f32.xlu0 %v1250
    %v1252 = vpop.xlane.xlu0 %1251
    %v1253 = vsel %vm1204, %v1238, 0.0
    %1254 = vadd.xlane.f32.xlu0 %v1253
    %v1255 = vpop.xlane.xlu0 %1254
    %v1256 = vsel %vm1204, %v1240, 0.0
    %1257 = vadd.xlane.f32.xlu0 %v1256
    %v1258 = vpop.xlane.xlu0 %1257
    %v1259 = vrcp.pop %v1243
    %v1260 = vrcp.pop %v1246
    %v1261 = vrcp.pop %v1249
    %v1262 = vrcp.pop %v1252
    %v1263 = vrcp.pop %v1255
    %v1264 = vrcp.pop %v1258
    %v1265 = vmul.f32 %v1230, %v1259
    %v1266 = vmul.f32 %v1232, %v1260
    %v1267 = vmul.f32 %v1234, %v1261
    %v1268 = vmul.f32 %v1236, %v1262
    %v1269 = vmul.f32 %v1238, %v1263
    %v1270 = vmul.f32 %v1240, %v1264
    %v1271 = vpack.c.bf16 %v1266, %v1265
    %v1272 = vpack.c.bf16 %v1268, %v1267
    %v1273 = vpack.c.bf16 %v1270, %v1269
    %v1275 = vsel %vm1204, %v1271, 0
    %v1278 = vsel %vm1204, %v1272, 0
    %v1281 = vsel %vm1204, %v1273, 0
    %1283 = vmatprep.subr.bf16.mxu0 0
    %1284 = vmatpush1.bf16.msra.mxu0 0
    %1285 = vmatprep.subr.bf16.mxu0 0
    %1286 = vmatpush1.bf16.msra.mxu0 0
    %1287 = vmatprep.subr.bf16.mxu0 0
    %1288 = vmatpush1.bf16.msra.mxu0 0
    %1289 = vmatprep.subr.bf16.mxu0 0
    %1290 = vmatpush1.bf16.msra.mxu0 0
    %1291 = vmatprep.subr.bf16.mxu0 0
    %1292 = vmatpush1.bf16.msra.mxu0 0
    %1293 = vmatprep.subr.bf16.mxu0 0
    %1294 = vmatpush1.bf16.msra.mxu0 %v1127
    %1295 = vmatprep.subr.bf16.mxu0 0
    %1296 = vmatpush1.bf16.msra.mxu0 %v1126
    %1297 = vmatprep.subr.bf16.mxu0 0
    %1298 = vmatpush1.bf16.msra.mxu0 %v1125
    %1299 = vmatprep.subr.bf16.mxu0 0
    %1300 = vmatpush2.bf16.msra.mxu0 0
    %1301 = vmatprep.subr.bf16.mxu0 0
    %1302 = vmatpush2.bf16.msra.mxu0 0
    %1303 = vmatprep.subr.bf16.mxu0 0
    %1304 = vmatpush2.bf16.msra.mxu0 0
    %1305 = vmatprep.subr.bf16.mxu0 0
    %1306 = vmatpush2.bf16.msra.mxu0 0
    %1307 = vmatprep.subr.bf16.mxu0 0
    %1308 = vmatpush2.bf16.msra.mxu0 0
    %1309 = vmatprep.subr.bf16.mxu0 0
    %1310 = vmatpush2.bf16.msra.mxu0 0
    %1311 = vmatprep.subr.bf16.mxu0 0
    %1312 = vmatpush2.bf16.msra.mxu0 0
    %1313 = vmatprep.subr.bf16.mxu0 0
    %1314 = vmatpush2.bf16.msra.mxu0 0
    %1315 = vmatprep.mubr.bf16.mxu0 0
    %1316 = vmatmul.mubr.bf16.gmra.mxu0 %v1275
    %v1317 = vpop.f32.mrf.mxu0
    %v1318 = vadd.f32 0.0, %v1317
    %v1319 = vpop.f32.mrf.mxu0
    %v1320 = vpop.f32.mrf.mxu0
    %v1321 = vadd.f32 0.0, %v1320
    %v1322 = vpop.f32.mrf.mxu0
    %1323 = vmatprep.mubr.bf16.mxu0 0
    %1324 = vmatmul.mubr.bf16.gmra.mxu0 %v1278
    %v1325 = vpop.f32.mrf.mxu0
    %v1326 = vadd.f32 0.0, %v1325
    %v1327 = vpop.f32.mrf.mxu0
    %v1328 = vpop.f32.mrf.mxu0
    %v1329 = vadd.f32 0.0, %v1328
    %v1330 = vpop.f32.mrf.mxu0
    %1331 = vmatprep.mubr.bf16.mxu0 0
    %1332 = vmatmul.mubr.bf16.gmra.mxu0 %v1281
    %v1333 = vpop.f32.mrf.mxu0
    %v1334 = vadd.f32 0.0, %v1333
    %v1335 = vpop.f32.mrf.mxu0
    %v1336 = vpop.f32.mrf.mxu0
    %v1337 = vadd.f32 0.0, %v1336
    %v1338 = vpop.f32.mrf.mxu0
    %1339 = vdwg.mxu0
    %1343 = vrot.lane.b32.xlu0 %v1119, 96
    %v1344 = vpop.permute.xlu0 %1343
    %1345 = vrot.lane.b32.xlu0 %v1120, 96
    %v1346 = vpop.permute.xlu0 %1345
    %1347 = vrot.lane.b32.xlu0 %v1121, 96
    %v1348 = vpop.permute.xlu0 %1347
    %1352 = vrot.lane.b32.xlu0 %v1122, 96
    %v1353 = vpop.permute.xlu0 %1352
    %1354 = vrot.lane.b32.xlu0 %v1123, 96
    %v1355 = vpop.permute.xlu0 %1354
    %1356 = vrot.lane.b32.xlu0 %v1124, 96
    %v1357 = vpop.permute.xlu0 %1356
    %v1359 = vsel %vm1128, %v1344, 0
    %v1362 = vsel %vm1128, %v1346, 0
    %v1365 = vsel %vm1128, %v1348, 0
    %v1368 = vsel %vm1128, %v1353, 0
    %v1371 = vsel %vm1128, %v1355, 0
    %v1374 = vsel %vm1128, %v1357, 0
    %1376 = vmatprep.subr.bf16.mxu0 0
    %1377 = vmatpush1.bf16.xpose.msra.mxu0 0
    %1378 = vmatprep.subr.bf16.mxu0 0
    %1379 = vmatpush1.bf16.xpose.msra.mxu0 0
    %1380 = vmatprep.subr.bf16.mxu0 0
    %1381 = vmatpush1.bf16.xpose.msra.mxu0 0
    %1382 = vmatprep.subr.bf16.mxu0 0
    %1383 = vmatpush1.bf16.xpose.msra.mxu0 0
    %1384 = vmatprep.subr.bf16.mxu0 0
    %1385 = vmatpush1.bf16.xpose.msra.mxu0 0
    %1386 = vmatprep.subr.bf16.mxu0 0
    %1387 = vmatpush1.bf16.xpose.msra.mxu0 %v1374
    %1388 = vmatprep.subr.bf16.mxu0 0
    %1389 = vmatpush1.bf16.xpose.msra.mxu0 %v1371
    %1390 = vmatprep.subr.bf16.mxu0 0
    %1391 = vmatpush1.bf16.xpose.msra.mxu0 %v1368
    %1392 = vmatprep.subr.bf16.mxu0 0
    %1393 = vmatpush2.bf16.xpose.msra.mxu0 0
    %1394 = vmatprep.subr.bf16.mxu0 0
    %1395 = vmatpush2.bf16.xpose.msra.mxu0 0
    %1396 = vmatprep.subr.bf16.mxu0 0
    %1397 = vmatpush2.bf16.xpose.msra.mxu0 0
    %1398 = vmatprep.subr.bf16.mxu0 0
    %1399 = vmatpush2.bf16.xpose.msra.mxu0 0
    %1400 = vmatprep.subr.bf16.mxu0 0
    %1401 = vmatpush2.bf16.xpose.msra.mxu0 0
    %1402 = vmatprep.subr.bf16.mxu0 0
    %1403 = vmatpush2.bf16.xpose.msra.mxu0 0
    %1404 = vmatprep.subr.bf16.mxu0 0
    %1405 = vmatpush2.bf16.xpose.msra.mxu0 0
    %1406 = vmatprep.subr.bf16.mxu0 0
    %1407 = vmatpush2.bf16.xpose.msra.mxu0 0
    %1408 = vmatprep.mubr.bf16.mxu0 0
    %1409 = vmatmul.mubr.bf16.gmra.mxu0 %v1359
    %v1410 = vpop.f32.mrf.mxu0
    %v1411 = vadd.f32 %v714, %v1410
    %v1412 = vpop.f32.mrf.mxu0
    %v1413 = vpop.f32.mrf.mxu0
    %v1414 = vadd.f32 %v715, %v1413
    %v1415 = vpop.f32.mrf.mxu0
    %1416 = vmatprep.mubr.bf16.mxu0 0
    %1417 = vmatmul.mubr.bf16.gmra.mxu0 %v1362
    %v1418 = vpop.f32.mrf.mxu0
    %v1419 = vadd.f32 %v716, %v1418
    %v1420 = vpop.f32.mrf.mxu0
    %v1421 = vpop.f32.mrf.mxu0
    %v1422 = vadd.f32 %v717, %v1421
    %v1423 = vpop.f32.mrf.mxu0
    %1424 = vmatprep.mubr.bf16.mxu0 0
    %1425 = vmatmul.mubr.bf16.gmra.mxu0 %v1365
    %v1426 = vpop.f32.mrf.mxu0
    %v1427 = vadd.f32 %v718, %v1426
    %v1428 = vpop.f32.mrf.mxu0
    %v1429 = vpop.f32.mrf.mxu0
    %v1430 = vadd.f32 %v719, %v1429
    %v1431 = vpop.f32.mrf.mxu0
    %1432 = vdwg.mxu0
    %v1433 = vsel %vm1204, %v1411, -inf
    %1434 = vmax.xlane.f32.xlu0 %v1433
    %v1435 = vpop.xlane.xlu0 %1434
    %v1436 = vsel %vm1204, %v1414, -inf
    %1437 = vmax.xlane.f32.xlu0 %v1436
    %v1438 = vpop.xlane.xlu0 %1437
    %v1439 = vsel %vm1204, %v1419, -inf
    %1440 = vmax.xlane.f32.xlu0 %v1439
    %v1441 = vpop.xlane.xlu0 %1440
    %v1442 = vsel %vm1204, %v1422, -inf
    %1443 = vmax.xlane.f32.xlu0 %v1442
    %v1444 = vpop.xlane.xlu0 %1443
    %v1445 = vsel %vm1204, %v1427, -inf
    %1446 = vmax.xlane.f32.xlu0 %v1445
    %v1447 = vpop.xlane.xlu0 %1446
    %v1448 = vsel %vm1204, %v1430, -inf
    %1449 = vmax.xlane.f32.xlu0 %v1448
    %v1450 = vpop.xlane.xlu0 %1449
    %v1451 = vsub.f32 %v1411, %v1435
    %v1452 = vsub.f32 %v1414, %v1438
    %v1453 = vsub.f32 %v1419, %v1441
    %v1454 = vsub.f32 %v1422, %v1444
    %v1455 = vsub.f32 %v1427, %v1447
    %v1456 = vsub.f32 %v1430, %v1450
    %v1457 = vmul.f32 %v1451, 1.442695
    %v1458 = vpow.pop %v1457
    %v1459 = vmul.f32 %v1452, 1.442695
    %v1460 = vpow.pop %v1459
    %v1461 = vmul.f32 %v1453, 1.442695
    %v1462 = vpow.pop %v1461
    %v1463 = vmul.f32 %v1454, 1.442695
    %v1464 = vpow.pop %v1463
    %v1465 = vmul.f32 %v1455, 1.442695
    %v1466 = vpow.pop %v1465
    %v1467 = vmul.f32 %v1456, 1.442695
    %v1468 = vpow.pop %v1467
    %v1469 = vsel %vm1204, %v1458, 0.0
    %1470 = vadd.xlane.f32.xlu0 %v1469
    %v1471 = vpop.xlane.xlu0 %1470
    %v1472 = vsel %vm1204, %v1460, 0.0
    %1473 = vadd.xlane.f32.xlu0 %v1472
    %v1474 = vpop.xlane.xlu0 %1473
    %v1475 = vsel %vm1204, %v1462, 0.0
    %1476 = vadd.xlane.f32.xlu0 %v1475
    %v1477 = vpop.xlane.xlu0 %1476
    %v1478 = vsel %vm1204, %v1464, 0.0
    %1479 = vadd.xlane.f32.xlu0 %v1478
    %v1480 = vpop.xlane.xlu0 %1479
    %v1481 = vsel %vm1204, %v1466, 0.0
    %1482 = vadd.xlane.f32.xlu0 %v1481
    %v1483 = vpop.xlane.xlu0 %1482
    %v1484 = vsel %vm1204, %v1468, 0.0
    %1485 = vadd.xlane.f32.xlu0 %v1484
    %v1486 = vpop.xlane.xlu0 %1485
    %v1487 = vrcp.pop %v1471
    %v1488 = vrcp.pop %v1474
    %v1489 = vrcp.pop %v1477
    %v1490 = vrcp.pop %v1480
    %v1491 = vrcp.pop %v1483
    %v1492 = vrcp.pop %v1486
    %v1493 = vmul.f32 %v1458, %v1487
    %v1494 = vmul.f32 %v1460, %v1488
    %v1495 = vmul.f32 %v1462, %v1489
    %v1496 = vmul.f32 %v1464, %v1490
    %v1497 = vmul.f32 %v1466, %v1491
    %v1498 = vmul.f32 %v1468, %v1492
    %v1499 = vpack.c.bf16 %v1494, %v1493
    %v1500 = vpack.c.bf16 %v1496, %v1495
    %v1501 = vpack.c.bf16 %v1498, %v1497
    %1505 = vrot.lane.b32.xlu0 %v1125, 96
    %v1506 = vpop.permute.xlu0 %1505
    %1507 = vrot.lane.b32.xlu0 %v1126, 96
    %v1508 = vpop.permute.xlu0 %1507
    %1509 = vrot.lane.b32.xlu0 %v1127, 96
    %v1510 = vpop.permute.xlu0 %1509
    %v1515 = vsel %vm1204, %v1499, 0
    %v1518 = vsel %vm1204, %v1500, 0
    %v1521 = vsel %vm1204, %v1501, 0
    %1523 = vmatprep.subr.bf16.mxu0 0
    %1524 = vmatpush1.bf16.msra.mxu0 0
    %1525 = vmatprep.subr.bf16.mxu0 0
    %1526 = vmatpush1.bf16.msra.mxu0 0
    %1527 = vmatprep.subr.bf16.mxu0 0
    %1528 = vmatpush1.bf16.msra.mxu0 0
    %1529 = vmatprep.subr.bf16.mxu0 0
    %1530 = vmatpush1.bf16.msra.mxu0 0
    %1531 = vmatprep.subr.bf16.mxu0 0
    %1532 = vmatpush1.bf16.msra.mxu0 0
    %1533 = vmatprep.subr.bf16.mxu0 0
    %1534 = vmatpush1.bf16.msra.mxu0 %v1510
    %1535 = vmatprep.subr.bf16.mxu0 0
    %1536 = vmatpush1.bf16.msra.mxu0 %v1508
    %1537 = vmatprep.subr.bf16.mxu0 0
    %1538 = vmatpush1.bf16.msra.mxu0 %v1506
    %1539 = vmatprep.subr.bf16.mxu0 0
    %1540 = vmatpush2.bf16.msra.mxu0 0
    %1541 = vmatprep.subr.bf16.mxu0 0
    %1542 = vmatpush2.bf16.msra.mxu0 0
    %1543 = vmatprep.subr.bf16.mxu0 0
    %1544 = vmatpush2.bf16.msra.mxu0 0
    %1545 = vmatprep.subr.bf16.mxu0 0
    %1546 = vmatpush2.bf16.msra.mxu0 0
    %1547 = vmatprep.subr.bf16.mxu0 0
    %1548 = vmatpush2.bf16.msra.mxu0 0
    %1549 = vmatprep.subr.bf16.mxu0 0
    %1550 = vmatpush2.bf16.msra.mxu0 0
    %1551 = vmatprep.subr.bf16.mxu0 0
    %1552 = vmatpush2.bf16.msra.mxu0 0
    %1553 = vmatprep.subr.bf16.mxu0 0
    %1554 = vmatpush2.bf16.msra.mxu0 0
    %1555 = vmatprep.mubr.bf16.mxu0 0
    %1556 = vmatmul.mubr.bf16.gmra.mxu0 %v1515
    %v1557 = vpop.f32.mrf.mxu0
    %v1558 = vadd.f32 0.0, %v1557
    %v1559 = vpop.f32.mrf.mxu0
    %v1560 = vpop.f32.mrf.mxu0
    %v1561 = vadd.f32 0.0, %v1560
    %v1562 = vpop.f32.mrf.mxu0
    %1563 = vmatprep.mubr.bf16.mxu0 0
    %1564 = vmatmul.mubr.bf16.gmra.mxu0 %v1518
    %v1565 = vpop.f32.mrf.mxu0
    %v1566 = vadd.f32 0.0, %v1565
    %v1567 = vpop.f32.mrf.mxu0
    %v1568 = vpop.f32.mrf.mxu0
    %v1569 = vadd.f32 0.0, %v1568
    %v1570 = vpop.f32.mrf.mxu0
    %1571 = vmatprep.mubr.bf16.mxu0 0
    %1572 = vmatmul.mubr.bf16.gmra.mxu0 %v1521
    %v1573 = vpop.f32.mrf.mxu0
    %v1574 = vadd.f32 0.0, %v1573
    %v1575 = vpop.f32.mrf.mxu0
    %v1576 = vpop.f32.mrf.mxu0
    %v1577 = vadd.f32 0.0, %v1576
    %v1578 = vpop.f32.mrf.mxu0
    %1579 = vdwg.mxu0
    %1580 = vrot.lane.b32.xlu0 %v1119, 64
    %v1581 = vpop.permute.xlu0 %1580
    %1582 = vrot.lane.b32.xlu0 %v1120, 64
    %v1583 = vpop.permute.xlu0 %1582
    %1584 = vrot.lane.b32.xlu0 %v1121, 64
    %v1585 = vpop.permute.xlu0 %1584
    %1586 = vrot.lane.b32.xlu0 %v1122, 64
    %v1587 = vpop.permute.xlu0 %1586
    %1588 = vrot.lane.b32.xlu0 %v1123, 64
    %v1589 = vpop.permute.xlu0 %1588
    %1590 = vrot.lane.b32.xlu0 %v1124, 64
    %v1591 = vpop.permute.xlu0 %1590
    %v1593 = vsel %vm1128, %v1581, 0
    %v1596 = vsel %vm1128, %v1583, 0
    %v1599 = vsel %vm1128, %v1585, 0
    %v1602 = vsel %vm1128, %v1587, 0
    %v1605 = vsel %vm1128, %v1589, 0
    %v1608 = vsel %vm1128, %v1591, 0
    %1610 = vmatprep.subr.bf16.mxu0 0
    %1611 = vmatpush1.bf16.xpose.msra.mxu0 0
    %1612 = vmatprep.subr.bf16.mxu0 0
    %1613 = vmatpush1.bf16.xpose.msra.mxu0 0
    %1614 = vmatprep.subr.bf16.mxu0 0
    %1615 = vmatpush1.bf16.xpose.msra.mxu0 0
    %1616 = vmatprep.subr.bf16.mxu0 0
    %1617 = vmatpush1.bf16.xpose.msra.mxu0 0
    %1618 = vmatprep.subr.bf16.mxu0 0
    %1619 = vmatpush1.bf16.xpose.msra.mxu0 0
    %1620 = vmatprep.subr.bf16.mxu0 0
    %1621 = vmatpush1.bf16.xpose.msra.mxu0 %v1608
    %1622 = vmatprep.subr.bf16.mxu0 0
    %1623 = vmatpush1.bf16.xpose.msra.mxu0 %v1605
    %1624 = vmatprep.subr.bf16.mxu0 0
    %1625 = vmatpush1.bf16.xpose.msra.mxu0 %v1602
    %1626 = vmatprep.subr.bf16.mxu0 0
    %1627 = vmatpush2.bf16.xpose.msra.mxu0 0
    %1628 = vmatprep.subr.bf16.mxu0 0
    %1629 = vmatpush2.bf16.xpose.msra.mxu0 0
    %1630 = vmatprep.subr.bf16.mxu0 0
    %1631 = vmatpush2.bf16.xpose.msra.mxu0 0
    %1632 = vmatprep.subr.bf16.mxu0 0
    %1633 = vmatpush2.bf16.xpose.msra.mxu0 0
    %1634 = vmatprep.subr.bf16.mxu0 0
    %1635 = vmatpush2.bf16.xpose.msra.mxu0 0
    %1636 = vmatprep.subr.bf16.mxu0 0
    %1637 = vmatpush2.bf16.xpose.msra.mxu0 0
    %1638 = vmatprep.subr.bf16.mxu0 0
    %1639 = vmatpush2.bf16.xpose.msra.mxu0 0
    %1640 = vmatprep.subr.bf16.mxu0 0
    %1641 = vmatpush2.bf16.xpose.msra.mxu0 0
    %1642 = vmatprep.mubr.bf16.mxu0 0
    %1643 = vmatmul.mubr.bf16.gmra.mxu0 %v1593
    %v1644 = vpop.f32.mrf.mxu0
    %v1645 = vadd.f32 %v714, %v1644
    %v1646 = vpop.f32.mrf.mxu0
    %v1647 = vpop.f32.mrf.mxu0
    %v1648 = vadd.f32 %v715, %v1647
    %v1649 = vpop.f32.mrf.mxu0
    %1650 = vmatprep.mubr.bf16.mxu0 0
    %1651 = vmatmul.mubr.bf16.gmra.mxu0 %v1596
    %v1652 = vpop.f32.mrf.mxu0
    %v1653 = vadd.f32 %v716, %v1652
    %v1654 = vpop.f32.mrf.mxu0
    %v1655 = vpop.f32.mrf.mxu0
    %v1656 = vadd.f32 %v717, %v1655
    %v1657 = vpop.f32.mrf.mxu0
    %1658 = vmatprep.mubr.bf16.mxu0 0
    %1659 = vmatmul.mubr.bf16.gmra.mxu0 %v1599
    %v1660 = vpop.f32.mrf.mxu0
    %v1661 = vadd.f32 %v718, %v1660
    %v1662 = vpop.f32.mrf.mxu0
    %v1663 = vpop.f32.mrf.mxu0
    %v1664 = vadd.f32 %v719, %v1663
    %v1665 = vpop.f32.mrf.mxu0
    %1666 = vdwg.mxu0
    %v1667 = vsel %vm1204, %v1645, -inf
    %1668 = vmax.xlane.f32.xlu0 %v1667
    %v1669 = vpop.xlane.xlu0 %1668
    %v1670 = vsel %vm1204, %v1648, -inf
    %1671 = vmax.xlane.f32.xlu0 %v1670
    %v1672 = vpop.xlane.xlu0 %1671
    %v1673 = vsel %vm1204, %v1653, -inf
    %1674 = vmax.xlane.f32.xlu0 %v1673
    %v1675 = vpop.xlane.xlu0 %1674
    %v1676 = vsel %vm1204, %v1656, -inf
    %1677 = vmax.xlane.f32.xlu0 %v1676
    %v1678 = vpop.xlane.xlu0 %1677
    %v1679 = vsel %vm1204, %v1661, -inf
    %1680 = vmax.xlane.f32.xlu0 %v1679
    %v1681 = vpop.xlane.xlu0 %1680
    %v1682 = vsel %vm1204, %v1664, -inf
    %1683 = vmax.xlane.f32.xlu0 %v1682
    %v1684 = vpop.xlane.xlu0 %1683
    %v1685 = vsub.f32 %v1645, %v1669
    %v1686 = vsub.f32 %v1648, %v1672
    %v1687 = vsub.f32 %v1653, %v1675
    %v1688 = vsub.f32 %v1656, %v1678
    %v1689 = vsub.f32 %v1661, %v1681
    %v1690 = vsub.f32 %v1664, %v1684
    %v1691 = vmul.f32 %v1685, 1.442695
    %v1692 = vpow.pop %v1691
    %v1693 = vmul.f32 %v1686, 1.442695
    %v1694 = vpow.pop %v1693
    %v1695 = vmul.f32 %v1687, 1.442695
    %v1696 = vpow.pop %v1695
    %v1697 = vmul.f32 %v1688, 1.442695
    %v1698 = vpow.pop %v1697
    %v1699 = vmul.f32 %v1689, 1.442695
    %v1700 = vpow.pop %v1699
    %v1701 = vmul.f32 %v1690, 1.442695
    %v1702 = vpow.pop %v1701
    %v1703 = vsel %vm1204, %v1692, 0.0
    %1704 = vadd.xlane.f32.xlu0 %v1703
    %v1705 = vpop.xlane.xlu0 %1704
    %v1706 = vsel %vm1204, %v1694, 0.0
    %1707 = vadd.xlane.f32.xlu0 %v1706
    %v1708 = vpop.xlane.xlu0 %1707
    %v1709 = vsel %vm1204, %v1696, 0.0
    %1710 = vadd.xlane.f32.xlu0 %v1709
    %v1711 = vpop.xlane.xlu0 %1710
    %v1712 = vsel %vm1204, %v1698, 0.0
    %1713 = vadd.xlane.f32.xlu0 %v1712
    %v1714 = vpop.xlane.xlu0 %1713
    %v1715 = vsel %vm1204, %v1700, 0.0
    %1716 = vadd.xlane.f32.xlu0 %v1715
    %v1717 = vpop.xlane.xlu0 %1716
    %v1718 = vsel %vm1204, %v1702, 0.0
    %1719 = vadd.xlane.f32.xlu0 %v1718
    %v1720 = vpop.xlane.xlu0 %1719
    %v1721 = vrcp.pop %v1705
    %v1722 = vrcp.pop %v1708
    %v1723 = vrcp.pop %v1711
    %v1724 = vrcp.pop %v1714
    %v1725 = vrcp.pop %v1717
    %v1726 = vrcp.pop %v1720
    %v1727 = vmul.f32 %v1692, %v1721
    %v1728 = vmul.f32 %v1694, %v1722
    %v1729 = vmul.f32 %v1696, %v1723
    %v1730 = vmul.f32 %v1698, %v1724
    %v1731 = vmul.f32 %v1700, %v1725
    %v1732 = vmul.f32 %v1702, %v1726
    %v1733 = vpack.c.bf16 %v1728, %v1727
    %v1734 = vpack.c.bf16 %v1730, %v1729
    %v1735 = vpack.c.bf16 %v1732, %v1731
    %1736 = vrot.lane.b32.xlu0 %v1125, 64
    %v1737 = vpop.permute.xlu0 %1736
    %1738 = vrot.lane.b32.xlu0 %v1126, 64
    %v1739 = vpop.permute.xlu0 %1738
    %1740 = vrot.lane.b32.xlu0 %v1127, 64
    %v1741 = vpop.permute.xlu0 %1740
    %v1746 = vsel %vm1204, %v1733, 0
    %v1749 = vsel %vm1204, %v1734, 0
    %v1752 = vsel %vm1204, %v1735, 0
    %1754 = vmatprep.subr.bf16.mxu0 0
    %1755 = vmatpush1.bf16.msra.mxu0 0
    %1756 = vmatprep.subr.bf16.mxu0 0
    %1757 = vmatpush1.bf16.msra.mxu0 0
    %1758 = vmatprep.subr.bf16.mxu0 0
    %1759 = vmatpush1.bf16.msra.mxu0 0
    %1760 = vmatprep.subr.bf16.mxu0 0
    %1761 = vmatpush1.bf16.msra.mxu0 0
    %1762 = vmatprep.subr.bf16.mxu0 0
    %1763 = vmatpush1.bf16.msra.mxu0 0
    %1764 = vmatprep.subr.bf16.mxu0 0
    %1765 = vmatpush1.bf16.msra.mxu0 %v1741
    %1766 = vmatprep.subr.bf16.mxu0 0
    %1767 = vmatpush1.bf16.msra.mxu0 %v1739
    %1768 = vmatprep.subr.bf16.mxu0 0
    %1769 = vmatpush1.bf16.msra.mxu0 %v1737
    %1770 = vmatprep.subr.bf16.mxu0 0
    %1771 = vmatpush2.bf16.msra.mxu0 0
    %1772 = vmatprep.subr.bf16.mxu0 0
    %1773 = vmatpush2.bf16.msra.mxu0 0
    %1774 = vmatprep.subr.bf16.mxu0 0
    %1775 = vmatpush2.bf16.msra.mxu0 0
    %1776 = vmatprep.subr.bf16.mxu0 0
    %1777 = vmatpush2.bf16.msra.mxu0 0
    %1778 = vmatprep.subr.bf16.mxu0 0
    %1779 = vmatpush2.bf16.msra.mxu0 0
    %1780 = vmatprep.subr.bf16.mxu0 0
    %1781 = vmatpush2.bf16.msra.mxu0 0
    %1782 = vmatprep.subr.bf16.mxu0 0
    %1783 = vmatpush2.bf16.msra.mxu0 0
    %1784 = vmatprep.subr.bf16.mxu0 0
    %1785 = vmatpush2.bf16.msra.mxu0 0
    %1786 = vmatprep.mubr.bf16.mxu0 0
    %1787 = vmatmul.mubr.bf16.gmra.mxu0 %v1746
    %v1788 = vpop.f32.mrf.mxu0
    %v1789 = vadd.f32 0.0, %v1788
    %v1790 = vpop.f32.mrf.mxu0
    %v1791 = vpop.f32.mrf.mxu0
    %v1792 = vadd.f32 0.0, %v1791
    %v1793 = vpop.f32.mrf.mxu0
    %1794 = vmatprep.mubr.bf16.mxu0 0
    %1795 = vmatmul.mubr.bf16.gmra.mxu0 %v1749
    %v1796 = vpop.f32.mrf.mxu0
    %v1797 = vadd.f32 0.0, %v1796
    %v1798 = vpop.f32.mrf.mxu0
    %v1799 = vpop.f32.mrf.mxu0
    %v1800 = vadd.f32 0.0, %v1799
    %v1801 = vpop.f32.mrf.mxu0
    %1802 = vmatprep.mubr.bf16.mxu0 0
    %1803 = vmatmul.mubr.bf16.gmra.mxu0 %v1752
    %v1804 = vpop.f32.mrf.mxu0
    %v1805 = vadd.f32 0.0, %v1804
    %v1806 = vpop.f32.mrf.mxu0
    %v1807 = vpop.f32.mrf.mxu0
    %v1808 = vadd.f32 0.0, %v1807
    %v1809 = vpop.f32.mrf.mxu0
    %1810 = vdwg.mxu0
    %1811 = vrot.lane.b32.xlu0 %v1119, 32
    %v1812 = vpop.permute.xlu0 %1811
    %1813 = vrot.lane.b32.xlu0 %v1120, 32
    %v1814 = vpop.permute.xlu0 %1813
    %1815 = vrot.lane.b32.xlu0 %v1121, 32
    %v1816 = vpop.permute.xlu0 %1815
    %1817 = vrot.lane.b32.xlu0 %v1122, 32
    %v1818 = vpop.permute.xlu0 %1817
    %1819 = vrot.lane.b32.xlu0 %v1123, 32
    %v1820 = vpop.permute.xlu0 %1819
    %1821 = vrot.lane.b32.xlu0 %v1124, 32
    %v1822 = vpop.permute.xlu0 %1821
    %v1824 = vsel %vm1128, %v1812, 0
    %v1827 = vsel %vm1128, %v1814, 0
    %v1830 = vsel %vm1128, %v1816, 0
    %v1833 = vsel %vm1128, %v1818, 0
    %v1836 = vsel %vm1128, %v1820, 0
    %v1839 = vsel %vm1128, %v1822, 0
    %1841 = vmatprep.subr.bf16.mxu0 0
    %1842 = vmatpush1.bf16.xpose.msra.mxu0 0
    %1843 = vmatprep.subr.bf16.mxu0 0
    %1844 = vmatpush1.bf16.xpose.msra.mxu0 0
    %1845 = vmatprep.subr.bf16.mxu0 0
    %1846 = vmatpush1.bf16.xpose.msra.mxu0 0
    %1847 = vmatprep.subr.bf16.mxu0 0
    %1848 = vmatpush1.bf16.xpose.msra.mxu0 0
    %1849 = vmatprep.subr.bf16.mxu0 0
    %1850 = vmatpush1.bf16.xpose.msra.mxu0 0
    %1851 = vmatprep.subr.bf16.mxu0 0
    %1852 = vmatpush1.bf16.xpose.msra.mxu0 %v1839
    %1853 = vmatprep.subr.bf16.mxu0 0
    %1854 = vmatpush1.bf16.xpose.msra.mxu0 %v1836
    %1855 = vmatprep.subr.bf16.mxu0 0
    %1856 = vmatpush1.bf16.xpose.msra.mxu0 %v1833
    %1857 = vmatprep.subr.bf16.mxu0 0
    %1858 = vmatpush2.bf16.xpose.msra.mxu0 0
    %1859 = vmatprep.subr.bf16.mxu0 0
    %1860 = vmatpush2.bf16.xpose.msra.mxu0 0
    %1861 = vmatprep.subr.bf16.mxu0 0
    %1862 = vmatpush2.bf16.xpose.msra.mxu0 0
    %1863 = vmatprep.subr.bf16.mxu0 0
    %1864 = vmatpush2.bf16.xpose.msra.mxu0 0
    %1865 = vmatprep.subr.bf16.mxu0 0
    %1866 = vmatpush2.bf16.xpose.msra.mxu0 0
    %1867 = vmatprep.subr.bf16.mxu0 0
    %1868 = vmatpush2.bf16.xpose.msra.mxu0 0
    %1869 = vmatprep.subr.bf16.mxu0 0
    %1870 = vmatpush2.bf16.xpose.msra.mxu0 0
    %1871 = vmatprep.subr.bf16.mxu0 0
    %1872 = vmatpush2.bf16.xpose.msra.mxu0 0
    %1873 = vmatprep.mubr.bf16.mxu0 0
    %1874 = vmatmul.mubr.bf16.gmra.mxu0 %v1824
    %v1875 = vpop.f32.mrf.mxu0
    %v1876 = vadd.f32 %v714, %v1875
    %v1877 = vpop.f32.mrf.mxu0
    %v1878 = vpop.f32.mrf.mxu0
    %v1879 = vadd.f32 %v715, %v1878
    %v1880 = vpop.f32.mrf.mxu0
    %1881 = vmatprep.mubr.bf16.mxu0 0
    %1882 = vmatmul.mubr.bf16.gmra.mxu0 %v1827
    %v1883 = vpop.f32.mrf.mxu0
    %v1884 = vadd.f32 %v716, %v1883
    %v1885 = vpop.f32.mrf.mxu0
    %v1886 = vpop.f32.mrf.mxu0
    %v1887 = vadd.f32 %v717, %v1886
    %v1888 = vpop.f32.mrf.mxu0
    %1889 = vmatprep.mubr.bf16.mxu0 0
    %1890 = vmatmul.mubr.bf16.gmra.mxu0 %v1830
    %v1891 = vpop.f32.mrf.mxu0
    %v1892 = vadd.f32 %v718, %v1891
    %v1893 = vpop.f32.mrf.mxu0
    %v1894 = vpop.f32.mrf.mxu0
    %v1895 = vadd.f32 %v719, %v1894
    %v1896 = vpop.f32.mrf.mxu0
    %1897 = vdwg.mxu0
    %v1898 = vsel %vm1204, %v1876, -inf
    %1899 = vmax.xlane.f32.xlu0 %v1898
    %v1900 = vpop.xlane.xlu0 %1899
    %v1901 = vsel %vm1204, %v1879, -inf
    %1902 = vmax.xlane.f32.xlu0 %v1901
    %v1903 = vpop.xlane.xlu0 %1902
    %v1904 = vsel %vm1204, %v1884, -inf
    %1905 = vmax.xlane.f32.xlu0 %v1904
    %v1906 = vpop.xlane.xlu0 %1905
    %v1907 = vsel %vm1204, %v1887, -inf
    %1908 = vmax.xlane.f32.xlu0 %v1907
    %v1909 = vpop.xlane.xlu0 %1908
    %v1910 = vsel %vm1204, %v1892, -inf
    %1911 = vmax.xlane.f32.xlu0 %v1910
    %v1912 = vpop.xlane.xlu0 %1911
    %v1913 = vsel %vm1204, %v1895, -inf
    %1914 = vmax.xlane.f32.xlu0 %v1913
    %v1915 = vpop.xlane.xlu0 %1914
    %v1916 = vsub.f32 %v1876, %v1900
    %v1917 = vsub.f32 %v1879, %v1903
    %v1918 = vsub.f32 %v1884, %v1906
    %v1919 = vsub.f32 %v1887, %v1909
    %v1920 = vsub.f32 %v1892, %v1912
    %v1921 = vsub.f32 %v1895, %v1915
    %v1922 = vmul.f32 %v1916, 1.442695
    %v1923 = vpow.pop %v1922
    %v1924 = vmul.f32 %v1917, 1.442695
    %v1925 = vpow.pop %v1924
    %v1926 = vmul.f32 %v1918, 1.442695
    %v1927 = vpow.pop %v1926
    %v1928 = vmul.f32 %v1919, 1.442695
    %v1929 = vpow.pop %v1928
    %v1930 = vmul.f32 %v1920, 1.442695
    %v1931 = vpow.pop %v1930
    %v1932 = vmul.f32 %v1921, 1.442695
    %v1933 = vpow.pop %v1932
    %v1934 = vsel %vm1204, %v1923, 0.0
    %1935 = vadd.xlane.f32.xlu0 %v1934
    %v1936 = vpop.xlane.xlu0 %1935
    %v1937 = vsel %vm1204, %v1925, 0.0
    %1938 = vadd.xlane.f32.xlu0 %v1937
    %v1939 = vpop.xlane.xlu0 %1938
    %v1940 = vsel %vm1204, %v1927, 0.0
    %1941 = vadd.xlane.f32.xlu0 %v1940
    %v1942 = vpop.xlane.xlu0 %1941
    %v1943 = vsel %vm1204, %v1929, 0.0
    %1944 = vadd.xlane.f32.xlu0 %v1943
    %v1945 = vpop.xlane.xlu0 %1944
    %v1946 = vsel %vm1204, %v1931, 0.0
    %1947 = vadd.xlane.f32.xlu0 %v1946
    %v1948 = vpop.xlane.xlu0 %1947
    %v1949 = vsel %vm1204, %v1933, 0.0
    %1950 = vadd.xlane.f32.xlu0 %v1949
    %v1951 = vpop.xlane.xlu0 %1950
    %v1952 = vrcp.pop %v1936
    %v1953 = vrcp.pop %v1939
    %v1954 = vrcp.pop %v1942
    %v1955 = vrcp.pop %v1945
    %v1956 = vrcp.pop %v1948
    %v1957 = vrcp.pop %v1951
    %v1958 = vmul.f32 %v1923, %v1952
    %v1959 = vmul.f32 %v1925, %v1953
    %v1960 = vmul.f32 %v1927, %v1954
    %v1961 = vmul.f32 %v1929, %v1955
    %v1962 = vmul.f32 %v1931, %v1956
    %v1963 = vmul.f32 %v1933, %v1957
    %v1964 = vpack.c.bf16 %v1959, %v1958
    %v1965 = vpack.c.bf16 %v1961, %v1960
    %v1966 = vpack.c.bf16 %v1963, %v1962
    %1967 = vrot.lane.b32.xlu0 %v1125, 32
    %v1968 = vpop.permute.xlu0 %1967
    %1969 = vrot.lane.b32.xlu0 %v1126, 32
    %v1970 = vpop.permute.xlu0 %1969
    %1971 = vrot.lane.b32.xlu0 %v1127, 32
    %v1972 = vpop.permute.xlu0 %1971
    %v1977 = vsel %vm1204, %v1964, 0
    %v1980 = vsel %vm1204, %v1965, 0
    %v1983 = vsel %vm1204, %v1966, 0
    %1985 = vmatprep.subr.bf16.mxu0 0
    %1986 = vmatpush1.bf16.msra.mxu0 0
    %1987 = vmatprep.subr.bf16.mxu0 0
    %1988 = vmatpush1.bf16.msra.mxu0 0
    %1989 = vmatprep.subr.bf16.mxu0 0
    %1990 = vmatpush1.bf16.msra.mxu0 0
    %1991 = vmatprep.subr.bf16.mxu0 0
    %1992 = vmatpush1.bf16.msra.mxu0 0
    %1993 = vmatprep.subr.bf16.mxu0 0
    %1994 = vmatpush1.bf16.msra.mxu0 0
    %1995 = vmatprep.subr.bf16.mxu0 0
    %1996 = vmatpush1.bf16.msra.mxu0 %v1972
    %1997 = vmatprep.subr.bf16.mxu0 0
    %1998 = vmatpush1.bf16.msra.mxu0 %v1970
    %1999 = vmatprep.subr.bf16.mxu0 0
    %2000 = vmatpush1.bf16.msra.mxu0 %v1968
    %2001 = vmatprep.subr.bf16.mxu0 0
    %2002 = vmatpush2.bf16.msra.mxu0 0
    %2003 = vmatprep.subr.bf16.mxu0 0
    %2004 = vmatpush2.bf16.msra.mxu0 0
    %2005 = vmatprep.subr.bf16.mxu0 0
    %2006 = vmatpush2.bf16.msra.mxu0 0
    %2007 = vmatprep.subr.bf16.mxu0 0
    %2008 = vmatpush2.bf16.msra.mxu0 0
    %2009 = vmatprep.subr.bf16.mxu0 0
    %2010 = vmatpush2.bf16.msra.mxu0 0
    %2011 = vmatprep.subr.bf16.mxu0 0
    %2012 = vmatpush2.bf16.msra.mxu0 0
    %2013 = vmatprep.subr.bf16.mxu0 0
    %2014 = vmatpush2.bf16.msra.mxu0 0
    %2015 = vmatprep.subr.bf16.mxu0 0
    %2016 = vmatpush2.bf16.msra.mxu0 0
    %2017 = vmatprep.mubr.bf16.mxu0 0
    %2018 = vmatmul.mubr.bf16.gmra.mxu0 %v1977
    %v2019 = vpop.f32.mrf.mxu0
    %v2020 = vadd.f32 0.0, %v2019
    %v2021 = vpop.f32.mrf.mxu0
    %v2022 = vpop.f32.mrf.mxu0
    %v2023 = vadd.f32 0.0, %v2022
    %v2024 = vpop.f32.mrf.mxu0
    %2025 = vmatprep.mubr.bf16.mxu0 0
    %2026 = vmatmul.mubr.bf16.gmra.mxu0 %v1980
    %v2027 = vpop.f32.mrf.mxu0
    %v2028 = vadd.f32 0.0, %v2027
    %v2029 = vpop.f32.mrf.mxu0
    %v2030 = vpop.f32.mrf.mxu0
    %v2031 = vadd.f32 0.0, %v2030
    %v2032 = vpop.f32.mrf.mxu0
    %2033 = vmatprep.mubr.bf16.mxu0 0
    %2034 = vmatmul.mubr.bf16.gmra.mxu0 %v1983
    %v2035 = vpop.f32.mrf.mxu0
    %v2036 = vadd.f32 0.0, %v2035
    %v2037 = vpop.f32.mrf.mxu0
    %v2038 = vpop.f32.mrf.mxu0
    %v2039 = vadd.f32 0.0, %v2038
    %v2040 = vpop.f32.mrf.mxu0
    %2041 = vdwg.mxu0
    %2048 = vrot.lane.b32.xlu0 %v1558, 32
    %v2049 = vpop.permute.xlu0 %2048
    %2050 = vrot.lane.b32.xlu0 %v1561, 32
    %v2051 = vpop.permute.xlu0 %2050
    %2052 = vrot.lane.b32.xlu0 %v1566, 32
    %v2053 = vpop.permute.xlu0 %2052
    %2054 = vrot.lane.b32.xlu0 %v1569, 32
    %v2055 = vpop.permute.xlu0 %2054
    %2056 = vrot.lane.b32.xlu0 %v1574, 32
    %v2057 = vpop.permute.xlu0 %2056
    %2058 = vrot.lane.b32.xlu0 %v1577, 32
    %v2059 = vpop.permute.xlu0 %2058
    %2072 = vrot.lane.b32.xlu0 %v1789, 64
    %v2073 = vpop.permute.xlu0 %2072
    %2074 = vrot.lane.b32.xlu0 %v1792, 64
    %v2075 = vpop.permute.xlu0 %2074
    %2076 = vrot.lane.b32.xlu0 %v1797, 64
    %v2077 = vpop.permute.xlu0 %2076
    %2078 = vrot.lane.b32.xlu0 %v1800, 64
    %v2079 = vpop.permute.xlu0 %2078
    %2080 = vrot.lane.b32.xlu0 %v1805, 64
    %v2081 = vpop.permute.xlu0 %2080
    %2082 = vrot.lane.b32.xlu0 %v1808, 64
    %v2083 = vpop.permute.xlu0 %2082
    %2096 = vrot.lane.b32.xlu0 %v2020, 96
    %v2097 = vpop.permute.xlu0 %2096
    %2098 = vrot.lane.b32.xlu0 %v2023, 96
    %v2099 = vpop.permute.xlu0 %2098
    %2100 = vrot.lane.b32.xlu0 %v2028, 96
    %v2101 = vpop.permute.xlu0 %2100
    %2102 = vrot.lane.b32.xlu0 %v2031, 96
    %v2103 = vpop.permute.xlu0 %2102
    %2104 = vrot.lane.b32.xlu0 %v2036, 96
    %v2105 = vpop.permute.xlu0 %2104
    %2106 = vrot.lane.b32.xlu0 %v2039, 96
    %v2107 = vpop.permute.xlu0 %2106
    %v2114 = vsel %vm1128, %v1318, %v2049
    %v2115 = vsel %vm1128, %v1321, %v2051
    %v2116 = vsel %vm1128, %v1326, %v2053
    %v2117 = vsel %vm1128, %v1329, %v2055
    %v2118 = vsel %vm1128, %v1334, %v2057
    %v2119 = vsel %vm1128, %v1337, %v2059
    %vm2120 = vcmask 523264
    %v2121 = vsel %vm2120, %v2114, %v2073
    %v2122 = vsel %vm2120, %v2115, %v2075
    %v2123 = vsel %vm2120, %v2116, %v2077
    %v2124 = vsel %vm2120, %v2117, %v2079
    %v2125 = vsel %vm2120, %v2118, %v2081
    %v2126 = vsel %vm2120, %v2119, %v2083
    %vm2127 = vcmask 785408
    %v2128 = vsel %vm2127, %v2121, %v2097
    %v2129 = vsel %vm2127, %v2122, %v2099
    %v2130 = vsel %vm2127, %v2123, %v2101
    %v2131 = vsel %vm2127, %v2124, %v2103
    %v2132 = vsel %vm2127, %v2125, %v2105
    %v2133 = vsel %vm2127, %v2126, %v2107
    %v2134 = vpack.c.bf16 %v2129, %v2128
    %v2135 = vpack.c.bf16 %v2131, %v2130
    %v2136 = vpack.c.bf16 %v2133, %v2132
    %v2137 = vld [vmem:[%s10] sm:$0xf]
    %v2138 = vld [vmem:[%s10 + $0x4] sm:$0xf]
    %v2139 = vld [vmem:[%s10 + $0x8] sm:$0xf]
    %v2140 = vld [vmem:[%s10 + $0xc] sm:$0xf]
    %v2141 = vld [vmem:[%s10 + $0x10] sm:$0xf]
    %v2142 = vld [vmem:[%s10 + $0x14] sm:$0xf]
    %v2143 = vld [vmem:[%s10 + $0x18] sm:$0xf]
    %v2144 = vld [vmem:[%s10 + $0x1c] sm:$0xf]
    %v2145 = vld [vmem:[%s10 + $0x20] sm:$0xf]
    %v2146 = vld [vmem:[%s10 + $0x24] sm:$0xf]
    %v2147 = vld [vmem:[%s10 + $0x28] sm:$0xf]
    %v2148 = vld [vmem:[%s10 + $0x2c] sm:$0xf]
    %v2149 = vld [vmem:[%s10 + $0x30] sm:$0xf]
    %v2150 = vld [vmem:[%s10 + $0x34] sm:$0xf]
    %v2151 = vld [vmem:[%s10 + $0x38] sm:$0xf]
    %v2152 = vld [vmem:[%s10 + $0x3c] sm:$0xf]
    %v2169 = vunpack.c.l.b16 %v2137
    %v2170 = vunpack.c.l.b16 %v2138
    %v2171 = vunpack.c.l.b16 %v2139
    %v2172 = vunpack.c.l.b16 %v2140
    %v2173 = vunpack.c.l.b16 %v2141
    %v2174 = vunpack.c.l.b16 %v2142
    %v2175 = vunpack.c.l.b16 %v2143
    %v2176 = vunpack.c.l.b16 %v2144
    %v2177 = vunpack.c.l.b16 %v2145
    %v2178 = vunpack.c.l.b16 %v2146
    %v2179 = vunpack.c.l.b16 %v2147
    %v2180 = vunpack.c.l.b16 %v2148
    %v2181 = vunpack.c.l.b16 %v2149
    %v2182 = vunpack.c.l.b16 %v2150
    %v2183 = vunpack.c.l.b16 %v2151
    %v2184 = vunpack.c.l.b16 %v2152
    %v2185 = vpack.c.b16 %v2170, %v2169
    %v2186 = vpack.c.b16 %v2172, %v2171
    %v2187 = vpack.c.b16 %v2174, %v2173
    %v2188 = vpack.c.b16 %v2176, %v2175
    %v2189 = vpack.c.b16 %v2178, %v2177
    %v2190 = vpack.c.b16 %v2180, %v2179
    %v2191 = vpack.c.b16 %v2182, %v2181
    %v2192 = vpack.c.b16 %v2184, %v2183
    %2201 = vmatprep.subr.bf16.mxu0 0
    %2202 = vmatpush1.bf16.msra.mxu0 %v2192
    %2203 = vmatprep.subr.bf16.mxu0 0
    %2204 = vmatpush1.bf16.msra.mxu0 %v2191
    %2205 = vmatprep.subr.bf16.mxu0 0
    %2206 = vmatpush1.bf16.msra.mxu0 %v2190
    %2207 = vmatprep.subr.bf16.mxu0 0
    %2208 = vmatpush1.bf16.msra.mxu0 %v2189
    %2209 = vmatprep.subr.bf16.mxu0 0
    %2210 = vmatpush1.bf16.msra.mxu0 %v2188
    %2211 = vmatprep.subr.bf16.mxu0 0
    %2212 = vmatpush1.bf16.msra.mxu0 %v2187
    %2213 = vmatprep.subr.bf16.mxu0 0
    %2214 = vmatpush1.bf16.msra.mxu0 %v2186
    %2215 = vmatprep.subr.bf16.mxu0 0
    %2216 = vmatpush1.bf16.msra.mxu0 %v2185
    %2217 = vmatprep.subr.bf16.mxu0 0
    %2218 = vmatpush2.bf16.msra.mxu0 0
    %2219 = vmatprep.subr.bf16.mxu0 0
    %2220 = vmatpush2.bf16.msra.mxu0 0
    %2221 = vmatprep.subr.bf16.mxu0 0
    %2222 = vmatpush2.bf16.msra.mxu0 0
    %2223 = vmatprep.subr.bf16.mxu0 0
    %2224 = vmatpush2.bf16.msra.mxu0 0
    %2225 = vmatprep.subr.bf16.mxu0 0
    %2226 = vmatpush2.bf16.msra.mxu0 0
    %2227 = vmatprep.subr.bf16.mxu0 0
    %2228 = vmatpush2.bf16.msra.mxu0 0
    %2229 = vmatprep.subr.bf16.mxu0 0
    %2230 = vmatpush2.bf16.msra.mxu0 0
    %2231 = vmatprep.subr.bf16.mxu0 0
    %2232 = vmatpush2.bf16.msra.mxu0 0
    %2233 = vmatprep.mubr.bf16.mxu0 0
    %2234 = vmatmul.mubr.bf16.gmra.mxu0 %v2134
    %v2235 = vpop.f32.mrf.mxu0
    %v2236 = vadd.f32 0.0, %v2235
    %v2237 = vpop.f32.mrf.mxu0
    %v2238 = vpop.f32.mrf.mxu0
    %v2239 = vadd.f32 0.0, %v2238
    %v2240 = vpop.f32.mrf.mxu0
    %2241 = vmatprep.mubr.bf16.mxu0 0
    %2242 = vmatmul.mubr.bf16.gmra.mxu0 %v2135
    %v2243 = vpop.f32.mrf.mxu0
    %v2244 = vadd.f32 0.0, %v2243
    %v2245 = vpop.f32.mrf.mxu0
    %v2246 = vpop.f32.mrf.mxu0
    %v2247 = vadd.f32 0.0, %v2246
    %v2248 = vpop.f32.mrf.mxu0
    %2249 = vmatprep.mubr.bf16.mxu0 0
    %2250 = vmatmul.mubr.bf16.gmra.mxu0 %v2136
    %v2251 = vpop.f32.mrf.mxu0
    %v2252 = vadd.f32 0.0, %v2251
    %v2253 = vpop.f32.mrf.mxu0
    %v2254 = vpop.f32.mrf.mxu0
    %v2255 = vadd.f32 0.0, %v2254
    %v2256 = vpop.f32.mrf.mxu0
    %2257 = vdwg.mxu0
    %v2258 = vadd.f32 %v708, %v2236
    %v2259 = vadd.f32 %v709, %v2239
    %v2260 = vadd.f32 %v710, %v2244
    %v2261 = vadd.f32 %v711, %v2247
    %v2262 = vadd.f32 %v712, %v2252
    %v2263 = vadd.f32 %v713, %v2255
    %v2264 = vld [vmem:[%s11] sm:$0x1]
    %v2266 = vlaneseq
    %v2267 = vshrl.u32 %v2266, 7
    %v2268 = vsub.s32 0, %v2267
    %v2269 = vrot.slane %v2264, %v2268
    %v2271 = vadd.f32 %v2258, %v2269
    %v2272 = vadd.f32 %v2259, %v2269
    %v2273 = vadd.f32 %v2260, %v2269
    %v2274 = vadd.f32 %v2261, %v2269
    %v2275 = vadd.f32 %v2262, %v2269
    %v2276 = vadd.f32 %v2263, %v2269
    %v2277 = vld [vmem:[%s12] sm:$0x1]
    %v2278 = vld [vmem:[%s13] sm:$0x1]
    %2279 = vadd.xlane.f32.xlu0 %v2271
    %v2280 = vpop.xlane.xlu0 %2279
    %2281 = vadd.xlane.f32.xlu0 %v2272
    %v2282 = vpop.xlane.xlu0 %2281
    %2283 = vadd.xlane.f32.xlu0 %v2273
    %v2284 = vpop.xlane.xlu0 %2283
    %2285 = vadd.xlane.f32.xlu0 %v2274
    %v2286 = vpop.xlane.xlu0 %2285
    %2287 = vadd.xlane.f32.xlu0 %v2275
    %v2288 = vpop.xlane.xlu0 %2287
    %2289 = vadd.xlane.f32.xlu0 %v2276
    %v2290 = vpop.xlane.xlu0 %2289
    %v2291 = vmul.f32 %v2280, %v734
    %v2292 = vmul.f32 %v2282, %v734
    %v2293 = vmul.f32 %v2284, %v734
    %v2294 = vmul.f32 %v2286, %v734
    %v2295 = vmul.f32 %v2288, %v734
    %v2296 = vmul.f32 %v2290, %v734
    %v2297 = vsub.f32 %v2271, %v2291
    %v2298 = vsub.f32 %v2272, %v2292
    %v2299 = vsub.f32 %v2273, %v2293
    %v2300 = vsub.f32 %v2274, %v2294
    %v2301 = vsub.f32 %v2275, %v2295
    %v2302 = vsub.f32 %v2276, %v2296
    %v2303 = vmul.f32 %v2297, %v2297
    %v2304 = vmul.f32 %v2298, %v2298
    %v2305 = vmul.f32 %v2299, %v2299
    %v2306 = vmul.f32 %v2300, %v2300
    %v2307 = vmul.f32 %v2301, %v2301
    %v2308 = vmul.f32 %v2302, %v2302
    %2309 = vadd.xlane.f32.xlu0 %v2303
    %v2310 = vpop.xlane.xlu0 %2309
    %2311 = vadd.xlane.f32.xlu0 %v2304
    %v2312 = vpop.xlane.xlu0 %2311
    %2313 = vadd.xlane.f32.xlu0 %v2305
    %v2314 = vpop.xlane.xlu0 %2313
    %2315 = vadd.xlane.f32.xlu0 %v2306
    %v2316 = vpop.xlane.xlu0 %2315
    %2317 = vadd.xlane.f32.xlu0 %v2307
    %v2318 = vpop.xlane.xlu0 %2317
    %2319 = vadd.xlane.f32.xlu0 %v2308
    %v2320 = vpop.xlane.xlu0 %2319
    %v2321 = vmul.f32 %v2310, %v734
    %v2322 = vmul.f32 %v2312, %v734
    %v2323 = vmul.f32 %v2314, %v734
    %v2324 = vmul.f32 %v2316, %v734
    %v2325 = vmul.f32 %v2318, %v734
    %v2326 = vmul.f32 %v2320, %v734
    %v2327 = vadd.f32 %v2321, 1e-06
    %v2328 = vadd.f32 %v2322, 1e-06
    %v2329 = vadd.f32 %v2323, 1e-06
    %v2330 = vadd.f32 %v2324, 1e-06
    %v2331 = vadd.f32 %v2325, 1e-06
    %v2332 = vadd.f32 %v2326, 1e-06
    %v2333 = vrsqrt.pop %v2327
    %v2334 = vrsqrt.pop %v2328
    %v2335 = vrsqrt.pop %v2329
    %v2336 = vrsqrt.pop %v2330
    %v2337 = vrsqrt.pop %v2331
    %v2338 = vrsqrt.pop %v2332
    %v2339 = vmul.f32 %v2297, %v2333
    %v2340 = vmul.f32 %v2298, %v2334
    %v2341 = vmul.f32 %v2299, %v2335
    %v2342 = vmul.f32 %v2300, %v2336
    %v2343 = vmul.f32 %v2301, %v2337
    %v2344 = vmul.f32 %v2302, %v2338
    %v2346 = vlaneseq
    %v2347 = vshrl.u32 %v2346, 7
    %v2348 = vsub.s32 0, %v2347
    %v2349 = vrot.slane %v2277, %v2348
    %v2351 = vmul.f32 %v2339, %v2349
    %v2352 = vmul.f32 %v2340, %v2349
    %v2353 = vmul.f32 %v2341, %v2349
    %v2354 = vmul.f32 %v2342, %v2349
    %v2355 = vmul.f32 %v2343, %v2349
    %v2356 = vmul.f32 %v2344, %v2349
    %v2358 = vlaneseq
    %v2359 = vshrl.u32 %v2358, 7
    %v2360 = vsub.s32 0, %v2359
    %v2361 = vrot.slane %v2278, %v2360
    %v2363 = vadd.f32 %v2351, %v2361
    %v2364 = vadd.f32 %v2352, %v2361
    %v2365 = vadd.f32 %v2353, %v2361
    %v2366 = vadd.f32 %v2354, %v2361
    %v2367 = vadd.f32 %v2355, %v2361
    %v2368 = vadd.f32 %v2356, %v2361
    %v2369 = vpack.c.bf16 %v2364, %v2363
    %v2370 = vpack.c.bf16 %v2366, %v2365
    %v2371 = vpack.c.bf16 %v2368, %v2367
    %v2372 = vld [vmem:[%s14] sm:$0xff]
    %v2373 = vld [vmem:[%s14 + $0x8] sm:$0xff]
    %v2374 = vld [vmem:[%s14 + $0x10] sm:$0xff]
    %v2375 = vld [vmem:[%s14 + $0x18] sm:$0xff]
    %v2376 = vld [vmem:[%s14 + $0x20] sm:$0xff]
    %v2377 = vld [vmem:[%s14 + $0x28] sm:$0xff]
    %v2378 = vld [vmem:[%s14 + $0x30] sm:$0xff]
    %v2379 = vld [vmem:[%s14 + $0x38] sm:$0xff]
    %v2380 = vld [vmem:[%s14 + $0x40] sm:$0xff]
    %v2381 = vld [vmem:[%s14 + $0x48] sm:$0xff]
    %v2382 = vld [vmem:[%s14 + $0x50] sm:$0xff]
    %v2383 = vld [vmem:[%s14 + $0x58] sm:$0xff]
    %v2384 = vld [vmem:[%s14 + $0x60] sm:$0xff]
    %v2385 = vld [vmem:[%s14 + $0x68] sm:$0xff]
    %v2386 = vld [vmem:[%s14 + $0x70] sm:$0xff]
    %v2387 = vld [vmem:[%s14 + $0x78] sm:$0xff]
    %v2388 = vld [vmem:[%s15] sm:$0x3]
    %v2390 = vlaneseq
    %v2391 = vshrl.u32 %v2390, 7
    %v2392 = vsub.s32 0, %v2391
    %v2393 = vrot.slane %v2388, %v2392
    %v2394 = vlaneseq
    %v2395 = vshrl.u32 %v2394, 7
    %v2396 = vsub.s32 1, %v2395
    %v2397 = vrot.slane %v2388, %v2396
    %v2416 = vunpack.c.l.b16 %v2372
    %v2417 = vunpack.c.h.b16 %v2372
    %v2418 = vunpack.c.l.b16 %v2373
    %v2419 = vunpack.c.h.b16 %v2373
    %v2420 = vunpack.c.l.b16 %v2374
    %v2421 = vunpack.c.h.b16 %v2374
    %v2422 = vunpack.c.l.b16 %v2375
    %v2423 = vunpack.c.h.b16 %v2375
    %v2424 = vunpack.c.l.b16 %v2376
    %v2425 = vunpack.c.h.b16 %v2376
    %v2426 = vunpack.c.l.b16 %v2377
    %v2427 = vunpack.c.h.b16 %v2377
    %v2428 = vunpack.c.l.b16 %v2378
    %v2429 = vunpack.c.h.b16 %v2378
    %v2430 = vunpack.c.l.b16 %v2379
    %v2431 = vunpack.c.h.b16 %v2379
    %v2432 = vunpack.c.l.b16 %v2380
    %v2433 = vunpack.c.h.b16 %v2380
    %v2434 = vunpack.c.l.b16 %v2381
    %v2435 = vunpack.c.h.b16 %v2381
    %v2436 = vunpack.c.l.b16 %v2382
    %v2437 = vunpack.c.h.b16 %v2382
    %v2438 = vunpack.c.l.b16 %v2383
    %v2439 = vunpack.c.h.b16 %v2383
    %v2440 = vunpack.c.l.b16 %v2384
    %v2441 = vunpack.c.h.b16 %v2384
    %v2442 = vunpack.c.l.b16 %v2385
    %v2443 = vunpack.c.h.b16 %v2385
    %v2444 = vunpack.c.l.b16 %v2386
    %v2445 = vunpack.c.h.b16 %v2386
    %v2446 = vunpack.c.l.b16 %v2387
    %v2447 = vunpack.c.h.b16 %v2387
    %v2448 = vpack.c.b16 %v2418, %v2416
    %v2449 = vpack.c.b16 %v2419, %v2417
    %v2450 = vpack.c.b16 %v2422, %v2420
    %v2451 = vpack.c.b16 %v2423, %v2421
    %v2452 = vpack.c.b16 %v2426, %v2424
    %v2453 = vpack.c.b16 %v2427, %v2425
    %v2454 = vpack.c.b16 %v2430, %v2428
    %v2455 = vpack.c.b16 %v2431, %v2429
    %v2456 = vpack.c.b16 %v2434, %v2432
    %v2457 = vpack.c.b16 %v2435, %v2433
    %v2458 = vpack.c.b16 %v2438, %v2436
    %v2459 = vpack.c.b16 %v2439, %v2437
    %v2460 = vpack.c.b16 %v2442, %v2440
    %v2461 = vpack.c.b16 %v2443, %v2441
    %v2462 = vpack.c.b16 %v2446, %v2444
    %v2463 = vpack.c.b16 %v2447, %v2445
    %2480 = vmatprep.subr.bf16.mxu0 %v2463
    %2481 = vmatpush1.bf16.msra.mxu0 %v2462
    %2482 = vmatprep.subr.bf16.mxu0 %v2461
    %2483 = vmatpush1.bf16.msra.mxu0 %v2460
    %2484 = vmatprep.subr.bf16.mxu0 %v2459
    %2485 = vmatpush1.bf16.msra.mxu0 %v2458
    %2486 = vmatprep.subr.bf16.mxu0 %v2457
    %2487 = vmatpush1.bf16.msra.mxu0 %v2456
    %2488 = vmatprep.subr.bf16.mxu0 %v2455
    %2489 = vmatpush1.bf16.msra.mxu0 %v2454
    %2490 = vmatprep.subr.bf16.mxu0 %v2453
    %2491 = vmatpush1.bf16.msra.mxu0 %v2452
    %2492 = vmatprep.subr.bf16.mxu0 %v2451
    %2493 = vmatpush1.bf16.msra.mxu0 %v2450
    %2494 = vmatprep.subr.bf16.mxu0 %v2449
    %2495 = vmatpush1.bf16.msra.mxu0 %v2448
    %2496 = vmatprep.subr.bf16.mxu0 0
    %2497 = vmatpush2.bf16.msra.mxu0 0
    %2498 = vmatprep.subr.bf16.mxu0 0
    %2499 = vmatpush2.bf16.msra.mxu0 0
    %2500 = vmatprep.subr.bf16.mxu0 0
    %2501 = vmatpush2.bf16.msra.mxu0 0
    %2502 = vmatprep.subr.bf16.mxu0 0
    %2503 = vmatpush2.bf16.msra.mxu0 0
    %2504 = vmatprep.subr.bf16.mxu0 0
    %2505 = vmatpush2.bf16.msra.mxu0 0
    %2506 = vmatprep.subr.bf16.mxu0 0
    %2507 = vmatpush2.bf16.msra.mxu0 0
    %2508 = vmatprep.subr.bf16.mxu0 0
    %2509 = vmatpush2.bf16.msra.mxu0 0
    %2510 = vmatprep.subr.bf16.mxu0 0
    %2511 = vmatpush2.bf16.msra.mxu0 0
    %2512 = vmatprep.mubr.bf16.mxu0 0
    %2513 = vmatmul.mubr.bf16.gmra.mxu0 %v2369
    %v2514 = vpop.f32.mrf.mxu0
    %v2515 = vadd.f32 %v2393, %v2514
    %v2516 = vpop.f32.mrf.mxu0
    %v2517 = vadd.f32 %v2397, %v2516
    %v2518 = vpop.f32.mrf.mxu0
    %v2519 = vadd.f32 %v2393, %v2518
    %v2520 = vpop.f32.mrf.mxu0
    %v2521 = vadd.f32 %v2397, %v2520
    %2522 = vmatprep.mubr.bf16.mxu0 0
    %2523 = vmatmul.mubr.bf16.gmra.mxu0 %v2370
    %v2524 = vpop.f32.mrf.mxu0
    %v2525 = vadd.f32 %v2393, %v2524
    %v2526 = vpop.f32.mrf.mxu0
    %v2527 = vadd.f32 %v2397, %v2526
    %v2528 = vpop.f32.mrf.mxu0
    %v2529 = vadd.f32 %v2393, %v2528
    %v2530 = vpop.f32.mrf.mxu0
    %v2531 = vadd.f32 %v2397, %v2530
    %2532 = vmatprep.mubr.bf16.mxu0 0
    %2533 = vmatmul.mubr.bf16.gmra.mxu0 %v2371
    %v2534 = vpop.f32.mrf.mxu0
    %v2535 = vadd.f32 %v2393, %v2534
    %v2536 = vpop.f32.mrf.mxu0
    %v2537 = vadd.f32 %v2397, %v2536
    %v2538 = vpop.f32.mrf.mxu0
    %v2539 = vadd.f32 %v2393, %v2538
    %v2540 = vpop.f32.mrf.mxu0
    %v2541 = vadd.f32 %v2397, %v2540
    %2542 = vdwg.mxu0
    %v2543 = vmul.f32 %v2515, %v2515
    %v2544 = vmul.f32 %v2517, %v2517
    %v2545 = vmul.f32 %v2519, %v2519
    %v2546 = vmul.f32 %v2521, %v2521
    %v2547 = vmul.f32 %v2525, %v2525
    %v2548 = vmul.f32 %v2527, %v2527
    %v2549 = vmul.f32 %v2529, %v2529
    %v2550 = vmul.f32 %v2531, %v2531
    %v2551 = vmul.f32 %v2535, %v2535
    %v2552 = vmul.f32 %v2537, %v2537
    %v2553 = vmul.f32 %v2539, %v2539
    %v2554 = vmul.f32 %v2541, %v2541
    %v2555 = vmul.f32 %v2515, %v2543
    %v2556 = vmul.f32 %v2517, %v2544
    %v2557 = vmul.f32 %v2519, %v2545
    %v2558 = vmul.f32 %v2521, %v2546
    %v2559 = vmul.f32 %v2525, %v2547
    %v2560 = vmul.f32 %v2527, %v2548
    %v2561 = vmul.f32 %v2529, %v2549
    %v2562 = vmul.f32 %v2531, %v2550
    %v2563 = vmul.f32 %v2535, %v2551
    %v2564 = vmul.f32 %v2537, %v2552
    %v2565 = vmul.f32 %v2539, %v2553
    %v2566 = vmul.f32 %v2541, %v2554
    %v2567 = vmul.f32 %v2555, 0.044715
    %v2568 = vmul.f32 %v2556, 0.044715
    %v2569 = vmul.f32 %v2557, 0.044715
    %v2570 = vmul.f32 %v2558, 0.044715
    %v2571 = vmul.f32 %v2559, 0.044715
    %v2572 = vmul.f32 %v2560, 0.044715
    %v2573 = vmul.f32 %v2561, 0.044715
    %v2574 = vmul.f32 %v2562, 0.044715
    %v2575 = vmul.f32 %v2563, 0.044715
    %v2576 = vmul.f32 %v2564, 0.044715
    %v2577 = vmul.f32 %v2565, 0.044715
    %v2578 = vmul.f32 %v2566, 0.044715
    %v2579 = vadd.f32 %v2515, %v2567
    %v2580 = vadd.f32 %v2517, %v2568
    %v2581 = vadd.f32 %v2519, %v2569
    %v2582 = vadd.f32 %v2521, %v2570
    %v2583 = vadd.f32 %v2525, %v2571
    %v2584 = vadd.f32 %v2527, %v2572
    %v2585 = vadd.f32 %v2529, %v2573
    %v2586 = vadd.f32 %v2531, %v2574
    %v2587 = vadd.f32 %v2535, %v2575
    %v2588 = vadd.f32 %v2537, %v2576
    %v2589 = vadd.f32 %v2539, %v2577
    %v2590 = vadd.f32 %v2541, %v2578
    %v2591 = vmul.f32 %v2579, 0.7978846
    %v2592 = vmul.f32 %v2580, 0.7978846
    %v2593 = vmul.f32 %v2581, 0.7978846
    %v2594 = vmul.f32 %v2582, 0.7978846
    %v2595 = vmul.f32 %v2583, 0.7978846
    %v2596 = vmul.f32 %v2584, 0.7978846
    %v2597 = vmul.f32 %v2585, 0.7978846
    %v2598 = vmul.f32 %v2586, 0.7978846
    %v2599 = vmul.f32 %v2587, 0.7978846
    %v2600 = vmul.f32 %v2588, 0.7978846
    %v2601 = vmul.f32 %v2589, 0.7978846
    %v2602 = vmul.f32 %v2590, 0.7978846
    %v2603 = vtanh.pop %v2591
    %v2604 = vtanh.pop %v2592
    %v2605 = vtanh.pop %v2593
    %v2606 = vtanh.pop %v2594
    %v2607 = vtanh.pop %v2595
    %v2608 = vtanh.pop %v2596
    %v2609 = vtanh.pop %v2597
    %v2610 = vtanh.pop %v2598
    %v2611 = vtanh.pop %v2599
    %v2612 = vtanh.pop %v2600
    %v2613 = vtanh.pop %v2601
    %v2614 = vtanh.pop %v2602
    %v2615 = vadd.f32 %v2603, 1.0
    %v2616 = vadd.f32 %v2604, 1.0
    %v2617 = vadd.f32 %v2605, 1.0
    %v2618 = vadd.f32 %v2606, 1.0
    %v2619 = vadd.f32 %v2607, 1.0
    %v2620 = vadd.f32 %v2608, 1.0
    %v2621 = vadd.f32 %v2609, 1.0
    %v2622 = vadd.f32 %v2610, 1.0
    %v2623 = vadd.f32 %v2611, 1.0
    %v2624 = vadd.f32 %v2612, 1.0
    %v2625 = vadd.f32 %v2613, 1.0
    %v2626 = vadd.f32 %v2614, 1.0
    %v2627 = vmul.f32 %v2615, 0.5
    %v2628 = vmul.f32 %v2616, 0.5
    %v2629 = vmul.f32 %v2617, 0.5
    %v2630 = vmul.f32 %v2618, 0.5
    %v2631 = vmul.f32 %v2619, 0.5
    %v2632 = vmul.f32 %v2620, 0.5
    %v2633 = vmul.f32 %v2621, 0.5
    %v2634 = vmul.f32 %v2622, 0.5
    %v2635 = vmul.f32 %v2623, 0.5
    %v2636 = vmul.f32 %v2624, 0.5
    %v2637 = vmul.f32 %v2625, 0.5
    %v2638 = vmul.f32 %v2626, 0.5
    %v2639 = vmul.f32 %v2515, %v2627
    %v2640 = vmul.f32 %v2517, %v2628
    %v2641 = vmul.f32 %v2519, %v2629
    %v2642 = vmul.f32 %v2521, %v2630
    %v2643 = vmul.f32 %v2525, %v2631
    %v2644 = vmul.f32 %v2527, %v2632
    %v2645 = vmul.f32 %v2529, %v2633
    %v2646 = vmul.f32 %v2531, %v2634
    %v2647 = vmul.f32 %v2535, %v2635
    %v2648 = vmul.f32 %v2537, %v2636
    %v2649 = vmul.f32 %v2539, %v2637
    %v2650 = vmul.f32 %v2541, %v2638
    %v2651 = vpack.c.bf16 %v2641, %v2639
    %v2652 = vpack.c.bf16 %v2642, %v2640
    %v2653 = vpack.c.bf16 %v2645, %v2643
    %v2654 = vpack.c.bf16 %v2646, %v2644
    %v2655 = vpack.c.bf16 %v2649, %v2647
    %v2656 = vpack.c.bf16 %v2650, %v2648
    %v2657 = vld [vmem:[%s16] sm:$0xf]
    %v2658 = vld [vmem:[%s16 + $0x4] sm:$0xf]
    %v2659 = vld [vmem:[%s16 + $0x8] sm:$0xf]
    %v2660 = vld [vmem:[%s16 + $0xc] sm:$0xf]
    %v2661 = vld [vmem:[%s16 + $0x10] sm:$0xf]
    %v2662 = vld [vmem:[%s16 + $0x14] sm:$0xf]
    %v2663 = vld [vmem:[%s16 + $0x18] sm:$0xf]
    %v2664 = vld [vmem:[%s16 + $0x1c] sm:$0xf]
    %v2665 = vld [vmem:[%s16 + $0x20] sm:$0xf]
    %v2666 = vld [vmem:[%s16 + $0x24] sm:$0xf]
    %v2667 = vld [vmem:[%s16 + $0x28] sm:$0xf]
    %v2668 = vld [vmem:[%s16 + $0x2c] sm:$0xf]
    %v2669 = vld [vmem:[%s16 + $0x30] sm:$0xf]
    %v2670 = vld [vmem:[%s16 + $0x34] sm:$0xf]
    %v2671 = vld [vmem:[%s16 + $0x38] sm:$0xf]
    %v2672 = vld [vmem:[%s16 + $0x3c] sm:$0xf]
    %v2673 = vld [vmem:[%s16 + $0x40] sm:$0xf]
    %v2674 = vld [vmem:[%s16 + $0x44] sm:$0xf]
    %v2675 = vld [vmem:[%s16 + $0x48] sm:$0xf]
    %v2676 = vld [vmem:[%s16 + $0x4c] sm:$0xf]
    %v2677 = vld [vmem:[%s16 + $0x50] sm:$0xf]
    %v2678 = vld [vmem:[%s16 + $0x54] sm:$0xf]
    %v2679 = vld [vmem:[%s16 + $0x58] sm:$0xf]
    %v2680 = vld [vmem:[%s16 + $0x5c] sm:$0xf]
    %v2681 = vld [vmem:[%s16 + $0x60] sm:$0xf]
    %v2682 = vld [vmem:[%s16 + $0x64] sm:$0xf]
    %v2683 = vld [vmem:[%s16 + $0x68] sm:$0xf]
    %v2684 = vld [vmem:[%s16 + $0x6c] sm:$0xf]
    %v2685 = vld [vmem:[%s16 + $0x70] sm:$0xf]
    %v2686 = vld [vmem:[%s16 + $0x74] sm:$0xf]
    %v2687 = vld [vmem:[%s16 + $0x78] sm:$0xf]
    %v2688 = vld [vmem:[%s16 + $0x7c] sm:$0xf]
    %v2689 = vld [vmem:[%s17] sm:$0x1]
    %v2691 = vlaneseq
    %v2692 = vshrl.u32 %v2691, 7
    %v2693 = vsub.s32 0, %v2692
    %v2694 = vrot.slane %v2689, %v2693
    %v2728 = vunpack.c.l.b16 %v2657
    %v2729 = vunpack.c.l.b16 %v2658
    %v2730 = vunpack.c.l.b16 %v2659
    %v2731 = vunpack.c.l.b16 %v2660
    %v2732 = vunpack.c.l.b16 %v2661
    %v2733 = vunpack.c.l.b16 %v2662
    %v2734 = vunpack.c.l.b16 %v2663
    %v2735 = vunpack.c.l.b16 %v2664
    %v2736 = vunpack.c.l.b16 %v2665
    %v2737 = vunpack.c.l.b16 %v2666
    %v2738 = vunpack.c.l.b16 %v2667
    %v2739 = vunpack.c.l.b16 %v2668
    %v2740 = vunpack.c.l.b16 %v2669
    %v2741 = vunpack.c.l.b16 %v2670
    %v2742 = vunpack.c.l.b16 %v2671
    %v2743 = vunpack.c.l.b16 %v2672
    %v2744 = vunpack.c.l.b16 %v2673
    %v2745 = vunpack.c.l.b16 %v2674
    %v2746 = vunpack.c.l.b16 %v2675
    %v2747 = vunpack.c.l.b16 %v2676
    %v2748 = vunpack.c.l.b16 %v2677
    %v2749 = vunpack.c.l.b16 %v2678
    %v2750 = vunpack.c.l.b16 %v2679
    %v2751 = vunpack.c.l.b16 %v2680
    %v2752 = vunpack.c.l.b16 %v2681
    %v2753 = vunpack.c.l.b16 %v2682
    %v2754 = vunpack.c.l.b16 %v2683
    %v2755 = vunpack.c.l.b16 %v2684
    %v2756 = vunpack.c.l.b16 %v2685
    %v2757 = vunpack.c.l.b16 %v2686
    %v2758 = vunpack.c.l.b16 %v2687
    %v2759 = vunpack.c.l.b16 %v2688
    %v2760 = vpack.c.b16 %v2729, %v2728
    %v2761 = vpack.c.b16 %v2731, %v2730
    %v2762 = vpack.c.b16 %v2733, %v2732
    %v2763 = vpack.c.b16 %v2735, %v2734
    %v2764 = vpack.c.b16 %v2737, %v2736
    %v2765 = vpack.c.b16 %v2739, %v2738
    %v2766 = vpack.c.b16 %v2741, %v2740
    %v2767 = vpack.c.b16 %v2743, %v2742
    %v2768 = vpack.c.b16 %v2745, %v2744
    %v2769 = vpack.c.b16 %v2747, %v2746
    %v2770 = vpack.c.b16 %v2749, %v2748
    %v2771 = vpack.c.b16 %v2751, %v2750
    %v2772 = vpack.c.b16 %v2753, %v2752
    %v2773 = vpack.c.b16 %v2755, %v2754
    %v2774 = vpack.c.b16 %v2757, %v2756
    %v2775 = vpack.c.b16 %v2759, %v2758
    %2792 = vmatprep.subr.bf16.mxu0 0
    %2793 = vmatpush1.bf16.msra.mxu0 %v2767
    %2794 = vmatprep.subr.bf16.mxu0 0
    %2795 = vmatpush1.bf16.msra.mxu0 %v2766
    %2796 = vmatprep.subr.bf16.mxu0 0
    %2797 = vmatpush1.bf16.msra.mxu0 %v2765
    %2798 = vmatprep.subr.bf16.mxu0 0
    %2799 = vmatpush1.bf16.msra.mxu0 %v2764
    %2800 = vmatprep.subr.bf16.mxu0 0
    %2801 = vmatpush1.bf16.msra.mxu0 %v2763
    %2802 = vmatprep.subr.bf16.mxu0 0
    %2803 = vmatpush1.bf16.msra.mxu0 %v2762
    %2804 = vmatprep.subr.bf16.mxu0 0
    %2805 = vmatpush1.bf16.msra.mxu0 %v2761
    %2806 = vmatprep.subr.bf16.mxu0 0
    %2807 = vmatpush1.bf16.msra.mxu0 %v2760
    %2808 = vmatprep.subr.bf16.mxu0 0
    %2809 = vmatpush2.bf16.msra.mxu0 %v2775
    %2810 = vmatprep.subr.bf16.mxu0 0
    %2811 = vmatpush2.bf16.msra.mxu0 %v2774
    %2812 = vmatprep.subr.bf16.mxu0 0
    %2813 = vmatpush2.bf16.msra.mxu0 %v2773
    %2814 = vmatprep.subr.bf16.mxu0 0
    %2815 = vmatpush2.bf16.msra.mxu0 %v2772
    %2816 = vmatprep.subr.bf16.mxu0 0
    %2817 = vmatpush2.bf16.msra.mxu0 %v2771
    %2818 = vmatprep.subr.bf16.mxu0 0
    %2819 = vmatpush2.bf16.msra.mxu0 %v2770
    %2820 = vmatprep.subr.bf16.mxu0 0
    %2821 = vmatpush2.bf16.msra.mxu0 %v2769
    %2822 = vmatprep.subr.bf16.mxu0 0
    %2823 = vmatpush2.bf16.msra.mxu0 %v2768
    %2824 = vmatprep.mubr.bf16.mxu0 %v2652
    %2825 = vmatmul.mubr.bf16.gmra.mxu0 %v2651
    %v2826 = vpop.f32.mrf.mxu0
    %v2827 = vadd.f32 %v2694, %v2826
    %v2828 = vpop.f32.mrf.mxu0
    %v2829 = vpop.f32.mrf.mxu0
    %v2830 = vadd.f32 %v2694, %v2829
    %v2831 = vpop.f32.mrf.mxu0
    %2832 = vmatprep.mubr.bf16.mxu0 %v2654
    %2833 = vmatmul.mubr.bf16.gmra.mxu0 %v2653
    %v2834 = vpop.f32.mrf.mxu0
    %v2835 = vadd.f32 %v2694, %v2834
    %v2836 = vpop.f32.mrf.mxu0
    %v2837 = vpop.f32.mrf.mxu0
    %v2838 = vadd.f32 %v2694, %v2837
    %v2839 = vpop.f32.mrf.mxu0
    %2840 = vmatprep.mubr.bf16.mxu0 %v2656
    %2841 = vmatmul.mubr.bf16.gmra.mxu0 %v2655
    %v2842 = vpop.f32.mrf.mxu0
    %v2843 = vadd.f32 %v2694, %v2842
    %v2844 = vpop.f32.mrf.mxu0
    %v2845 = vpop.f32.mrf.mxu0
    %v2846 = vadd.f32 %v2694, %v2845
    %v2847 = vpop.f32.mrf.mxu0
    %2848 = vdwg.mxu0
    %v2849 = vadd.f32 %v2271, %v2827
    %v2850 = vadd.f32 %v2272, %v2830
    %v2851 = vadd.f32 %v2273, %v2835
    %v2852 = vadd.f32 %v2274, %v2838
    %v2853 = vadd.f32 %v2275, %v2843
    %v2854 = vadd.f32 %v2276, %v2846
    %s2855 = scalar_lea.vmem %s6, 1
    %v2856 = vld [vmem:[%s2855] sm:$0x1]
    %s2857 = scalar_lea.vmem %s7, 1
    %v2858 = vld [vmem:[%s2857] sm:$0x1]
    %2859 = vadd.xlane.f32.xlu0 %v2849
    %v2860 = vpop.xlane.xlu0 %2859
    %2861 = vadd.xlane.f32.xlu0 %v2850
    %v2862 = vpop.xlane.xlu0 %2861
    %2863 = vadd.xlane.f32.xlu0 %v2851
    %v2864 = vpop.xlane.xlu0 %2863
    %2865 = vadd.xlane.f32.xlu0 %v2852
    %v2866 = vpop.xlane.xlu0 %2865
    %2867 = vadd.xlane.f32.xlu0 %v2853
    %v2868 = vpop.xlane.xlu0 %2867
    %2869 = vadd.xlane.f32.xlu0 %v2854
    %v2870 = vpop.xlane.xlu0 %2869
    %v2871 = vmul.f32 %v2860, %v734
    %v2872 = vmul.f32 %v2862, %v734
    %v2873 = vmul.f32 %v2864, %v734
    %v2874 = vmul.f32 %v2866, %v734
    %v2875 = vmul.f32 %v2868, %v734
    %v2876 = vmul.f32 %v2870, %v734
    %v2877 = vsub.f32 %v2849, %v2871
    %v2878 = vsub.f32 %v2850, %v2872
    %v2879 = vsub.f32 %v2851, %v2873
    %v2880 = vsub.f32 %v2852, %v2874
    %v2881 = vsub.f32 %v2853, %v2875
    %v2882 = vsub.f32 %v2854, %v2876
    %v2883 = vmul.f32 %v2877, %v2877
    %v2884 = vmul.f32 %v2878, %v2878
    %v2885 = vmul.f32 %v2879, %v2879
    %v2886 = vmul.f32 %v2880, %v2880
    %v2887 = vmul.f32 %v2881, %v2881
    %v2888 = vmul.f32 %v2882, %v2882
    %2889 = vadd.xlane.f32.xlu0 %v2883
    %v2890 = vpop.xlane.xlu0 %2889
    %2891 = vadd.xlane.f32.xlu0 %v2884
    %v2892 = vpop.xlane.xlu0 %2891
    %2893 = vadd.xlane.f32.xlu0 %v2885
    %v2894 = vpop.xlane.xlu0 %2893
    %2895 = vadd.xlane.f32.xlu0 %v2886
    %v2896 = vpop.xlane.xlu0 %2895
    %2897 = vadd.xlane.f32.xlu0 %v2887
    %v2898 = vpop.xlane.xlu0 %2897
    %2899 = vadd.xlane.f32.xlu0 %v2888
    %v2900 = vpop.xlane.xlu0 %2899
    %v2901 = vmul.f32 %v2890, %v734
    %v2902 = vmul.f32 %v2892, %v734
    %v2903 = vmul.f32 %v2894, %v734
    %v2904 = vmul.f32 %v2896, %v734
    %v2905 = vmul.f32 %v2898, %v734
    %v2906 = vmul.f32 %v2900, %v734
    %v2907 = vadd.f32 %v2901, 1e-06
    %v2908 = vadd.f32 %v2902, 1e-06
    %v2909 = vadd.f32 %v2903, 1e-06
    %v2910 = vadd.f32 %v2904, 1e-06
    %v2911 = vadd.f32 %v2905, 1e-06
    %v2912 = vadd.f32 %v2906, 1e-06
    %v2913 = vrsqrt.pop %v2907
    %v2914 = vrsqrt.pop %v2908
    %v2915 = vrsqrt.pop %v2909
    %v2916 = vrsqrt.pop %v2910
    %v2917 = vrsqrt.pop %v2911
    %v2918 = vrsqrt.pop %v2912
    %v2919 = vmul.f32 %v2877, %v2913
    %v2920 = vmul.f32 %v2878, %v2914
    %v2921 = vmul.f32 %v2879, %v2915
    %v2922 = vmul.f32 %v2880, %v2916
    %v2923 = vmul.f32 %v2881, %v2917
    %v2924 = vmul.f32 %v2882, %v2918
    %v2926 = vlaneseq
    %v2927 = vshrl.u32 %v2926, 7
    %v2928 = vsub.s32 0, %v2927
    %v2929 = vrot.slane %v2856, %v2928
    %v2931 = vmul.f32 %v2919, %v2929
    %v2932 = vmul.f32 %v2920, %v2929
    %v2933 = vmul.f32 %v2921, %v2929
    %v2934 = vmul.f32 %v2922, %v2929
    %v2935 = vmul.f32 %v2923, %v2929
    %v2936 = vmul.f32 %v2924, %v2929
    %v2938 = vlaneseq
    %v2939 = vshrl.u32 %v2938, 7
    %v2940 = vsub.s32 0, %v2939
    %v2941 = vrot.slane %v2858, %v2940
    %v2943 = vadd.f32 %v2931, %v2941
    %v2944 = vadd.f32 %v2932, %v2941
    %v2945 = vadd.f32 %v2933, %v2941
    %v2946 = vadd.f32 %v2934, %v2941
    %v2947 = vadd.f32 %v2935, %v2941
    %v2948 = vadd.f32 %v2936, %v2941
    %v2949 = vpack.c.bf16 %v2944, %v2943
    %v2950 = vpack.c.bf16 %v2946, %v2945
    %v2951 = vpack.c.bf16 %v2948, %v2947
    %s2952 = scalar_lea.vmem %s8, 192
    %v2953 = vld [vmem:[%s2952] sm:$0xff]
    %v2954 = vld [vmem:[%s2952 + $0x8] sm:$0xf]
    %v2955 = vld [vmem:[%s2952 + $0xc] sm:$0xff]
    %v2956 = vld [vmem:[%s2952 + $0x14] sm:$0xf]
    %v2957 = vld [vmem:[%s2952 + $0x18] sm:$0xff]
    %v2958 = vld [vmem:[%s2952 + $0x20] sm:$0xf]
    %v2959 = vld [vmem:[%s2952 + $0x24] sm:$0xff]
    %v2960 = vld [vmem:[%s2952 + $0x2c] sm:$0xf]
    %v2961 = vld [vmem:[%s2952 + $0x30] sm:$0xff]
    %v2962 = vld [vmem:[%s2952 + $0x38] sm:$0xf]
    %v2963 = vld [vmem:[%s2952 + $0x3c] sm:$0xff]
    %v2964 = vld [vmem:[%s2952 + $0x44] sm:$0xf]
    %v2965 = vld [vmem:[%s2952 + $0x48] sm:$0xff]
    %v2966 = vld [vmem:[%s2952 + $0x50] sm:$0xf]
    %v2967 = vld [vmem:[%s2952 + $0x54] sm:$0xff]
    %v2968 = vld [vmem:[%s2952 + $0x5c] sm:$0xf]
    %v2969 = vld [vmem:[%s2952 + $0x60] sm:$0xff]
    %v2970 = vld [vmem:[%s2952 + $0x68] sm:$0xf]
    %v2971 = vld [vmem:[%s2952 + $0x6c] sm:$0xff]
    %v2972 = vld [vmem:[%s2952 + $0x74] sm:$0xf]
    %v2973 = vld [vmem:[%s2952 + $0x78] sm:$0xff]
    %v2974 = vld [vmem:[%s2952 + $0x80] sm:$0xf]
    %v2975 = vld [vmem:[%s2952 + $0x84] sm:$0xff]
    %v2976 = vld [vmem:[%s2952 + $0x8c] sm:$0xf]
    %v2977 = vld [vmem:[%s2952 + $0x90] sm:$0xff]
    %v2978 = vld [vmem:[%s2952 + $0x98] sm:$0xf]
    %v2979 = vld [vmem:[%s2952 + $0x9c] sm:$0xff]
    %v2980 = vld [vmem:[%s2952 + $0xa4] sm:$0xf]
    %v2981 = vld [vmem:[%s2952 + $0xa8] sm:$0xff]
    %v2982 = vld [vmem:[%s2952 + $0xb0] sm:$0xf]
    %v2983 = vld [vmem:[%s2952 + $0xb4] sm:$0xff]
    %v2984 = vld [vmem:[%s2952 + $0xbc] sm:$0xf]
    %s2985 = scalar_lea.vmem %s9, 3
    %v2986 = vld [vmem:[%s2985] sm:$0x7]
    %v2988 = vlaneseq
    %v2989 = vshrl.u32 %v2988, 7
    %v2990 = vsub.s32 0, %v2989
    %v2991 = vrot.slane %v2986, %v2990
    %v2992 = vlaneseq
    %v2993 = vshrl.u32 %v2992, 7
    %v2994 = vsub.s32 1, %v2993
    %v2995 = vrot.slane %v2986, %v2994
    %v2996 = vlaneseq
    %v2997 = vshrl.u32 %v2996, 7
    %v2998 = vsub.s32 2, %v2997
    %v2999 = vrot.slane %v2986, %v2998
    %v3035 = vunpack.c.l.b16 %v2953
    %v3036 = vunpack.c.h.b16 %v2953
    %v3037 = vunpack.c.l.b16 %v2954
    %v3038 = vunpack.c.l.b16 %v2955
    %v3039 = vunpack.c.h.b16 %v2955
    %v3040 = vunpack.c.l.b16 %v2956
    %v3041 = vunpack.c.l.b16 %v2957
    %v3042 = vunpack.c.h.b16 %v2957
    %v3043 = vunpack.c.l.b16 %v2958
    %v3044 = vunpack.c.l.b16 %v2959
    %v3045 = vunpack.c.h.b16 %v2959
    %v3046 = vunpack.c.l.b16 %v2960
    %v3047 = vunpack.c.l.b16 %v2961
    %v3048 = vunpack.c.h.b16 %v2961
    %v3049 = vunpack.c.l.b16 %v2962
    %v3050 = vunpack.c.l.b16 %v2963
    %v3051 = vunpack.c.h.b16 %v2963
    %v3052 = vunpack.c.l.b16 %v2964
    %v3053 = vunpack.c.l.b16 %v2965
    %v3054 = vunpack.c.h.b16 %v2965
    %v3055 = vunpack.c.l.b16 %v2966
    %v3056 = vunpack.c.l.b16 %v2967
    %v3057 = vunpack.c.h.b16 %v2967
    %v3058 = vunpack.c.l.b16 %v2968
    %v3059 = vunpack.c.l.b16 %v2969
    %v3060 = vunpack.c.h.b16 %v2969
    %v3061 = vunpack.c.l.b16 %v2970
    %v3062 = vunpack.c.l.b16 %v2971
    %v3063 = vunpack.c.h.b16 %v2971
    %v3064 = vunpack.c.l.b16 %v2972
    %v3065 = vunpack.c.l.b16 %v2973
    %v3066 = vunpack.c.h.b16 %v2973
    %v3067 = vunpack.c.l.b16 %v2974
    %v3068 = vunpack.c.l.b16 %v2975
    %v3069 = vunpack.c.h.b16 %v2975
    %v3070 = vunpack.c.l.b16 %v2976
    %v3071 = vunpack.c.l.b16 %v2977
    %v3072 = vunpack.c.h.b16 %v2977
    %v3073 = vunpack.c.l.b16 %v2978
    %v3074 = vunpack.c.l.b16 %v2979
    %v3075 = vunpack.c.h.b16 %v2979
    %v3076 = vunpack.c.l.b16 %v2980
    %v3077 = vunpack.c.l.b16 %v2981
    %v3078 = vunpack.c.h.b16 %v2981
    %v3079 = vunpack.c.l.b16 %v2982
    %v3080 = vunpack.c.l.b16 %v2983
    %v3081 = vunpack.c.h.b16 %v2983
    %v3082 = vunpack.c.l.b16 %v2984
    %v3083 = vpack.c.b16 %v3038, %v3035
    %v3084 = vpack.c.b16 %v3039, %v3036
    %v3085 = vpack.c.b16 %v3040, %v3037
    %v3086 = vpack.c.b16 %v3044, %v3041
    %v3087 = vpack.c.b16 %v3045, %v3042
    %v3088 = vpack.c.b16 %v3046, %v3043
    %v3089 = vpack.c.b16 %v3050, %v3047
    %v3090 = vpack.c.b16 %v3051, %v3048
    %v3091 = vpack.c.b16 %v3052, %v3049
    %v3092 = vpack.c.b16 %v3056, %v3053
    %v3093 = vpack.c.b16 %v3057, %v3054
    %v3094 = vpack.c.b16 %v3058, %v3055
    %v3095 = vpack.c.b16 %v3062, %v3059
    %v3096 = vpack.c.b16 %v3063, %v3060
    %v3097 = vpack.c.b16 %v3064, %v3061
    %v3098 = vpack.c.b16 %v3068, %v3065
    %v3099 = vpack.c.b16 %v3069, %v3066
    %v3100 = vpack.c.b16 %v3070, %v3067
    %v3101 = vpack.c.b16 %v3074, %v3071
    %v3102 = vpack.c.b16 %v3075, %v3072
    %v3103 = vpack.c.b16 %v3076, %v3073
    %v3104 = vpack.c.b16 %v3080, %v3077
    %v3105 = vpack.c.b16 %v3081, %v3078
    %v3106 = vpack.c.b16 %v3082, %v3079
    %3131 = vmatprep.subr.bf16.mxu0 %v3105
    %3132 = vmatpush1.bf16.msra.mxu0 %v3104
    %3133 = vmatprep.subr.bf16.mxu0 %v3102
    %3134 = vmatpush1.bf16.msra.mxu0 %v3101
    %3135 = vmatprep.subr.bf16.mxu0 %v3099
    %3136 = vmatpush1.bf16.msra.mxu0 %v3098
    %3137 = vmatprep.subr.bf16.mxu0 %v3096
    %3138 = vmatpush1.bf16.msra.mxu0 %v3095
    %3139 = vmatprep.subr.bf16.mxu0 %v3093
    %3140 = vmatpush1.bf16.msra.mxu0 %v3092
    %3141 = vmatprep.subr.bf16.mxu0 %v3090
    %3142 = vmatpush1.bf16.msra.mxu0 %v3089
    %3143 = vmatprep.subr.bf16.mxu0 %v3087
    %3144 = vmatpush1.bf16.msra.mxu0 %v3086
    %3145 = vmatprep.subr.bf16.mxu0 %v3084
    %3146 = vmatpush1.bf16.msra.mxu0 %v3083
    %3147 = vmatprep.subr.bf16.mxu0 0
    %3148 = vmatpush2.bf16.msra.mxu0 0
    %3149 = vmatprep.subr.bf16.mxu0 0
    %3150 = vmatpush2.bf16.msra.mxu0 0
    %3151 = vmatprep.subr.bf16.mxu0 0
    %3152 = vmatpush2.bf16.msra.mxu0 0
    %3153 = vmatprep.subr.bf16.mxu0 0
    %3154 = vmatpush2.bf16.msra.mxu0 0
    %3155 = vmatprep.subr.bf16.mxu0 0
    %3156 = vmatpush2.bf16.msra.mxu0 0
    %3157 = vmatprep.subr.bf16.mxu0 0
    %3158 = vmatpush2.bf16.msra.mxu0 0
    %3159 = vmatprep.subr.bf16.mxu0 0
    %3160 = vmatpush2.bf16.msra.mxu0 0
    %3161 = vmatprep.subr.bf16.mxu0 0
    %3162 = vmatpush2.bf16.msra.mxu0 0
    %3163 = vmatprep.mubr.bf16.mxu0 0
    %3164 = vmatmul.mubr.bf16.gmra.mxu0 %v2949
    %v3165 = vpop.f32.mrf.mxu0
    %v3166 = vadd.f32 %v2991, %v3165
    %v3167 = vpop.f32.mrf.mxu0
    %v3168 = vadd.f32 %v2995, %v3167
    %v3169 = vpop.f32.mrf.mxu0
    %v3170 = vadd.f32 %v2991, %v3169
    %v3171 = vpop.f32.mrf.mxu0
    %v3172 = vadd.f32 %v2995, %v3171
    %3173 = vmatprep.mubr.bf16.mxu0 0
    %3174 = vmatmul.mubr.bf16.gmra.mxu0 %v2950
    %v3175 = vpop.f32.mrf.mxu0
    %v3176 = vadd.f32 %v2991, %v3175
    %v3177 = vpop.f32.mrf.mxu0
    %v3178 = vadd.f32 %v2995, %v3177
    %v3179 = vpop.f32.mrf.mxu0
    %v3180 = vadd.f32 %v2991, %v3179
    %v3181 = vpop.f32.mrf.mxu0
    %v3182 = vadd.f32 %v2995, %v3181
    %3183 = vmatprep.mubr.bf16.mxu0 0
    %3184 = vmatmul.mubr.bf16.gmra.mxu0 %v2951
    %v3185 = vpop.f32.mrf.mxu0
    %v3186 = vadd.f32 %v2991, %v3185
    %v3187 = vpop.f32.mrf.mxu0
    %v3188 = vadd.f32 %v2995, %v3187
    %v3189 = vpop.f32.mrf.mxu0
    %v3190 = vadd.f32 %v2991, %v3189
    %v3191 = vpop.f32.mrf.mxu0
    %v3192 = vadd.f32 %v2995, %v3191
    %3193 = vdwg.mxu0
    %3194 = vmatprep.subr.bf16.mxu0 0
    %3195 = vmatpush1.bf16.msra.mxu0 %v3106
    %3196 = vmatprep.subr.bf16.mxu0 0
    %3197 = vmatpush1.bf16.msra.mxu0 %v3103
    %3198 = vmatprep.subr.bf16.mxu0 0
    %3199 = vmatpush1.bf16.msra.mxu0 %v3100
    %3200 = vmatprep.subr.bf16.mxu0 0
    %3201 = vmatpush1.bf16.msra.mxu0 %v3097
    %3202 = vmatprep.subr.bf16.mxu0 0
    %3203 = vmatpush1.bf16.msra.mxu0 %v3094
    %3204 = vmatprep.subr.bf16.mxu0 0
    %3205 = vmatpush1.bf16.msra.mxu0 %v3091
    %3206 = vmatprep.subr.bf16.mxu0 0
    %3207 = vmatpush1.bf16.msra.mxu0 %v3088
    %3208 = vmatprep.subr.bf16.mxu0 0
    %3209 = vmatpush1.bf16.msra.mxu0 %v3085
    %3210 = vmatprep.subr.bf16.mxu0 0
    %3211 = vmatpush2.bf16.msra.mxu0 0
    %3212 = vmatprep.subr.bf16.mxu0 0
    %3213 = vmatpush2.bf16.msra.mxu0 0
    %3214 = vmatprep.subr.bf16.mxu0 0
    %3215 = vmatpush2.bf16.msra.mxu0 0
    %3216 = vmatprep.subr.bf16.mxu0 0
    %3217 = vmatpush2.bf16.msra.mxu0 0
    %3218 = vmatprep.subr.bf16.mxu0 0
    %3219 = vmatpush2.bf16.msra.mxu0 0
    %3220 = vmatprep.subr.bf16.mxu0 0
    %3221 = vmatpush2.bf16.msra.mxu0 0
    %3222 = vmatprep.subr.bf16.mxu0 0
    %3223 = vmatpush2.bf16.msra.mxu0 0
    %3224 = vmatprep.subr.bf16.mxu0 0
    %3225 = vmatpush2.bf16.msra.mxu0 0
    %3226 = vmatprep.mubr.bf16.mxu0 0
    %3227 = vmatmul.mubr.bf16.gmra.mxu0 %v2949
    %v3228 = vpop.f32.mrf.mxu0
    %v3229 = vadd.f32 %v2999, %v3228
    %v3230 = vpop.f32.mrf.mxu0
    %v3231 = vpop.f32.mrf.mxu0
    %v3232 = vadd.f32 %v2999, %v3231
    %v3233 = vpop.f32.mrf.mxu0
    %3234 = vmatprep.mubr.bf16.mxu0 0
    %3235 = vmatmul.mubr.bf16.gmra.mxu0 %v2950
    %v3236 = vpop.f32.mrf.mxu0
    %v3237 = vadd.f32 %v2999, %v3236
    %v3238 = vpop.f32.mrf.mxu0
    %v3239 = vpop.f32.mrf.mxu0
    %v3240 = vadd.f32 %v2999, %v3239
    %v3241 = vpop.f32.mrf.mxu0
    %3242 = vmatprep.mubr.bf16.mxu0 0
    %3243 = vmatmul.mubr.bf16.gmra.mxu0 %v2951
    %v3244 = vpop.f32.mrf.mxu0
    %v3245 = vadd.f32 %v2999, %v3244
    %v3246 = vpop.f32.mrf.mxu0
    %v3247 = vpop.f32.mrf.mxu0
    %v3248 = vadd.f32 %v2999, %v3247
    %v3249 = vpop.f32.mrf.mxu0
    %3250 = vdwg.mxu0
    %v3251 = vmul.f32 %v3166, 0.17677669
    %v3252 = vmul.f32 %v3170, 0.17677669
    %v3253 = vmul.f32 %v3176, 0.17677669
    %v3254 = vmul.f32 %v3180, 0.17677669
    %v3255 = vmul.f32 %v3186, 0.17677669
    %v3256 = vmul.f32 %v3190, 0.17677669
    %v3257 = vpack.c.bf16 %v3252, %v3251
    %v3258 = vpack.c.bf16 %v3254, %v3253
    %v3259 = vpack.c.bf16 %v3256, %v3255
    %v3260 = vpack.c.bf16 %v3172, %v3168
    %v3261 = vpack.c.bf16 %v3182, %v3178
    %v3262 = vpack.c.bf16 %v3192, %v3188
    %v3263 = vpack.c.bf16 %v3232, %v3229
    %v3264 = vpack.c.bf16 %v3240, %v3237
    %v3265 = vpack.c.bf16 %v3248, %v3245
    %v3267 = vsel %vm1128, %v3257, 0
    %v3270 = vsel %vm1128, %v3258, 0
    %v3273 = vsel %vm1128, %v3259, 0
    %v3276 = vsel %vm1128, %v3260, 0
    %v3279 = vsel %vm1128, %v3261, 0
    %v3282 = vsel %vm1128, %v3262, 0
    %3284 = vmatprep.subr.bf16.mxu0 0
    %3285 = vmatpush1.bf16.xpose.msra.mxu0 0
    %3286 = vmatprep.subr.bf16.mxu0 0
    %3287 = vmatpush1.bf16.xpose.msra.mxu0 0
    %3288 = vmatprep.subr.bf16.mxu0 0
    %3289 = vmatpush1.bf16.xpose.msra.mxu0 0
    %3290 = vmatprep.subr.bf16.mxu0 0
    %3291 = vmatpush1.bf16.xpose.msra.mxu0 0
    %3292 = vmatprep.subr.bf16.mxu0 0
    %3293 = vmatpush1.bf16.xpose.msra.mxu0 0
    %3294 = vmatprep.subr.bf16.mxu0 0
    %3295 = vmatpush1.bf16.xpose.msra.mxu0 %v3282
    %3296 = vmatprep.subr.bf16.mxu0 0
    %3297 = vmatpush1.bf16.xpose.msra.mxu0 %v3279
    %3298 = vmatprep.subr.bf16.mxu0 0
    %3299 = vmatpush1.bf16.xpose.msra.mxu0 %v3276
    %3300 = vmatprep.subr.bf16.mxu0 0
    %3301 = vmatpush2.bf16.xpose.msra.mxu0 0
    %3302 = vmatprep.subr.bf16.mxu0 0
    %3303 = vmatpush2.bf16.xpose.msra.mxu0 0
    %3304 = vmatprep.subr.bf16.mxu0 0
    %3305 = vmatpush2.bf16.xpose.msra.mxu0 0
    %3306 = vmatprep.subr.bf16.mxu0 0
    %3307 = vmatpush2.bf16.xpose.msra.mxu0 0
    %3308 = vmatprep.subr.bf16.mxu0 0
    %3309 = vmatpush2.bf16.xpose.msra.mxu0 0
    %3310 = vmatprep.subr.bf16.mxu0 0
    %3311 = vmatpush2.bf16.xpose.msra.mxu0 0
    %3312 = vmatprep.subr.bf16.mxu0 0
    %3313 = vmatpush2.bf16.xpose.msra.mxu0 0
    %3314 = vmatprep.subr.bf16.mxu0 0
    %3315 = vmatpush2.bf16.xpose.msra.mxu0 0
    %3316 = vmatprep.mubr.bf16.mxu0 0
    %3317 = vmatmul.mubr.bf16.gmra.mxu0 %v3267
    %v3318 = vpop.f32.mrf.mxu0
    %v3319 = vadd.f32 %v714, %v3318
    %v3320 = vpop.f32.mrf.mxu0
    %v3321 = vpop.f32.mrf.mxu0
    %v3322 = vadd.f32 %v715, %v3321
    %v3323 = vpop.f32.mrf.mxu0
    %3324 = vmatprep.mubr.bf16.mxu0 0
    %3325 = vmatmul.mubr.bf16.gmra.mxu0 %v3270
    %v3326 = vpop.f32.mrf.mxu0
    %v3327 = vadd.f32 %v716, %v3326
    %v3328 = vpop.f32.mrf.mxu0
    %v3329 = vpop.f32.mrf.mxu0
    %v3330 = vadd.f32 %v717, %v3329
    %v3331 = vpop.f32.mrf.mxu0
    %3332 = vmatprep.mubr.bf16.mxu0 0
    %3333 = vmatmul.mubr.bf16.gmra.mxu0 %v3273
    %v3334 = vpop.f32.mrf.mxu0
    %v3335 = vadd.f32 %v718, %v3334
    %v3336 = vpop.f32.mrf.mxu0
    %v3337 = vpop.f32.mrf.mxu0
    %v3338 = vadd.f32 %v719, %v3337
    %v3339 = vpop.f32.mrf.mxu0
    %3340 = vdwg.mxu0
    %v3341 = vsel %vm1204, %v3319, -inf
    %3342 = vmax.xlane.f32.xlu0 %v3341
    %v3343 = vpop.xlane.xlu0 %3342
    %v3344 = vsel %vm1204, %v3322, -inf
    %3345 = vmax.xlane.f32.xlu0 %v3344
    %v3346 = vpop.xlane.xlu0 %3345
    %v3347 = vsel %vm1204, %v3327, -inf
    %3348 = vmax.xlane.f32.xlu0 %v3347
    %v3349 = vpop.xlane.xlu0 %3348
    %v3350 = vsel %vm1204, %v3330, -inf
    %3351 = vmax.xlane.f32.xlu0 %v3350
    %v3352 = vpop.xlane.xlu0 %3351
    %v3353 = vsel %vm1204, %v3335, -inf
    %3354 = vmax.xlane.f32.xlu0 %v3353
    %v3355 = vpop.xlane.xlu0 %3354
    %v3356 = vsel %vm1204, %v3338, -inf
    %3357 = vmax.xlane.f32.xlu0 %v3356
    %v3358 = vpop.xlane.xlu0 %3357
    %v3359 = vsub.f32 %v3319, %v3343
    %v3360 = vsub.f32 %v3322, %v3346
    %v3361 = vsub.f32 %v3327, %v3349
    %v3362 = vsub.f32 %v3330, %v3352
    %v3363 = vsub.f32 %v3335, %v3355
    %v3364 = vsub.f32 %v3338, %v3358
    %v3365 = vmul.f32 %v3359, 1.442695
    %v3366 = vpow.pop %v3365
    %v3367 = vmul.f32 %v3360, 1.442695
    %v3368 = vpow.pop %v3367
    %v3369 = vmul.f32 %v3361, 1.442695
    %v3370 = vpow.pop %v3369
    %v3371 = vmul.f32 %v3362, 1.442695
    %v3372 = vpow.pop %v3371
    %v3373 = vmul.f32 %v3363, 1.442695
    %v3374 = vpow.pop %v3373
    %v3375 = vmul.f32 %v3364, 1.442695
    %v3376 = vpow.pop %v3375
    %v3377 = vsel %vm1204, %v3366, 0.0
    %3378 = vadd.xlane.f32.xlu0 %v3377
    %v3379 = vpop.xlane.xlu0 %3378
    %v3380 = vsel %vm1204, %v3368, 0.0
    %3381 = vadd.xlane.f32.xlu0 %v3380
    %v3382 = vpop.xlane.xlu0 %3381
    %v3383 = vsel %vm1204, %v3370, 0.0
    %3384 = vadd.xlane.f32.xlu0 %v3383
    %v3385 = vpop.xlane.xlu0 %3384
    %v3386 = vsel %vm1204, %v3372, 0.0
    %3387 = vadd.xlane.f32.xlu0 %v3386
    %v3388 = vpop.xlane.xlu0 %3387
    %v3389 = vsel %vm1204, %v3374, 0.0
    %3390 = vadd.xlane.f32.xlu0 %v3389
    %v3391 = vpop.xlane.xlu0 %3390
    %v3392 = vsel %vm1204, %v3376, 0.0
    %3393 = vadd.xlane.f32.xlu0 %v3392
    %v3394 = vpop.xlane.xlu0 %3393
    %v3395 = vrcp.pop %v3379
    %v3396 = vrcp.pop %v3382
    %v3397 = vrcp.pop %v3385
    %v3398 = vrcp.pop %v3388
    %v3399 = vrcp.pop %v3391
    %v3400 = vrcp.pop %v3394
    %v3401 = vmul.f32 %v3366, %v3395
    %v3402 = vmul.f32 %v3368, %v3396
    %v3403 = vmul.f32 %v3370, %v3397
    %v3404 = vmul.f32 %v3372, %v3398
    %v3405 = vmul.f32 %v3374, %v3399
    %v3406 = vmul.f32 %v3376, %v3400
    %v3407 = vpack.c.bf16 %v3402, %v3401
    %v3408 = vpack.c.bf16 %v3404, %v3403
    %v3409 = vpack.c.bf16 %v3406, %v3405
    %v3411 = vsel %vm1204, %v3407, 0
    %v3414 = vsel %vm1204, %v3408, 0
    %v3417 = vsel %vm1204, %v3409, 0
    %3419 = vmatprep.subr.bf16.mxu0 0
    %3420 = vmatpush1.bf16.msra.mxu0 0
    %3421 = vmatprep.subr.bf16.mxu0 0
    %3422 = vmatpush1.bf16.msra.mxu0 0
    %3423 = vmatprep.subr.bf16.mxu0 0
    %3424 = vmatpush1.bf16.msra.mxu0 0
    %3425 = vmatprep.subr.bf16.mxu0 0
    %3426 = vmatpush1.bf16.msra.mxu0 0
    %3427 = vmatprep.subr.bf16.mxu0 0
    %3428 = vmatpush1.bf16.msra.mxu0 0
    %3429 = vmatprep.subr.bf16.mxu0 0
    %3430 = vmatpush1.bf16.msra.mxu0 %v3265
    %3431 = vmatprep.subr.bf16.mxu0 0
    %3432 = vmatpush1.bf16.msra.mxu0 %v3264
    %3433 = vmatprep.subr.bf16.mxu0 0
    %3434 = vmatpush1.bf16.msra.mxu0 %v3263
    %3435 = vmatprep.subr.bf16.mxu0 0
    %3436 = vmatpush2.bf16.msra.mxu0 0
    %3437 = vmatprep.subr.bf16.mxu0 0
    %3438 = vmatpush2.bf16.msra.mxu0 0
    %3439 = vmatprep.subr.bf16.mxu0 0
    %3440 = vmatpush2.bf16.msra.mxu0 0
    %3441 = vmatprep.subr.bf16.mxu0 0
    %3442 = vmatpush2.bf16.msra.mxu0 0
    %3443 = vmatprep.subr.bf16.mxu0 0
    %3444 = vmatpush2.bf16.msra.mxu0 0
    %3445 = vmatprep.subr.bf16.mxu0 0
    %3446 = vmatpush2.bf16.msra.mxu0 0
    %3447 = vmatprep.subr.bf16.mxu0 0
    %3448 = vmatpush2.bf16.msra.mxu0 0
    %3449 = vmatprep.subr.bf16.mxu0 0
    %3450 = vmatpush2.bf16.msra.mxu0 0
    %3451 = vmatprep.mubr.bf16.mxu0 0
    %3452 = vmatmul.mubr.bf16.gmra.mxu0 %v3411
    %v3453 = vpop.f32.mrf.mxu0
    %v3454 = vadd.f32 0.0, %v3453
    %v3455 = vpop.f32.mrf.mxu0
    %v3456 = vpop.f32.mrf.mxu0
    %v3457 = vadd.f32 0.0, %v3456
    %v3458 = vpop.f32.mrf.mxu0
    %3459 = vmatprep.mubr.bf16.mxu0 0
    %3460 = vmatmul.mubr.bf16.gmra.mxu0 %v3414
    %v3461 = vpop.f32.mrf.mxu0
    %v3462 = vadd.f32 0.0, %v3461
    %v3463 = vpop.f32.mrf.mxu0
    %v3464 = vpop.f32.mrf.mxu0
    %v3465 = vadd.f32 0.0, %v3464
    %v3466 = vpop.f32.mrf.mxu0
    %3467 = vmatprep.mubr.bf16.mxu0 0
    %3468 = vmatmul.mubr.bf16.gmra.mxu0 %v3417
    %v3469 = vpop.f32.mrf.mxu0
    %v3470 = vadd.f32 0.0, %v3469
    %v3471 = vpop.f32.mrf.mxu0
    %v3472 = vpop.f32.mrf.mxu0
    %v3473 = vadd.f32 0.0, %v3472
    %v3474 = vpop.f32.mrf.mxu0
    %3475 = vdwg.mxu0
    %3479 = vrot.lane.b32.xlu0 %v3257, 96
    %v3480 = vpop.permute.xlu0 %3479
    %3481 = vrot.lane.b32.xlu0 %v3258, 96
    %v3482 = vpop.permute.xlu0 %3481
    %3483 = vrot.lane.b32.xlu0 %v3259, 96
    %v3484 = vpop.permute.xlu0 %3483
    %3488 = vrot.lane.b32.xlu0 %v3260, 96
    %v3489 = vpop.permute.xlu0 %3488
    %3490 = vrot.lane.b32.xlu0 %v3261, 96
    %v3491 = vpop.permute.xlu0 %3490
    %3492 = vrot.lane.b32.xlu0 %v3262, 96
    %v3493 = vpop.permute.xlu0 %3492
    %v3495 = vsel %vm1128, %v3480, 0
    %v3498 = vsel %vm1128, %v3482, 0
    %v3501 = vsel %vm1128, %v3484, 0
    %v3504 = vsel %vm1128, %v3489, 0
    %v3507 = vsel %vm1128, %v3491, 0
    %v3510 = vsel %vm1128, %v3493, 0
    %3512 = vmatprep.subr.bf16.mxu0 0
    %3513 = vmatpush1.bf16.xpose.msra.mxu0 0
    %3514 = vmatprep.subr.bf16.mxu0 0
    %3515 = vmatpush1.bf16.xpose.msra.mxu0 0
    %3516 = vmatprep.subr.bf16.mxu0 0
    %3517 = vmatpush1.bf16.xpose.msra.mxu0 0
    %3518 = vmatprep.subr.bf16.mxu0 0
    %3519 = vmatpush1.bf16.xpose.msra.mxu0 0
    %3520 = vmatprep.subr.bf16.mxu0 0
    %3521 = vmatpush1.bf16.xpose.msra.mxu0 0
    %3522 = vmatprep.subr.bf16.mxu0 0
    %3523 = vmatpush1.bf16.xpose.msra.mxu0 %v3510
    %3524 = vmatprep.subr.bf16.mxu0 0
    %3525 = vmatpush1.bf16.xpose.msra.mxu0 %v3507
    %3526 = vmatprep.subr.bf16.mxu0 0
    %3527 = vmatpush1.bf16.xpose.msra.mxu0 %v3504
    %3528 = vmatprep.subr.bf16.mxu0 0
    %3529 = vmatpush2.bf16.xpose.msra.mxu0 0
    %3530 = vmatprep.subr.bf16.mxu0 0
    %3531 = vmatpush2.bf16.xpose.msra.mxu0 0
    %3532 = vmatprep.subr.bf16.mxu0 0
    %3533 = vmatpush2.bf16.xpose.msra.mxu0 0
    %3534 = vmatprep.subr.bf16.mxu0 0
    %3535 = vmatpush2.bf16.xpose.msra.mxu0 0
    %3536 = vmatprep.subr.bf16.mxu0 0
    %3537 = vmatpush2.bf16.xpose.msra.mxu0 0
    %3538 = vmatprep.subr.bf16.mxu0 0
    %3539 = vmatpush2.bf16.xpose.msra.mxu0 0
    %3540 = vmatprep.subr.bf16.mxu0 0
    %3541 = vmatpush2.bf16.xpose.msra.mxu0 0
    %3542 = vmatprep.subr.bf16.mxu0 0
    %3543 = vmatpush2.bf16.xpose.msra.mxu0 0
    %3544 = vmatprep.mubr.bf16.mxu0 0
    %3545 = vmatmul.mubr.bf16.gmra.mxu0 %v3495
    %v3546 = vpop.f32.mrf.mxu0
    %v3547 = vadd.f32 %v714, %v3546
    %v3548 = vpop.f32.mrf.mxu0
    %v3549 = vpop.f32.mrf.mxu0
    %v3550 = vadd.f32 %v715, %v3549
    %v3551 = vpop.f32.mrf.mxu0
    %3552 = vmatprep.mubr.bf16.mxu0 0
    %3553 = vmatmul.mubr.bf16.gmra.mxu0 %v3498
    %v3554 = vpop.f32.mrf.mxu0
    %v3555 = vadd.f32 %v716, %v3554
    %v3556 = vpop.f32.mrf.mxu0
    %v3557 = vpop.f32.mrf.mxu0
    %v3558 = vadd.f32 %v717, %v3557
    %v3559 = vpop.f32.mrf.mxu0
    %3560 = vmatprep.mubr.bf16.mxu0 0
    %3561 = vmatmul.mubr.bf16.gmra.mxu0 %v3501
    %v3562 = vpop.f32.mrf.mxu0
    %v3563 = vadd.f32 %v718, %v3562
    %v3564 = vpop.f32.mrf.mxu0
    %v3565 = vpop.f32.mrf.mxu0
    %v3566 = vadd.f32 %v719, %v3565
    %v3567 = vpop.f32.mrf.mxu0
    %3568 = vdwg.mxu0
    %v3569 = vsel %vm1204, %v3547, -inf
    %3570 = vmax.xlane.f32.xlu0 %v3569
    %v3571 = vpop.xlane.xlu0 %3570
    %v3572 = vsel %vm1204, %v3550, -inf
    %3573 = vmax.xlane.f32.xlu0 %v3572
    %v3574 = vpop.xlane.xlu0 %3573
    %v3575 = vsel %vm1204, %v3555, -inf
    %3576 = vmax.xlane.f32.xlu0 %v3575
    %v3577 = vpop.xlane.xlu0 %3576
    %v3578 = vsel %vm1204, %v3558, -inf
    %3579 = vmax.xlane.f32.xlu0 %v3578
    %v3580 = vpop.xlane.xlu0 %3579
    %v3581 = vsel %vm1204, %v3563, -inf
    %3582 = vmax.xlane.f32.xlu0 %v3581
    %v3583 = vpop.xlane.xlu0 %3582
    %v3584 = vsel %vm1204, %v3566, -inf
    %3585 = vmax.xlane.f32.xlu0 %v3584
    %v3586 = vpop.xlane.xlu0 %3585
    %v3587 = vsub.f32 %v3547, %v3571
    %v3588 = vsub.f32 %v3550, %v3574
    %v3589 = vsub.f32 %v3555, %v3577
    %v3590 = vsub.f32 %v3558, %v3580
    %v3591 = vsub.f32 %v3563, %v3583
    %v3592 = vsub.f32 %v3566, %v3586
    %v3593 = vmul.f32 %v3587, 1.442695
    %v3594 = vpow.pop %v3593
    %v3595 = vmul.f32 %v3588, 1.442695
    %v3596 = vpow.pop %v3595
    %v3597 = vmul.f32 %v3589, 1.442695
    %v3598 = vpow.pop %v3597
    %v3599 = vmul.f32 %v3590, 1.442695
    %v3600 = vpow.pop %v3599
    %v3601 = vmul.f32 %v3591, 1.442695
    %v3602 = vpow.pop %v3601
    %v3603 = vmul.f32 %v3592, 1.442695
    %v3604 = vpow.pop %v3603
    %v3605 = vsel %vm1204, %v3594, 0.0
    %3606 = vadd.xlane.f32.xlu0 %v3605
    %v3607 = vpop.xlane.xlu0 %3606
    %v3608 = vsel %vm1204, %v3596, 0.0
    %3609 = vadd.xlane.f32.xlu0 %v3608
    %v3610 = vpop.xlane.xlu0 %3609
    %v3611 = vsel %vm1204, %v3598, 0.0
    %3612 = vadd.xlane.f32.xlu0 %v3611
    %v3613 = vpop.xlane.xlu0 %3612
    %v3614 = vsel %vm1204, %v3600, 0.0
    %3615 = vadd.xlane.f32.xlu0 %v3614
    %v3616 = vpop.xlane.xlu0 %3615
    %v3617 = vsel %vm1204, %v3602, 0.0
    %3618 = vadd.xlane.f32.xlu0 %v3617
    %v3619 = vpop.xlane.xlu0 %3618
    %v3620 = vsel %vm1204, %v3604, 0.0
    %3621 = vadd.xlane.f32.xlu0 %v3620
    %v3622 = vpop.xlane.xlu0 %3621
    %v3623 = vrcp.pop %v3607
    %v3624 = vrcp.pop %v3610
    %v3625 = vrcp.pop %v3613
    %v3626 = vrcp.pop %v3616
    %v3627 = vrcp.pop %v3619
    %v3628 = vrcp.pop %v3622
    %v3629 = vmul.f32 %v3594, %v3623
    %v3630 = vmul.f32 %v3596, %v3624
    %v3631 = vmul.f32 %v3598, %v3625
    %v3632 = vmul.f32 %v3600, %v3626
    %v3633 = vmul.f32 %v3602, %v3627
    %v3634 = vmul.f32 %v3604, %v3628
    %v3635 = vpack.c.bf16 %v3630, %v3629
    %v3636 = vpack.c.bf16 %v3632, %v3631
    %v3637 = vpack.c.bf16 %v3634, %v3633
    %3641 = vrot.lane.b32.xlu0 %v3263, 96
    %v3642 = vpop.permute.xlu0 %3641
    %3643 = vrot.lane.b32.xlu0 %v3264, 96
    %v3644 = vpop.permute.xlu0 %3643
    %3645 = vrot.lane.b32.xlu0 %v3265, 96
    %v3646 = vpop.permute.xlu0 %3645
    %v3651 = vsel %vm1204, %v3635, 0
    %v3654 = vsel %vm1204, %v3636, 0
    %v3657 = vsel %vm1204, %v3637, 0
    %3659 = vmatprep.subr.bf16.mxu0 0
    %3660 = vmatpush1.bf16.msra.mxu0 0
    %3661 = vmatprep.subr.bf16.mxu0 0
    %3662 = vmatpush1.bf16.msra.mxu0 0
    %3663 = vmatprep.subr.bf16.mxu0 0
    %3664 = vmatpush1.bf16.msra.mxu0 0
    %3665 = vmatprep.subr.bf16.mxu0 0
    %3666 = vmatpush1.bf16.msra.mxu0 0
    %3667 = vmatprep.subr.bf16.mxu0 0
    %3668 = vmatpush1.bf16.msra.mxu0 0
    %3669 = vmatprep.subr.bf16.mxu0 0
    %3670 = vmatpush1.bf16.msra.mxu0 %v3646
    %3671 = vmatprep.subr.bf16.mxu0 0
    %3672 = vmatpush1.bf16.msra.mxu0 %v3644
    %3673 = vmatprep.subr.bf16.mxu0 0
    %3674 = vmatpush1.bf16.msra.mxu0 %v3642
    %3675 = vmatprep.subr.bf16.mxu0 0
    %3676 = vmatpush2.bf16.msra.mxu0 0
    %3677 = vmatprep.subr.bf16.mxu0 0
    %3678 = vmatpush2.bf16.msra.mxu0 0
    %3679 = vmatprep.subr.bf16.mxu0 0
    %3680 = vmatpush2.bf16.msra.mxu0 0
    %3681 = vmatprep.subr.bf16.mxu0 0
    %3682 = vmatpush2.bf16.msra.mxu0 0
    %3683 = vmatprep.subr.bf16.mxu0 0
    %3684 = vmatpush2.bf16.msra.mxu0 0
    %3685 = vmatprep.subr.bf16.mxu0 0
    %3686 = vmatpush2.bf16.msra.mxu0 0
    %3687 = vmatprep.subr.bf16.mxu0 0
    %3688 = vmatpush2.bf16.msra.mxu0 0
    %3689 = vmatprep.subr.bf16.mxu0 0
    %3690 = vmatpush2.bf16.msra.mxu0 0
    %3691 = vmatprep.mubr.bf16.mxu0 0
    %3692 = vmatmul.mubr.bf16.gmra.mxu0 %v3651
    %v3693 = vpop.f32.mrf.mxu0
    %v3694 = vadd.f32 0.0, %v3693
    %v3695 = vpop.f32.mrf.mxu0
    %v3696 = vpop.f32.mrf.mxu0
    %v3697 = vadd.f32 0.0, %v3696
    %v3698 = vpop.f32.mrf.mxu0
    %3699 = vmatprep.mubr.bf16.mxu0 0
    %3700 = vmatmul.mubr.bf16.gmra.mxu0 %v3654
    %v3701 = vpop.f32.mrf.mxu0
    %v3702 = vadd.f32 0.0, %v3701
    %v3703 = vpop.f32.mrf.mxu0
    %v3704 = vpop.f32.mrf.mxu0
    %v3705 = vadd.f32 0.0, %v3704
    %v3706 = vpop.f32.mrf.mxu0
    %3707 = vmatprep.mubr.bf16.mxu0 0
    %3708 = vmatmul.mubr.bf16.gmra.mxu0 %v3657
    %v3709 = vpop.f32.mrf.mxu0
    %v3710 = vadd.f32 0.0, %v3709
    %v3711 = vpop.f32.mrf.mxu0
    %v3712 = vpop.f32.mrf.mxu0
    %v3713 = vadd.f32 0.0, %v3712
    %v3714 = vpop.f32.mrf.mxu0
    %3715 = vdwg.mxu0
    %3716 = vrot.lane.b32.xlu0 %v3257, 64
    %v3717 = vpop.permute.xlu0 %3716
    %3718 = vrot.lane.b32.xlu0 %v3258, 64
    %v3719 = vpop.permute.xlu0 %3718
    %3720 = vrot.lane.b32.xlu0 %v3259, 64
    %v3721 = vpop.permute.xlu0 %3720
    %3722 = vrot.lane.b32.xlu0 %v3260, 64
    %v3723 = vpop.permute.xlu0 %3722
    %3724 = vrot.lane.b32.xlu0 %v3261, 64
    %v3725 = vpop.permute.xlu0 %3724
    %3726 = vrot.lane.b32.xlu0 %v3262, 64
    %v3727 = vpop.permute.xlu0 %3726
    %v3729 = vsel %vm1128, %v3717, 0
    %v3732 = vsel %vm1128, %v3719, 0
    %v3735 = vsel %vm1128, %v3721, 0
    %v3738 = vsel %vm1128, %v3723, 0
    %v3741 = vsel %vm1128, %v3725, 0
    %v3744 = vsel %vm1128, %v3727, 0
    %3746 = vmatprep.subr.bf16.mxu0 0
    %3747 = vmatpush1.bf16.xpose.msra.mxu0 0
    %3748 = vmatprep.subr.bf16.mxu0 0
    %3749 = vmatpush1.bf16.xpose.msra.mxu0 0
    %3750 = vmatprep.subr.bf16.mxu0 0
    %3751 = vmatpush1.bf16.xpose.msra.mxu0 0
    %3752 = vmatprep.subr.bf16.mxu0 0
    %3753 = vmatpush1.bf16.xpose.msra.mxu0 0
    %3754 = vmatprep.subr.bf16.mxu0 0
    %3755 = vmatpush1.bf16.xpose.msra.mxu0 0
    %3756 = vmatprep.subr.bf16.mxu0 0
    %3757 = vmatpush1.bf16.xpose.msra.mxu0 %v3744
    %3758 = vmatprep.subr.bf16.mxu0 0
    %3759 = vmatpush1.bf16.xpose.msra.mxu0 %v3741
    %3760 = vmatprep.subr.bf16.mxu0 0
    %3761 = vmatpush1.bf16.xpose.msra.mxu0 %v3738
    %3762 = vmatprep.subr.bf16.mxu0 0
    %3763 = vmatpush2.bf16.xpose.msra.mxu0 0
    %3764 = vmatprep.subr.bf16.mxu0 0
    %3765 = vmatpush2.bf16.xpose.msra.mxu0 0
    %3766 = vmatprep.subr.bf16.mxu0 0
    %3767 = vmatpush2.bf16.xpose.msra.mxu0 0
    %3768 = vmatprep.subr.bf16.mxu0 0
    %3769 = vmatpush2.bf16.xpose.msra.mxu0 0
    %3770 = vmatprep.subr.bf16.mxu0 0
    %3771 = vmatpush2.bf16.xpose.msra.mxu0 0
    %3772 = vmatprep.subr.bf16.mxu0 0
    %3773 = vmatpush2.bf16.xpose.msra.mxu0 0
    %3774 = vmatprep.subr.bf16.mxu0 0
    %3775 = vmatpush2.bf16.xpose.msra.mxu0 0
    %3776 = vmatprep.subr.bf16.mxu0 0
    %3777 = vmatpush2.bf16.xpose.msra.mxu0 0
    %3778 = vmatprep.mubr.bf16.mxu0 0
    %3779 = vmatmul.mubr.bf16.gmra.mxu0 %v3729
    %v3780 = vpop.f32.mrf.mxu0
    %v3781 = vadd.f32 %v714, %v3780
    %v3782 = vpop.f32.mrf.mxu0
    %v3783 = vpop.f32.mrf.mxu0
    %v3784 = vadd.f32 %v715, %v3783
    %v3785 = vpop.f32.mrf.mxu0
    %3786 = vmatprep.mubr.bf16.mxu0 0
    %3787 = vmatmul.mubr.bf16.gmra.mxu0 %v3732
    %v3788 = vpop.f32.mrf.mxu0
    %v3789 = vadd.f32 %v716, %v3788
    %v3790 = vpop.f32.mrf.mxu0
    %v3791 = vpop.f32.mrf.mxu0
    %v3792 = vadd.f32 %v717, %v3791
    %v3793 = vpop.f32.mrf.mxu0
    %3794 = vmatprep.mubr.bf16.mxu0 0
    %3795 = vmatmul.mubr.bf16.gmra.mxu0 %v3735
    %v3796 = vpop.f32.mrf.mxu0
    %v3797 = vadd.f32 %v718, %v3796
    %v3798 = vpop.f32.mrf.mxu0
    %v3799 = vpop.f32.mrf.mxu0
    %v3800 = vadd.f32 %v719, %v3799
    %v3801 = vpop.f32.mrf.mxu0
    %3802 = vdwg.mxu0
    %v3803 = vsel %vm1204, %v3781, -inf
    %3804 = vmax.xlane.f32.xlu0 %v3803
    %v3805 = vpop.xlane.xlu0 %3804
    %v3806 = vsel %vm1204, %v3784, -inf
    %3807 = vmax.xlane.f32.xlu0 %v3806
    %v3808 = vpop.xlane.xlu0 %3807
    %v3809 = vsel %vm1204, %v3789, -inf
    %3810 = vmax.xlane.f32.xlu0 %v3809
    %v3811 = vpop.xlane.xlu0 %3810
    %v3812 = vsel %vm1204, %v3792, -inf
    %3813 = vmax.xlane.f32.xlu0 %v3812
    %v3814 = vpop.xlane.xlu0 %3813
    %v3815 = vsel %vm1204, %v3797, -inf
    %3816 = vmax.xlane.f32.xlu0 %v3815
    %v3817 = vpop.xlane.xlu0 %3816
    %v3818 = vsel %vm1204, %v3800, -inf
    %3819 = vmax.xlane.f32.xlu0 %v3818
    %v3820 = vpop.xlane.xlu0 %3819
    %v3821 = vsub.f32 %v3781, %v3805
    %v3822 = vsub.f32 %v3784, %v3808
    %v3823 = vsub.f32 %v3789, %v3811
    %v3824 = vsub.f32 %v3792, %v3814
    %v3825 = vsub.f32 %v3797, %v3817
    %v3826 = vsub.f32 %v3800, %v3820
    %v3827 = vmul.f32 %v3821, 1.442695
    %v3828 = vpow.pop %v3827
    %v3829 = vmul.f32 %v3822, 1.442695
    %v3830 = vpow.pop %v3829
    %v3831 = vmul.f32 %v3823, 1.442695
    %v3832 = vpow.pop %v3831
    %v3833 = vmul.f32 %v3824, 1.442695
    %v3834 = vpow.pop %v3833
    %v3835 = vmul.f32 %v3825, 1.442695
    %v3836 = vpow.pop %v3835
    %v3837 = vmul.f32 %v3826, 1.442695
    %v3838 = vpow.pop %v3837
    %v3839 = vsel %vm1204, %v3828, 0.0
    %3840 = vadd.xlane.f32.xlu0 %v3839
    %v3841 = vpop.xlane.xlu0 %3840
    %v3842 = vsel %vm1204, %v3830, 0.0
    %3843 = vadd.xlane.f32.xlu0 %v3842
    %v3844 = vpop.xlane.xlu0 %3843
    %v3845 = vsel %vm1204, %v3832, 0.0
    %3846 = vadd.xlane.f32.xlu0 %v3845
    %v3847 = vpop.xlane.xlu0 %3846
    %v3848 = vsel %vm1204, %v3834, 0.0
    %3849 = vadd.xlane.f32.xlu0 %v3848
    %v3850 = vpop.xlane.xlu0 %3849
    %v3851 = vsel %vm1204, %v3836, 0.0
    %3852 = vadd.xlane.f32.xlu0 %v3851
    %v3853 = vpop.xlane.xlu0 %3852
    %v3854 = vsel %vm1204, %v3838, 0.0
    %3855 = vadd.xlane.f32.xlu0 %v3854
    %v3856 = vpop.xlane.xlu0 %3855
    %v3857 = vrcp.pop %v3841
    %v3858 = vrcp.pop %v3844
    %v3859 = vrcp.pop %v3847
    %v3860 = vrcp.pop %v3850
    %v3861 = vrcp.pop %v3853
    %v3862 = vrcp.pop %v3856
    %v3863 = vmul.f32 %v3828, %v3857
    %v3864 = vmul.f32 %v3830, %v3858
    %v3865 = vmul.f32 %v3832, %v3859
    %v3866 = vmul.f32 %v3834, %v3860
    %v3867 = vmul.f32 %v3836, %v3861
    %v3868 = vmul.f32 %v3838, %v3862
    %v3869 = vpack.c.bf16 %v3864, %v3863
    %v3870 = vpack.c.bf16 %v3866, %v3865
    %v3871 = vpack.c.bf16 %v3868, %v3867
    %3872 = vrot.lane.b32.xlu0 %v3263, 64
    %v3873 = vpop.permute.xlu0 %3872
    %3874 = vrot.lane.b32.xlu0 %v3264, 64
    %v3875 = vpop.permute.xlu0 %3874
    %3876 = vrot.lane.b32.xlu0 %v3265, 64
    %v3877 = vpop.permute.xlu0 %3876
    %v3882 = vsel %vm1204, %v3869, 0
    %v3885 = vsel %vm1204, %v3870, 0
    %v3888 = vsel %vm1204, %v3871, 0
    %3890 = vmatprep.subr.bf16.mxu0 0
    %3891 = vmatpush1.bf16.msra.mxu0 0
    %3892 = vmatprep.subr.bf16.mxu0 0
    %3893 = vmatpush1.bf16.msra.mxu0 0
    %3894 = vmatprep.subr.bf16.mxu0 0
    %3895 = vmatpush1.bf16.msra.mxu0 0
    %3896 = vmatprep.subr.bf16.mxu0 0
    %3897 = vmatpush1.bf16.msra.mxu0 0
    %3898 = vmatprep.subr.bf16.mxu0 0
    %3899 = vmatpush1.bf16.msra.mxu0 0
    %3900 = vmatprep.subr.bf16.mxu0 0
    %3901 = vmatpush1.bf16.msra.mxu0 %v3877
    %3902 = vmatprep.subr.bf16.mxu0 0
    %3903 = vmatpush1.bf16.msra.mxu0 %v3875
    %3904 = vmatprep.subr.bf16.mxu0 0
    %3905 = vmatpush1.bf16.msra.mxu0 %v3873
    %3906 = vmatprep.subr.bf16.mxu0 0
    %3907 = vmatpush2.bf16.msra.mxu0 0
    %3908 = vmatprep.subr.bf16.mxu0 0
    %3909 = vmatpush2.bf16.msra.mxu0 0
    %3910 = vmatprep.subr.bf16.mxu0 0
    %3911 = vmatpush2.bf16.msra.mxu0 0
    %3912 = vmatprep.subr.bf16.mxu0 0
    %3913 = vmatpush2.bf16.msra.mxu0 0
    %3914 = vmatprep.subr.bf16.mxu0 0
    %3915 = vmatpush2.bf16.msra.mxu0 0
    %3916 = vmatprep.subr.bf16.mxu0 0
    %3917 = vmatpush2.bf16.msra.mxu0 0
    %3918 = vmatprep.subr.bf16.mxu0 0
    %3919 = vmatpush2.bf16.msra.mxu0 0
    %3920 = vmatprep.subr.bf16.mxu0 0
    %3921 = vmatpush2.bf16.msra.mxu0 0
    %3922 = vmatprep.mubr.bf16.mxu0 0
    %3923 = vmatmul.mubr.bf16.gmra.mxu0 %v3882
    %v3924 = vpop.f32.mrf.mxu0
    %v3925 = vadd.f32 0.0, %v3924
    %v3926 = vpop.f32.mrf.mxu0
    %v3927 = vpop.f32.mrf.mxu0
    %v3928 = vadd.f32 0.0, %v3927
    %v3929 = vpop.f32.mrf.mxu0
    %3930 = vmatprep.mubr.bf16.mxu0 0
    %3931 = vmatmul.mubr.bf16.gmra.mxu0 %v3885
    %v3932 = vpop.f32.mrf.mxu0
    %v3933 = vadd.f32 0.0, %v3932
    %v3934 = vpop.f32.mrf.mxu0
    %v3935 = vpop.f32.mrf.mxu0
    %v3936 = vadd.f32 0.0, %v3935
    %v3937 = vpop.f32.mrf.mxu0
    %3938 = vmatprep.mubr.bf16.mxu0 0
    %3939 = vmatmul.mubr.bf16.gmra.mxu0 %v3888
    %v3940 = vpop.f32.mrf.mxu0
    %v3941 = vadd.f32 0.0, %v3940
    %v3942 = vpop.f32.mrf.mxu0
    %v3943 = vpop.f32.mrf.mxu0
    %v3944 = vadd.f32 0.0, %v3943
    %v3945 = vpop.f32.mrf.mxu0
    %3946 = vdwg.mxu0
    %3947 = vrot.lane.b32.xlu0 %v3257, 32
    %v3948 = vpop.permute.xlu0 %3947
    %3949 = vrot.lane.b32.xlu0 %v3258, 32
    %v3950 = vpop.permute.xlu0 %3949
    %3951 = vrot.lane.b32.xlu0 %v3259, 32
    %v3952 = vpop.permute.xlu0 %3951
    %3953 = vrot.lane.b32.xlu0 %v3260, 32
    %v3954 = vpop.permute.xlu0 %3953
    %3955 = vrot.lane.b32.xlu0 %v3261, 32
    %v3956 = vpop.permute.xlu0 %3955
    %3957 = vrot.lane.b32.xlu0 %v3262, 32
    %v3958 = vpop.permute.xlu0 %3957
    %v3960 = vsel %vm1128, %v3948, 0
    %v3963 = vsel %vm1128, %v3950, 0
    %v3966 = vsel %vm1128, %v3952, 0
    %v3969 = vsel %vm1128, %v3954, 0
    %v3972 = vsel %vm1128, %v3956, 0
    %v3975 = vsel %vm1128, %v3958, 0
    %3977 = vmatprep.subr.bf16.mxu0 0
    %3978 = vmatpush1.bf16.xpose.msra.mxu0 0
    %3979 = vmatprep.subr.bf16.mxu0 0
    %3980 = vmatpush1.bf16.xpose.msra.mxu0 0
    %3981 = vmatprep.subr.bf16.mxu0 0
    %3982 = vmatpush1.bf16.xpose.msra.mxu0 0
    %3983 = vmatprep.subr.bf16.mxu0 0
    %3984 = vmatpush1.bf16.xpose.msra.mxu0 0
    %3985 = vmatprep.subr.bf16.mxu0 0
    %3986 = vmatpush1.bf16.xpose.msra.mxu0 0
    %3987 = vmatprep.subr.bf16.mxu0 0
    %3988 = vmatpush1.bf16.xpose.msra.mxu0 %v3975
    %3989 = vmatprep.subr.bf16.mxu0 0
    %3990 = vmatpush1.bf16.xpose.msra.mxu0 %v3972
    %3991 = vmatprep.subr.bf16.mxu0 0
    %3992 = vmatpush1.bf16.xpose.msra.mxu0 %v3969
    %3993 = vmatprep.subr.bf16.mxu0 0
    %3994 = vmatpush2.bf16.xpose.msra.mxu0 0
    %3995 = vmatprep.subr.bf16.mxu0 0
    %3996 = vmatpush2.bf16.xpose.msra.mxu0 0
    %3997 = vmatprep.subr.bf16.mxu0 0
    %3998 = vmatpush2.bf16.xpose.msra.mxu0 0
    %3999 = vmatprep.subr.bf16.mxu0 0
    %4000 = vmatpush2.bf16.xpose.msra.mxu0 0
    %4001 = vmatprep.subr.bf16.mxu0 0
    %4002 = vmatpush2.bf16.xpose.msra.mxu0 0
    %4003 = vmatprep.subr.bf16.mxu0 0
    %4004 = vmatpush2.bf16.xpose.msra.mxu0 0
    %4005 = vmatprep.subr.bf16.mxu0 0
    %4006 = vmatpush2.bf16.xpose.msra.mxu0 0
    %4007 = vmatprep.subr.bf16.mxu0 0
    %4008 = vmatpush2.bf16.xpose.msra.mxu0 0
    %4009 = vmatprep.mubr.bf16.mxu0 0
    %4010 = vmatmul.mubr.bf16.gmra.mxu0 %v3960
    %v4011 = vpop.f32.mrf.mxu0
    %v4012 = vadd.f32 %v714, %v4011
    %v4013 = vpop.f32.mrf.mxu0
    %v4014 = vpop.f32.mrf.mxu0
    %v4015 = vadd.f32 %v715, %v4014
    %v4016 = vpop.f32.mrf.mxu0
    %4017 = vmatprep.mubr.bf16.mxu0 0
    %4018 = vmatmul.mubr.bf16.gmra.mxu0 %v3963
    %v4019 = vpop.f32.mrf.mxu0
    %v4020 = vadd.f32 %v716, %v4019
    %v4021 = vpop.f32.mrf.mxu0
    %v4022 = vpop.f32.mrf.mxu0
    %v4023 = vadd.f32 %v717, %v4022
    %v4024 = vpop.f32.mrf.mxu0
    %4025 = vmatprep.mubr.bf16.mxu0 0
    %4026 = vmatmul.mubr.bf16.gmra.mxu0 %v3966
    %v4027 = vpop.f32.mrf.mxu0
    %v4028 = vadd.f32 %v718, %v4027
    %v4029 = vpop.f32.mrf.mxu0
    %v4030 = vpop.f32.mrf.mxu0
    %v4031 = vadd.f32 %v719, %v4030
    %v4032 = vpop.f32.mrf.mxu0
    %4033 = vdwg.mxu0
    %v4034 = vsel %vm1204, %v4012, -inf
    %4035 = vmax.xlane.f32.xlu0 %v4034
    %v4036 = vpop.xlane.xlu0 %4035
    %v4037 = vsel %vm1204, %v4015, -inf
    %4038 = vmax.xlane.f32.xlu0 %v4037
    %v4039 = vpop.xlane.xlu0 %4038
    %v4040 = vsel %vm1204, %v4020, -inf
    %4041 = vmax.xlane.f32.xlu0 %v4040
    %v4042 = vpop.xlane.xlu0 %4041
    %v4043 = vsel %vm1204, %v4023, -inf
    %4044 = vmax.xlane.f32.xlu0 %v4043
    %v4045 = vpop.xlane.xlu0 %4044
    %v4046 = vsel %vm1204, %v4028, -inf
    %4047 = vmax.xlane.f32.xlu0 %v4046
    %v4048 = vpop.xlane.xlu0 %4047
    %v4049 = vsel %vm1204, %v4031, -inf
    %4050 = vmax.xlane.f32.xlu0 %v4049
    %v4051 = vpop.xlane.xlu0 %4050
    %v4052 = vsub.f32 %v4012, %v4036
    %v4053 = vsub.f32 %v4015, %v4039
    %v4054 = vsub.f32 %v4020, %v4042
    %v4055 = vsub.f32 %v4023, %v4045
    %v4056 = vsub.f32 %v4028, %v4048
    %v4057 = vsub.f32 %v4031, %v4051
    %v4058 = vmul.f32 %v4052, 1.442695
    %v4059 = vpow.pop %v4058
    %v4060 = vmul.f32 %v4053, 1.442695
    %v4061 = vpow.pop %v4060
    %v4062 = vmul.f32 %v4054, 1.442695
    %v4063 = vpow.pop %v4062
    %v4064 = vmul.f32 %v4055, 1.442695
    %v4065 = vpow.pop %v4064
    %v4066 = vmul.f32 %v4056, 1.442695
    %v4067 = vpow.pop %v4066
    %v4068 = vmul.f32 %v4057, 1.442695
    %v4069 = vpow.pop %v4068
    %v4070 = vsel %vm1204, %v4059, 0.0
    %4071 = vadd.xlane.f32.xlu0 %v4070
    %v4072 = vpop.xlane.xlu0 %4071
    %v4073 = vsel %vm1204, %v4061, 0.0
    %4074 = vadd.xlane.f32.xlu0 %v4073
    %v4075 = vpop.xlane.xlu0 %4074
    %v4076 = vsel %vm1204, %v4063, 0.0
    %4077 = vadd.xlane.f32.xlu0 %v4076
    %v4078 = vpop.xlane.xlu0 %4077
    %v4079 = vsel %vm1204, %v4065, 0.0
    %4080 = vadd.xlane.f32.xlu0 %v4079
    %v4081 = vpop.xlane.xlu0 %4080
    %v4082 = vsel %vm1204, %v4067, 0.0
    %4083 = vadd.xlane.f32.xlu0 %v4082
    %v4084 = vpop.xlane.xlu0 %4083
    %v4085 = vsel %vm1204, %v4069, 0.0
    %4086 = vadd.xlane.f32.xlu0 %v4085
    %v4087 = vpop.xlane.xlu0 %4086
    %v4088 = vrcp.pop %v4072
    %v4089 = vrcp.pop %v4075
    %v4090 = vrcp.pop %v4078
    %v4091 = vrcp.pop %v4081
    %v4092 = vrcp.pop %v4084
    %v4093 = vrcp.pop %v4087
    %v4094 = vmul.f32 %v4059, %v4088
    %v4095 = vmul.f32 %v4061, %v4089
    %v4096 = vmul.f32 %v4063, %v4090
    %v4097 = vmul.f32 %v4065, %v4091
    %v4098 = vmul.f32 %v4067, %v4092
    %v4099 = vmul.f32 %v4069, %v4093
    %v4100 = vpack.c.bf16 %v4095, %v4094
    %v4101 = vpack.c.bf16 %v4097, %v4096
    %v4102 = vpack.c.bf16 %v4099, %v4098
    %4103 = vrot.lane.b32.xlu0 %v3263, 32
    %v4104 = vpop.permute.xlu0 %4103
    %4105 = vrot.lane.b32.xlu0 %v3264, 32
    %v4106 = vpop.permute.xlu0 %4105
    %4107 = vrot.lane.b32.xlu0 %v3265, 32
    %v4108 = vpop.permute.xlu0 %4107
    %v4113 = vsel %vm1204, %v4100, 0
    %v4116 = vsel %vm1204, %v4101, 0
    %v4119 = vsel %vm1204, %v4102, 0
    %4121 = vmatprep.subr.bf16.mxu0 0
    %4122 = vmatpush1.bf16.msra.mxu0 0
    %4123 = vmatprep.subr.bf16.mxu0 0
    %4124 = vmatpush1.bf16.msra.mxu0 0
    %4125 = vmatprep.subr.bf16.mxu0 0
    %4126 = vmatpush1.bf16.msra.mxu0 0
    %4127 = vmatprep.subr.bf16.mxu0 0
    %4128 = vmatpush1.bf16.msra.mxu0 0
    %4129 = vmatprep.subr.bf16.mxu0 0
    %4130 = vmatpush1.bf16.msra.mxu0 0
    %4131 = vmatprep.subr.bf16.mxu0 0
    %4132 = vmatpush1.bf16.msra.mxu0 %v4108
    %4133 = vmatprep.subr.bf16.mxu0 0
    %4134 = vmatpush1.bf16.msra.mxu0 %v4106
    %4135 = vmatprep.subr.bf16.mxu0 0
    %4136 = vmatpush1.bf16.msra.mxu0 %v4104
    %4137 = vmatprep.subr.bf16.mxu0 0
    %4138 = vmatpush2.bf16.msra.mxu0 0
    %4139 = vmatprep.subr.bf16.mxu0 0
    %4140 = vmatpush2.bf16.msra.mxu0 0
    %4141 = vmatprep.subr.bf16.mxu0 0
    %4142 = vmatpush2.bf16.msra.mxu0 0
    %4143 = vmatprep.subr.bf16.mxu0 0
    %4144 = vmatpush2.bf16.msra.mxu0 0
    %4145 = vmatprep.subr.bf16.mxu0 0
    %4146 = vmatpush2.bf16.msra.mxu0 0
    %4147 = vmatprep.subr.bf16.mxu0 0
    %4148 = vmatpush2.bf16.msra.mxu0 0
    %4149 = vmatprep.subr.bf16.mxu0 0
    %4150 = vmatpush2.bf16.msra.mxu0 0
    %4151 = vmatprep.subr.bf16.mxu0 0
    %4152 = vmatpush2.bf16.msra.mxu0 0
    %4153 = vmatprep.mubr.bf16.mxu0 0
    %4154 = vmatmul.mubr.bf16.gmra.mxu0 %v4113
    %v4155 = vpop.f32.mrf.mxu0
    %v4156 = vadd.f32 0.0, %v4155
    %v4157 = vpop.f32.mrf.mxu0
    %v4158 = vpop.f32.mrf.mxu0
    %v4159 = vadd.f32 0.0, %v4158
    %v4160 = vpop.f32.mrf.mxu0
    %4161 = vmatprep.mubr.bf16.mxu0 0
    %4162 = vmatmul.mubr.bf16.gmra.mxu0 %v4116
    %v4163 = vpop.f32.mrf.mxu0
    %v4164 = vadd.f32 0.0, %v4163
    %v4165 = vpop.f32.mrf.mxu0
    %v4166 = vpop.f32.mrf.mxu0
    %v4167 = vadd.f32 0.0, %v4166
    %v4168 = vpop.f32.mrf.mxu0
    %4169 = vmatprep.mubr.bf16.mxu0 0
    %4170 = vmatmul.mubr.bf16.gmra.mxu0 %v4119
    %v4171 = vpop.f32.mrf.mxu0
    %v4172 = vadd.f32 0.0, %v4171
    %v4173 = vpop.f32.mrf.mxu0
    %v4174 = vpop.f32.mrf.mxu0
    %v4175 = vadd.f32 0.0, %v4174
    %v4176 = vpop.f32.mrf.mxu0
    %4177 = vdwg.mxu0
    %4184 = vrot.lane.b32.xlu0 %v3694, 32
    %v4185 = vpop.permute.xlu0 %4184
    %4186 = vrot.lane.b32.xlu0 %v3697, 32
    %v4187 = vpop.permute.xlu0 %4186
    %4188 = vrot.lane.b32.xlu0 %v3702, 32
    %v4189 = vpop.permute.xlu0 %4188
    %4190 = vrot.lane.b32.xlu0 %v3705, 32
    %v4191 = vpop.permute.xlu0 %4190
    %4192 = vrot.lane.b32.xlu0 %v3710, 32
    %v4193 = vpop.permute.xlu0 %4192
    %4194 = vrot.lane.b32.xlu0 %v3713, 32
    %v4195 = vpop.permute.xlu0 %4194
    %4208 = vrot.lane.b32.xlu0 %v3925, 64
    %v4209 = vpop.permute.xlu0 %4208
    %4210 = vrot.lane.b32.xlu0 %v3928, 64
    %v4211 = vpop.permute.xlu0 %4210
    %4212 = vrot.lane.b32.xlu0 %v3933, 64
    %v4213 = vpop.permute.xlu0 %4212
    %4214 = vrot.lane.b32.xlu0 %v3936, 64
    %v4215 = vpop.permute.xlu0 %4214
    %4216 = vrot.lane.b32.xlu0 %v3941, 64
    %v4217 = vpop.permute.xlu0 %4216
    %4218 = vrot.lane.b32.xlu0 %v3944, 64
    %v4219 = vpop.permute.xlu0 %4218
    %4232 = vrot.lane.b32.xlu0 %v4156, 96
    %v4233 = vpop.permute.xlu0 %4232
    %4234 = vrot.lane.b32.xlu0 %v4159, 96
    %v4235 = vpop.permute.xlu0 %4234
    %4236 = vrot.lane.b32.xlu0 %v4164, 96
    %v4237 = vpop.permute.xlu0 %4236
    %4238 = vrot.lane.b32.xlu0 %v4167, 96
    %v4239 = vpop.permute.xlu0 %4238
    %4240 = vrot.lane.b32.xlu0 %v4172, 96
    %v4241 = vpop.permute.xlu0 %4240
    %4242 = vrot.lane.b32.xlu0 %v4175, 96
    %v4243 = vpop.permute.xlu0 %4242
    %v4250 = vsel %vm1128, %v3454, %v4185
    %v4251 = vsel %vm1128, %v3457, %v4187
    %v4252 = vsel %vm1128, %v3462, %v4189
    %v4253 = vsel %vm1128, %v3465, %v4191
    %v4254 = vsel %vm1128, %v3470, %v4193
    %v4255 = vsel %vm1128, %v3473, %v4195
    %v4256 = vsel %vm2120, %v4250, %v4209
    %v4257 = vsel %vm2120, %v4251, %v4211
    %v4258 = vsel %vm2120, %v4252, %v4213
    %v4259 = vsel %vm2120, %v4253, %v4215
    %v4260 = vsel %vm2120, %v4254, %v4217
    %v4261 = vsel %vm2120, %v4255, %v4219
    %v4262 = vsel %vm2127, %v4256, %v4233
    %v4263 = vsel %vm2127, %v4257, %v4235
    %v4264 = vsel %vm2127, %v4258, %v4237
    %v4265 = vsel %vm2127, %v4259, %v4239
    %v4266 = vsel %vm2127, %v4260, %v4241
    %v4267 = vsel %vm2127, %v4261, %v4243
    %v4268 = vpack.c.bf16 %v4263, %v4262
    %v4269 = vpack.c.bf16 %v4265, %v4264
    %v4270 = vpack.c.bf16 %v4267, %v4266
    %s4271 = scalar_lea.vmem %s10, 64
    %v4272 = vld [vmem:[%s4271] sm:$0xf]
    %v4273 = vld [vmem:[%s4271 + $0x4] sm:$0xf]
    %v4274 = vld [vmem:[%s4271 + $0x8] sm:$0xf]
    %v4275 = vld [vmem:[%s4271 + $0xc] sm:$0xf]
    %v4276 = vld [vmem:[%s4271 + $0x10] sm:$0xf]
    %v4277 = vld [vmem:[%s4271 + $0x14] sm:$0xf]
    %v4278 = vld [vmem:[%s4271 + $0x18] sm:$0xf]
    %v4279 = vld [vmem:[%s4271 + $0x1c] sm:$0xf]
    %v4280 = vld [vmem:[%s4271 + $0x20] sm:$0xf]
    %v4281 = vld [vmem:[%s4271 + $0x24] sm:$0xf]
    %v4282 = vld [vmem:[%s4271 + $0x28] sm:$0xf]
    %v4283 = vld [vmem:[%s4271 + $0x2c] sm:$0xf]
    %v4284 = vld [vmem:[%s4271 + $0x30] sm:$0xf]
    %v4285 = vld [vmem:[%s4271 + $0x34] sm:$0xf]
    %v4286 = vld [vmem:[%s4271 + $0x38] sm:$0xf]
    %v4287 = vld [vmem:[%s4271 + $0x3c] sm:$0xf]
    %v4304 = vunpack.c.l.b16 %v4272
    %v4305 = vunpack.c.l.b16 %v4273
    %v4306 = vunpack.c.l.b16 %v4274
    %v4307 = vunpack.c.l.b16 %v4275
    %v4308 = vunpack.c.l.b16 %v4276
    %v4309 = vunpack.c.l.b16 %v4277
    %v4310 = vunpack.c.l.b16 %v4278
    %v4311 = vunpack.c.l.b16 %v4279
    %v4312 = vunpack.c.l.b16 %v4280
    %v4313 = vunpack.c.l.b16 %v4281
    %v4314 = vunpack.c.l.b16 %v4282
    %v4315 = vunpack.c.l.b16 %v4283
    %v4316 = vunpack.c.l.b16 %v4284
    %v4317 = vunpack.c.l.b16 %v4285
    %v4318 = vunpack.c.l.b16 %v4286
    %v4319 = vunpack.c.l.b16 %v4287
    %v4320 = vpack.c.b16 %v4305, %v4304
    %v4321 = vpack.c.b16 %v4307, %v4306
    %v4322 = vpack.c.b16 %v4309, %v4308
    %v4323 = vpack.c.b16 %v4311, %v4310
    %v4324 = vpack.c.b16 %v4313, %v4312
    %v4325 = vpack.c.b16 %v4315, %v4314
    %v4326 = vpack.c.b16 %v4317, %v4316
    %v4327 = vpack.c.b16 %v4319, %v4318
    %4336 = vmatprep.subr.bf16.mxu0 0
    %4337 = vmatpush1.bf16.msra.mxu0 %v4327
    %4338 = vmatprep.subr.bf16.mxu0 0
    %4339 = vmatpush1.bf16.msra.mxu0 %v4326
    %4340 = vmatprep.subr.bf16.mxu0 0
    %4341 = vmatpush1.bf16.msra.mxu0 %v4325
    %4342 = vmatprep.subr.bf16.mxu0 0
    %4343 = vmatpush1.bf16.msra.mxu0 %v4324
    %4344 = vmatprep.subr.bf16.mxu0 0
    %4345 = vmatpush1.bf16.msra.mxu0 %v4323
    %4346 = vmatprep.subr.bf16.mxu0 0
    %4347 = vmatpush1.bf16.msra.mxu0 %v4322
    %4348 = vmatprep.subr.bf16.mxu0 0
    %4349 = vmatpush1.bf16.msra.mxu0 %v4321
    %4350 = vmatprep.subr.bf16.mxu0 0
    %4351 = vmatpush1.bf16.msra.mxu0 %v4320
    %4352 = vmatprep.subr.bf16.mxu0 0
    %4353 = vmatpush2.bf16.msra.mxu0 0
    %4354 = vmatprep.subr.bf16.mxu0 0
    %4355 = vmatpush2.bf16.msra.mxu0 0
    %4356 = vmatprep.subr.bf16.mxu0 0
    %4357 = vmatpush2.bf16.msra.mxu0 0
    %4358 = vmatprep.subr.bf16.mxu0 0
    %4359 = vmatpush2.bf16.msra.mxu0 0
    %4360 = vmatprep.subr.bf16.mxu0 0
    %4361 = vmatpush2.bf16.msra.mxu0 0
    %4362 = vmatprep.subr.bf16.mxu0 0
    %4363 = vmatpush2.bf16.msra.mxu0 0
    %4364 = vmatprep.subr.bf16.mxu0 0
    %4365 = vmatpush2.bf16.msra.mxu0 0
    %4366 = vmatprep.subr.bf16.mxu0 0
    %4367 = vmatpush2.bf16.msra.mxu0 0
    %4368 = vmatprep.mubr.bf16.mxu0 0
    %4369 = vmatmul.mubr.bf16.gmra.mxu0 %v4268
    %v4370 = vpop.f32.mrf.mxu0
    %v4371 = vadd.f32 0.0, %v4370
    %v4372 = vpop.f32.mrf.mxu0
    %v4373 = vpop.f32.mrf.mxu0
    %v4374 = vadd.f32 0.0, %v4373
    %v4375 = vpop.f32.mrf.mxu0
    %4376 = vmatprep.mubr.bf16.mxu0 0
    %4377 = vmatmul.mubr.bf16.gmra.mxu0 %v4269
    %v4378 = vpop.f32.mrf.mxu0
    %v4379 = vadd.f32 0.0, %v4378
    %v4380 = vpop.f32.mrf.mxu0
    %v4381 = vpop.f32.mrf.mxu0
    %v4382 = vadd.f32 0.0, %v4381
    %v4383 = vpop.f32.mrf.mxu0
    %4384 = vmatprep.mubr.bf16.mxu0 0
    %4385 = vmatmul.mubr.bf16.gmra.mxu0 %v4270
    %v4386 = vpop.f32.mrf.mxu0
    %v4387 = vadd.f32 0.0, %v4386
    %v4388 = vpop.f32.mrf.mxu0
    %v4389 = vpop.f32.mrf.mxu0
    %v4390 = vadd.f32 0.0, %v4389
    %v4391 = vpop.f32.mrf.mxu0
    %4392 = vdwg.mxu0
    %v4393 = vadd.f32 %v2849, %v4371
    %v4394 = vadd.f32 %v2850, %v4374
    %v4395 = vadd.f32 %v2851, %v4379
    %v4396 = vadd.f32 %v2852, %v4382
    %v4397 = vadd.f32 %v2853, %v4387
    %v4398 = vadd.f32 %v2854, %v4390
    %s4399 = scalar_lea.vmem %s11, 1
    %v4400 = vld [vmem:[%s4399] sm:$0x1]
    %v4402 = vlaneseq
    %v4403 = vshrl.u32 %v4402, 7
    %v4404 = vsub.s32 0, %v4403
    %v4405 = vrot.slane %v4400, %v4404
    %v4407 = vadd.f32 %v4393, %v4405
    %v4408 = vadd.f32 %v4394, %v4405
    %v4409 = vadd.f32 %v4395, %v4405
    %v4410 = vadd.f32 %v4396, %v4405
    %v4411 = vadd.f32 %v4397, %v4405
    %v4412 = vadd.f32 %v4398, %v4405
    %s4413 = scalar_lea.vmem %s12, 1
    %v4414 = vld [vmem:[%s4413] sm:$0x1]
    %s4415 = scalar_lea.vmem %s13, 1
    %v4416 = vld [vmem:[%s4415] sm:$0x1]
    %4417 = vadd.xlane.f32.xlu0 %v4407
    %v4418 = vpop.xlane.xlu0 %4417
    %4419 = vadd.xlane.f32.xlu0 %v4408
    %v4420 = vpop.xlane.xlu0 %4419
    %4421 = vadd.xlane.f32.xlu0 %v4409
    %v4422 = vpop.xlane.xlu0 %4421
    %4423 = vadd.xlane.f32.xlu0 %v4410
    %v4424 = vpop.xlane.xlu0 %4423
    %4425 = vadd.xlane.f32.xlu0 %v4411
    %v4426 = vpop.xlane.xlu0 %4425
    %4427 = vadd.xlane.f32.xlu0 %v4412
    %v4428 = vpop.xlane.xlu0 %4427
    %v4429 = vmul.f32 %v4418, %v734
    %v4430 = vmul.f32 %v4420, %v734
    %v4431 = vmul.f32 %v4422, %v734
    %v4432 = vmul.f32 %v4424, %v734
    %v4433 = vmul.f32 %v4426, %v734
    %v4434 = vmul.f32 %v4428, %v734
    %v4435 = vsub.f32 %v4407, %v4429
    %v4436 = vsub.f32 %v4408, %v4430
    %v4437 = vsub.f32 %v4409, %v4431
    %v4438 = vsub.f32 %v4410, %v4432
    %v4439 = vsub.f32 %v4411, %v4433
    %v4440 = vsub.f32 %v4412, %v4434
    %v4441 = vmul.f32 %v4435, %v4435
    %v4442 = vmul.f32 %v4436, %v4436
    %v4443 = vmul.f32 %v4437, %v4437
    %v4444 = vmul.f32 %v4438, %v4438
    %v4445 = vmul.f32 %v4439, %v4439
    %v4446 = vmul.f32 %v4440, %v4440
    %4447 = vadd.xlane.f32.xlu0 %v4441
    %v4448 = vpop.xlane.xlu0 %4447
    %4449 = vadd.xlane.f32.xlu0 %v4442
    %v4450 = vpop.xlane.xlu0 %4449
    %4451 = vadd.xlane.f32.xlu0 %v4443
    %v4452 = vpop.xlane.xlu0 %4451
    %4453 = vadd.xlane.f32.xlu0 %v4444
    %v4454 = vpop.xlane.xlu0 %4453
    %4455 = vadd.xlane.f32.xlu0 %v4445
    %v4456 = vpop.xlane.xlu0 %4455
    %4457 = vadd.xlane.f32.xlu0 %v4446
    %v4458 = vpop.xlane.xlu0 %4457
    %v4459 = vmul.f32 %v4448, %v734
    %v4460 = vmul.f32 %v4450, %v734
    %v4461 = vmul.f32 %v4452, %v734
    %v4462 = vmul.f32 %v4454, %v734
    %v4463 = vmul.f32 %v4456, %v734
    %v4464 = vmul.f32 %v4458, %v734
    %v4465 = vadd.f32 %v4459, 1e-06
    %v4466 = vadd.f32 %v4460, 1e-06
    %v4467 = vadd.f32 %v4461, 1e-06
    %v4468 = vadd.f32 %v4462, 1e-06
    %v4469 = vadd.f32 %v4463, 1e-06
    %v4470 = vadd.f32 %v4464, 1e-06
    %v4471 = vrsqrt.pop %v4465
    %v4472 = vrsqrt.pop %v4466
    %v4473 = vrsqrt.pop %v4467
    %v4474 = vrsqrt.pop %v4468
    %v4475 = vrsqrt.pop %v4469
    %v4476 = vrsqrt.pop %v4470
    %v4477 = vmul.f32 %v4435, %v4471
    %v4478 = vmul.f32 %v4436, %v4472
    %v4479 = vmul.f32 %v4437, %v4473
    %v4480 = vmul.f32 %v4438, %v4474
    %v4481 = vmul.f32 %v4439, %v4475
    %v4482 = vmul.f32 %v4440, %v4476
    %v4484 = vlaneseq
    %v4485 = vshrl.u32 %v4484, 7
    %v4486 = vsub.s32 0, %v4485
    %v4487 = vrot.slane %v4414, %v4486
    %v4489 = vmul.f32 %v4477, %v4487
    %v4490 = vmul.f32 %v4478, %v4487
    %v4491 = vmul.f32 %v4479, %v4487
    %v4492 = vmul.f32 %v4480, %v4487
    %v4493 = vmul.f32 %v4481, %v4487
    %v4494 = vmul.f32 %v4482, %v4487
    %v4496 = vlaneseq
    %v4497 = vshrl.u32 %v4496, 7
    %v4498 = vsub.s32 0, %v4497
    %v4499 = vrot.slane %v4416, %v4498
    %v4501 = vadd.f32 %v4489, %v4499
    %v4502 = vadd.f32 %v4490, %v4499
    %v4503 = vadd.f32 %v4491, %v4499
    %v4504 = vadd.f32 %v4492, %v4499
    %v4505 = vadd.f32 %v4493, %v4499
    %v4506 = vadd.f32 %v4494, %v4499
    %v4507 = vpack.c.bf16 %v4502, %v4501
    %v4508 = vpack.c.bf16 %v4504, %v4503
    %v4509 = vpack.c.bf16 %v4506, %v4505
    %s4510 = scalar_lea.vmem %s14, 128
    %v4511 = vld [vmem:[%s4510] sm:$0xff]
    %v4512 = vld [vmem:[%s4510 + $0x8] sm:$0xff]
    %v4513 = vld [vmem:[%s4510 + $0x10] sm:$0xff]
    %v4514 = vld [vmem:[%s4510 + $0x18] sm:$0xff]
    %v4515 = vld [vmem:[%s4510 + $0x20] sm:$0xff]
    %v4516 = vld [vmem:[%s4510 + $0x28] sm:$0xff]
    %v4517 = vld [vmem:[%s4510 + $0x30] sm:$0xff]
    %v4518 = vld [vmem:[%s4510 + $0x38] sm:$0xff]
    %v4519 = vld [vmem:[%s4510 + $0x40] sm:$0xff]
    %v4520 = vld [vmem:[%s4510 + $0x48] sm:$0xff]
    %v4521 = vld [vmem:[%s4510 + $0x50] sm:$0xff]
    %v4522 = vld [vmem:[%s4510 + $0x58] sm:$0xff]
    %v4523 = vld [vmem:[%s4510 + $0x60] sm:$0xff]
    %v4524 = vld [vmem:[%s4510 + $0x68] sm:$0xff]
    %v4525 = vld [vmem:[%s4510 + $0x70] sm:$0xff]
    %v4526 = vld [vmem:[%s4510 + $0x78] sm:$0xff]
    %s4527 = scalar_lea.vmem %s15, 2
    %v4528 = vld [vmem:[%s4527] sm:$0x3]
    %v4530 = vlaneseq
    %v4531 = vshrl.u32 %v4530, 7
    %v4532 = vsub.s32 0, %v4531
    %v4533 = vrot.slane %v4528, %v4532
    %v4534 = vlaneseq
    %v4535 = vshrl.u32 %v4534, 7
    %v4536 = vsub.s32 1, %v4535
    %v4537 = vrot.slane %v4528, %v4536
    %v4556 = vunpack.c.l.b16 %v4511
    %v4557 = vunpack.c.h.b16 %v4511
    %v4558 = vunpack.c.l.b16 %v4512
    %v4559 = vunpack.c.h.b16 %v4512
    %v4560 = vunpack.c.l.b16 %v4513
    %v4561 = vunpack.c.h.b16 %v4513
    %v4562 = vunpack.c.l.b16 %v4514
    %v4563 = vunpack.c.h.b16 %v4514
    %v4564 = vunpack.c.l.b16 %v4515
    %v4565 = vunpack.c.h.b16 %v4515
    %v4566 = vunpack.c.l.b16 %v4516
    %v4567 = vunpack.c.h.b16 %v4516
    %v4568 = vunpack.c.l.b16 %v4517
    %v4569 = vunpack.c.h.b16 %v4517
    %v4570 = vunpack.c.l.b16 %v4518
    %v4571 = vunpack.c.h.b16 %v4518
    %v4572 = vunpack.c.l.b16 %v4519
    %v4573 = vunpack.c.h.b16 %v4519
    %v4574 = vunpack.c.l.b16 %v4520
    %v4575 = vunpack.c.h.b16 %v4520
    %v4576 = vunpack.c.l.b16 %v4521
    %v4577 = vunpack.c.h.b16 %v4521
    %v4578 = vunpack.c.l.b16 %v4522
    %v4579 = vunpack.c.h.b16 %v4522
    %v4580 = vunpack.c.l.b16 %v4523
    %v4581 = vunpack.c.h.b16 %v4523
    %v4582 = vunpack.c.l.b16 %v4524
    %v4583 = vunpack.c.h.b16 %v4524
    %v4584 = vunpack.c.l.b16 %v4525
    %v4585 = vunpack.c.h.b16 %v4525
    %v4586 = vunpack.c.l.b16 %v4526
    %v4587 = vunpack.c.h.b16 %v4526
    %v4588 = vpack.c.b16 %v4558, %v4556
    %v4589 = vpack.c.b16 %v4559, %v4557
    %v4590 = vpack.c.b16 %v4562, %v4560
    %v4591 = vpack.c.b16 %v4563, %v4561
    %v4592 = vpack.c.b16 %v4566, %v4564
    %v4593 = vpack.c.b16 %v4567, %v4565
    %v4594 = vpack.c.b16 %v4570, %v4568
    %v4595 = vpack.c.b16 %v4571, %v4569
    %v4596 = vpack.c.b16 %v4574, %v4572
    %v4597 = vpack.c.b16 %v4575, %v4573
    %v4598 = vpack.c.b16 %v4578, %v4576
    %v4599 = vpack.c.b16 %v4579, %v4577
    %v4600 = vpack.c.b16 %v4582, %v4580
    %v4601 = vpack.c.b16 %v4583, %v4581
    %v4602 = vpack.c.b16 %v4586, %v4584
    %v4603 = vpack.c.b16 %v4587, %v4585
    %4620 = vmatprep.subr.bf16.mxu0 %v4603
    %4621 = vmatpush1.bf16.msra.mxu0 %v4602
    %4622 = vmatprep.subr.bf16.mxu0 %v4601
    %4623 = vmatpush1.bf16.msra.mxu0 %v4600
    %4624 = vmatprep.subr.bf16.mxu0 %v4599
    %4625 = vmatpush1.bf16.msra.mxu0 %v4598
    %4626 = vmatprep.subr.bf16.mxu0 %v4597
    %4627 = vmatpush1.bf16.msra.mxu0 %v4596
    %4628 = vmatprep.subr.bf16.mxu0 %v4595
    %4629 = vmatpush1.bf16.msra.mxu0 %v4594
    %4630 = vmatprep.subr.bf16.mxu0 %v4593
    %4631 = vmatpush1.bf16.msra.mxu0 %v4592
    %4632 = vmatprep.subr.bf16.mxu0 %v4591
    %4633 = vmatpush1.bf16.msra.mxu0 %v4590
    %4634 = vmatprep.subr.bf16.mxu0 %v4589
    %4635 = vmatpush1.bf16.msra.mxu0 %v4588
    %4636 = vmatprep.subr.bf16.mxu0 0
    %4637 = vmatpush2.bf16.msra.mxu0 0
    %4638 = vmatprep.subr.bf16.mxu0 0
    %4639 = vmatpush2.bf16.msra.mxu0 0
    %4640 = vmatprep.subr.bf16.mxu0 0
    %4641 = vmatpush2.bf16.msra.mxu0 0
    %4642 = vmatprep.subr.bf16.mxu0 0
    %4643 = vmatpush2.bf16.msra.mxu0 0
    %4644 = vmatprep.subr.bf16.mxu0 0
    %4645 = vmatpush2.bf16.msra.mxu0 0
    %4646 = vmatprep.subr.bf16.mxu0 0
    %4647 = vmatpush2.bf16.msra.mxu0 0
    %4648 = vmatprep.subr.bf16.mxu0 0
    %4649 = vmatpush2.bf16.msra.mxu0 0
    %4650 = vmatprep.subr.bf16.mxu0 0
    %4651 = vmatpush2.bf16.msra.mxu0 0
    %4652 = vmatprep.mubr.bf16.mxu0 0
    %4653 = vmatmul.mubr.bf16.gmra.mxu0 %v4507
    %v4654 = vpop.f32.mrf.mxu0
    %v4655 = vadd.f32 %v4533, %v4654
    %v4656 = vpop.f32.mrf.mxu0
    %v4657 = vadd.f32 %v4537, %v4656
    %v4658 = vpop.f32.mrf.mxu0
    %v4659 = vadd.f32 %v4533, %v4658
    %v4660 = vpop.f32.mrf.mxu0
    %v4661 = vadd.f32 %v4537, %v4660
    %4662 = vmatprep.mubr.bf16.mxu0 0
    %4663 = vmatmul.mubr.bf16.gmra.mxu0 %v4508
    %v4664 = vpop.f32.mrf.mxu0
    %v4665 = vadd.f32 %v4533, %v4664
    %v4666 = vpop.f32.mrf.mxu0
    %v4667 = vadd.f32 %v4537, %v4666
    %v4668 = vpop.f32.mrf.mxu0
    %v4669 = vadd.f32 %v4533, %v4668
    %v4670 = vpop.f32.mrf.mxu0
    %v4671 = vadd.f32 %v4537, %v4670
    %4672 = vmatprep.mubr.bf16.mxu0 0
    %4673 = vmatmul.mubr.bf16.gmra.mxu0 %v4509
    %v4674 = vpop.f32.mrf.mxu0
    %v4675 = vadd.f32 %v4533, %v4674
    %v4676 = vpop.f32.mrf.mxu0
    %v4677 = vadd.f32 %v4537, %v4676
    %v4678 = vpop.f32.mrf.mxu0
    %v4679 = vadd.f32 %v4533, %v4678
    %v4680 = vpop.f32.mrf.mxu0
    %v4681 = vadd.f32 %v4537, %v4680
    %4682 = vdwg.mxu0
    %v4683 = vmul.f32 %v4655, %v4655
    %v4684 = vmul.f32 %v4657, %v4657
    %v4685 = vmul.f32 %v4659, %v4659
    %v4686 = vmul.f32 %v4661, %v4661
    %v4687 = vmul.f32 %v4665, %v4665
    %v4688 = vmul.f32 %v4667, %v4667
    %v4689 = vmul.f32 %v4669, %v4669
    %v4690 = vmul.f32 %v4671, %v4671
    %v4691 = vmul.f32 %v4675, %v4675
    %v4692 = vmul.f32 %v4677, %v4677
    %v4693 = vmul.f32 %v4679, %v4679
    %v4694 = vmul.f32 %v4681, %v4681
    %v4695 = vmul.f32 %v4655, %v4683
    %v4696 = vmul.f32 %v4657, %v4684
    %v4697 = vmul.f32 %v4659, %v4685
    %v4698 = vmul.f32 %v4661, %v4686
    %v4699 = vmul.f32 %v4665, %v4687
    %v4700 = vmul.f32 %v4667, %v4688
    %v4701 = vmul.f32 %v4669, %v4689
    %v4702 = vmul.f32 %v4671, %v4690
    %v4703 = vmul.f32 %v4675, %v4691
    %v4704 = vmul.f32 %v4677, %v4692
    %v4705 = vmul.f32 %v4679, %v4693
    %v4706 = vmul.f32 %v4681, %v4694
    %v4707 = vmul.f32 %v4695, 0.044715
    %v4708 = vmul.f32 %v4696, 0.044715
    %v4709 = vmul.f32 %v4697, 0.044715
    %v4710 = vmul.f32 %v4698, 0.044715
    %v4711 = vmul.f32 %v4699, 0.044715
    %v4712 = vmul.f32 %v4700, 0.044715
    %v4713 = vmul.f32 %v4701, 0.044715
    %v4714 = vmul.f32 %v4702, 0.044715
    %v4715 = vmul.f32 %v4703, 0.044715
    %v4716 = vmul.f32 %v4704, 0.044715
    %v4717 = vmul.f32 %v4705, 0.044715
    %v4718 = vmul.f32 %v4706, 0.044715
    %v4719 = vadd.f32 %v4655, %v4707
    %v4720 = vadd.f32 %v4657, %v4708
    %v4721 = vadd.f32 %v4659, %v4709
    %v4722 = vadd.f32 %v4661, %v4710
    %v4723 = vadd.f32 %v4665, %v4711
    %v4724 = vadd.f32 %v4667, %v4712
    %v4725 = vadd.f32 %v4669, %v4713
    %v4726 = vadd.f32 %v4671, %v4714
    %v4727 = vadd.f32 %v4675, %v4715
    %v4728 = vadd.f32 %v4677, %v4716
    %v4729 = vadd.f32 %v4679, %v4717
    %v4730 = vadd.f32 %v4681, %v4718
    %v4731 = vmul.f32 %v4719, 0.7978846
    %v4732 = vmul.f32 %v4720, 0.7978846
    %v4733 = vmul.f32 %v4721, 0.7978846
    %v4734 = vmul.f32 %v4722, 0.7978846
    %v4735 = vmul.f32 %v4723, 0.7978846
    %v4736 = vmul.f32 %v4724, 0.7978846
    %v4737 = vmul.f32 %v4725, 0.7978846
    %v4738 = vmul.f32 %v4726, 0.7978846
    %v4739 = vmul.f32 %v4727, 0.7978846
    %v4740 = vmul.f32 %v4728, 0.7978846
    %v4741 = vmul.f32 %v4729, 0.7978846
    %v4742 = vmul.f32 %v4730, 0.7978846
    %v4743 = vtanh.pop %v4731
    %v4744 = vtanh.pop %v4732
    %v4745 = vtanh.pop %v4733
    %v4746 = vtanh.pop %v4734
    %v4747 = vtanh.pop %v4735
    %v4748 = vtanh.pop %v4736
    %v4749 = vtanh.pop %v4737
    %v4750 = vtanh.pop %v4738
    %v4751 = vtanh.pop %v4739
    %v4752 = vtanh.pop %v4740
    %v4753 = vtanh.pop %v4741
    %v4754 = vtanh.pop %v4742
    %v4755 = vadd.f32 %v4743, 1.0
    %v4756 = vadd.f32 %v4744, 1.0
    %v4757 = vadd.f32 %v4745, 1.0
    %v4758 = vadd.f32 %v4746, 1.0
    %v4759 = vadd.f32 %v4747, 1.0
    %v4760 = vadd.f32 %v4748, 1.0
    %v4761 = vadd.f32 %v4749, 1.0
    %v4762 = vadd.f32 %v4750, 1.0
    %v4763 = vadd.f32 %v4751, 1.0
    %v4764 = vadd.f32 %v4752, 1.0
    %v4765 = vadd.f32 %v4753, 1.0
    %v4766 = vadd.f32 %v4754, 1.0
    %v4767 = vmul.f32 %v4755, 0.5
    %v4768 = vmul.f32 %v4756, 0.5
    %v4769 = vmul.f32 %v4757, 0.5
    %v4770 = vmul.f32 %v4758, 0.5
    %v4771 = vmul.f32 %v4759, 0.5
    %v4772 = vmul.f32 %v4760, 0.5
    %v4773 = vmul.f32 %v4761, 0.5
    %v4774 = vmul.f32 %v4762, 0.5
    %v4775 = vmul.f32 %v4763, 0.5
    %v4776 = vmul.f32 %v4764, 0.5
    %v4777 = vmul.f32 %v4765, 0.5
    %v4778 = vmul.f32 %v4766, 0.5
    %v4779 = vmul.f32 %v4655, %v4767
    %v4780 = vmul.f32 %v4657, %v4768
    %v4781 = vmul.f32 %v4659, %v4769
    %v4782 = vmul.f32 %v4661, %v4770
    %v4783 = vmul.f32 %v4665, %v4771
    %v4784 = vmul.f32 %v4667, %v4772
    %v4785 = vmul.f32 %v4669, %v4773
    %v4786 = vmul.f32 %v4671, %v4774
    %v4787 = vmul.f32 %v4675, %v4775
    %v4788 = vmul.f32 %v4677, %v4776
    %v4789 = vmul.f32 %v4679, %v4777
    %v4790 = vmul.f32 %v4681, %v4778
    %v4791 = vpack.c.bf16 %v4781, %v4779
    %v4792 = vpack.c.bf16 %v4782, %v4780
    %v4793 = vpack.c.bf16 %v4785, %v4783
    %v4794 = vpack.c.bf16 %v4786, %v4784
    %v4795 = vpack.c.bf16 %v4789, %v4787
    %v4796 = vpack.c.bf16 %v4790, %v4788
    %s4797 = scalar_lea.vmem %s16, 128
    %v4798 = vld [vmem:[%s4797] sm:$0xf]
    %v4799 = vld [vmem:[%s4797 + $0x4] sm:$0xf]
    %v4800 = vld [vmem:[%s4797 + $0x8] sm:$0xf]
    %v4801 = vld [vmem:[%s4797 + $0xc] sm:$0xf]
    %v4802 = vld [vmem:[%s4797 + $0x10] sm:$0xf]
    %v4803 = vld [vmem:[%s4797 + $0x14] sm:$0xf]
    %v4804 = vld [vmem:[%s4797 + $0x18] sm:$0xf]
    %v4805 = vld [vmem:[%s4797 + $0x1c] sm:$0xf]
    %v4806 = vld [vmem:[%s4797 + $0x20] sm:$0xf]
    %v4807 = vld [vmem:[%s4797 + $0x24] sm:$0xf]
    %v4808 = vld [vmem:[%s4797 + $0x28] sm:$0xf]
    %v4809 = vld [vmem:[%s4797 + $0x2c] sm:$0xf]
    %v4810 = vld [vmem:[%s4797 + $0x30] sm:$0xf]
    %v4811 = vld [vmem:[%s4797 + $0x34] sm:$0xf]
    %v4812 = vld [vmem:[%s4797 + $0x38] sm:$0xf]
    %v4813 = vld [vmem:[%s4797 + $0x3c] sm:$0xf]
    %v4814 = vld [vmem:[%s4797 + $0x40] sm:$0xf]
    %v4815 = vld [vmem:[%s4797 + $0x44] sm:$0xf]
    %v4816 = vld [vmem:[%s4797 + $0x48] sm:$0xf]
    %v4817 = vld [vmem:[%s4797 + $0x4c] sm:$0xf]
    %v4818 = vld [vmem:[%s4797 + $0x50] sm:$0xf]
    %v4819 = vld [vmem:[%s4797 + $0x54] sm:$0xf]
    %v4820 = vld [vmem:[%s4797 + $0x58] sm:$0xf]
    %v4821 = vld [vmem:[%s4797 + $0x5c] sm:$0xf]
    %v4822 = vld [vmem:[%s4797 + $0x60] sm:$0xf]
    %v4823 = vld [vmem:[%s4797 + $0x64] sm:$0xf]
    %v4824 = vld [vmem:[%s4797 + $0x68] sm:$0xf]
    %v4825 = vld [vmem:[%s4797 + $0x6c] sm:$0xf]
    %v4826 = vld [vmem:[%s4797 + $0x70] sm:$0xf]
    %v4827 = vld [vmem:[%s4797 + $0x74] sm:$0xf]
    %v4828 = vld [vmem:[%s4797 + $0x78] sm:$0xf]
    %v4829 = vld [vmem:[%s4797 + $0x7c] sm:$0xf]
    %s4830 = scalar_lea.vmem %s17, 1
    %v4831 = vld [vmem:[%s4830] sm:$0x1]
    %v4833 = vlaneseq
    %v4834 = vshrl.u32 %v4833, 7
    %v4835 = vsub.s32 0, %v4834
    %v4836 = vrot.slane %v4831, %v4835
    %v4870 = vunpack.c.l.b16 %v4798
    %v4871 = vunpack.c.l.b16 %v4799
    %v4872 = vunpack.c.l.b16 %v4800
    %v4873 = vunpack.c.l.b16 %v4801
    %v4874 = vunpack.c.l.b16 %v4802
    %v4875 = vunpack.c.l.b16 %v4803
    %v4876 = vunpack.c.l.b16 %v4804
    %v4877 = vunpack.c.l.b16 %v4805
    %v4878 = vunpack.c.l.b16 %v4806
    %v4879 = vunpack.c.l.b16 %v4807
    %v4880 = vunpack.c.l.b16 %v4808
    %v4881 = vunpack.c.l.b16 %v4809
    %v4882 = vunpack.c.l.b16 %v4810
    %v4883 = vunpack.c.l.b16 %v4811
    %v4884 = vunpack.c.l.b16 %v4812
    %v4885 = vunpack.c.l.b16 %v4813
    %v4886 = vunpack.c.l.b16 %v4814
    %v4887 = vunpack.c.l.b16 %v4815
    %v4888 = vunpack.c.l.b16 %v4816
    %v4889 = vunpack.c.l.b16 %v4817
    %v4890 = vunpack.c.l.b16 %v4818
    %v4891 = vunpack.c.l.b16 %v4819
    %v4892 = vunpack.c.l.b16 %v4820
    %v4893 = vunpack.c.l.b16 %v4821
    %v4894 = vunpack.c.l.b16 %v4822
    %v4895 = vunpack.c.l.b16 %v4823
    %v4896 = vunpack.c.l.b16 %v4824
    %v4897 = vunpack.c.l.b16 %v4825
    %v4898 = vunpack.c.l.b16 %v4826
    %v4899 = vunpack.c.l.b16 %v4827
    %v4900 = vunpack.c.l.b16 %v4828
    %v4901 = vunpack.c.l.b16 %v4829
    %v4902 = vpack.c.b16 %v4871, %v4870
    %v4903 = vpack.c.b16 %v4873, %v4872
    %v4904 = vpack.c.b16 %v4875, %v4874
    %v4905 = vpack.c.b16 %v4877, %v4876
    %v4906 = vpack.c.b16 %v4879, %v4878
    %v4907 = vpack.c.b16 %v4881, %v4880
    %v4908 = vpack.c.b16 %v4883, %v4882
    %v4909 = vpack.c.b16 %v4885, %v4884
    %v4910 = vpack.c.b16 %v4887, %v4886
    %v4911 = vpack.c.b16 %v4889, %v4888
    %v4912 = vpack.c.b16 %v4891, %v4890
    %v4913 = vpack.c.b16 %v4893, %v4892
    %v4914 = vpack.c.b16 %v4895, %v4894
    %v4915 = vpack.c.b16 %v4897, %v4896
    %v4916 = vpack.c.b16 %v4899, %v4898
    %v4917 = vpack.c.b16 %v4901, %v4900
    %4934 = vmatprep.subr.bf16.mxu0 0
    %4935 = vmatpush1.bf16.msra.mxu0 %v4909
    %4936 = vmatprep.subr.bf16.mxu0 0
    %4937 = vmatpush1.bf16.msra.mxu0 %v4908
    %4938 = vmatprep.subr.bf16.mxu0 0
    %4939 = vmatpush1.bf16.msra.mxu0 %v4907
    %4940 = vmatprep.subr.bf16.mxu0 0
    %4941 = vmatpush1.bf16.msra.mxu0 %v4906
    %4942 = vmatprep.subr.bf16.mxu0 0
    %4943 = vmatpush1.bf16.msra.mxu0 %v4905
    %4944 = vmatprep.subr.bf16.mxu0 0
    %4945 = vmatpush1.bf16.msra.mxu0 %v4904
    %4946 = vmatprep.subr.bf16.mxu0 0
    %4947 = vmatpush1.bf16.msra.mxu0 %v4903
    %4948 = vmatprep.subr.bf16.mxu0 0
    %4949 = vmatpush1.bf16.msra.mxu0 %v4902
    %4950 = vmatprep.subr.bf16.mxu0 0
    %4951 = vmatpush2.bf16.msra.mxu0 %v4917
    %4952 = vmatprep.subr.bf16.mxu0 0
    %4953 = vmatpush2.bf16.msra.mxu0 %v4916
    %4954 = vmatprep.subr.bf16.mxu0 0
    %4955 = vmatpush2.bf16.msra.mxu0 %v4915
    %4956 = vmatprep.subr.bf16.mxu0 0
    %4957 = vmatpush2.bf16.msra.mxu0 %v4914
    %4958 = vmatprep.subr.bf16.mxu0 0
    %4959 = vmatpush2.bf16.msra.mxu0 %v4913
    %4960 = vmatprep.subr.bf16.mxu0 0
    %4961 = vmatpush2.bf16.msra.mxu0 %v4912
    %4962 = vmatprep.subr.bf16.mxu0 0
    %4963 = vmatpush2.bf16.msra.mxu0 %v4911
    %4964 = vmatprep.subr.bf16.mxu0 0
    %4965 = vmatpush2.bf16.msra.mxu0 %v4910
    %4966 = vmatprep.mubr.bf16.mxu0 %v4792
    %4967 = vmatmul.mubr.bf16.gmra.mxu0 %v4791
    %v4968 = vpop.f32.mrf.mxu0
    %v4969 = vadd.f32 %v4836, %v4968
    %v4970 = vpop.f32.mrf.mxu0
    %v4971 = vpop.f32.mrf.mxu0
    %v4972 = vpop.f32.mrf.mxu0
    %4973 = vmatprep.mubr.bf16.mxu0 %v4794
    %4974 = vmatmul.mubr.bf16.gmra.mxu0 %v4793
    %v4975 = vpop.f32.mrf.mxu0
    %v4976 = vpop.f32.mrf.mxu0
    %v4977 = vpop.f32.mrf.mxu0
    %v4978 = vadd.f32 %v4836, %v4977
    %v4979 = vpop.f32.mrf.mxu0
    %4980 = vmatprep.mubr.bf16.mxu0 %v4796
    %4981 = vmatmul.mubr.bf16.gmra.mxu0 %v4795
    %v4982 = vpop.f32.mrf.mxu0
    %v4983 = vpop.f32.mrf.mxu0
    %v4984 = vpop.f32.mrf.mxu0
    %v4985 = vpop.f32.mrf.mxu0
    %4986 = vdwg.mxu0
    %v4987 = vadd.f32 %v4407, %v4969
    %v4988 = vadd.f32 %v4410, %v4978
    %v4989 = vld [vmem:[%s18] sm:$0x1]
    %v4990 = vld [vmem:[%s19] sm:$0x1]
    %v4993 = vrot.slane %v4988, 7
    %vm4994 = vcmask 1041409
    %v4995 = vsel %vm4994, %v4993, %v4987
    %vm4997 = vcmask 1041408
    %v4998 = vsel %vm4997, %v4995, 0.0
    %4999 = vadd.xlane.f32.xlu0 %v4998
    %v5000 = vpop.xlane.xlu0 %4999
    %v5001 = vmul.f32 %v5000, %v734
    %v5003 = vrot.slane %v5001, 1
    %v5006 = vsub.f32 %v4987, %v5001
    %v5007 = vsub.f32 %v4988, %v5003
    %v5008 = vmul.f32 %v5006, %v5006
    %v5009 = vmul.f32 %v5007, %v5007
    %v5012 = vrot.slane %v5009, 7
    %v5013 = vsel %vm4994, %v5012, %v5008
    %v5015 = vsel %vm4997, %v5013, 0.0
    %5016 = vadd.xlane.f32.xlu0 %v5015
    %v5017 = vpop.xlane.xlu0 %5016
    %v5018 = vmul.f32 %v5017, %v734
    %v5019 = vadd.f32 %v5018, 1e-06
    %v5020 = vrsqrt.pop %v5019
    %v5022 = vrot.slane %v5020, 1
    %v5025 = vmul.f32 %v5006, %v5020
    %v5026 = vmul.f32 %v5007, %v5022
    %v5028 = vlaneseq
    %v5029 = vshrl.u32 %v5028, 7
    %v5030 = vsub.s32 0, %v5029
    %v5031 = vrot.slane %v4989, %v5030
    %v5033 = vmul.f32 %v5025, %v5031
    %v5034 = vmul.f32 %v5026, %v5031
    %v5036 = vlaneseq
    %v5037 = vshrl.u32 %v5036, 7
    %v5038 = vsub.s32 0, %v5037
    %v5039 = vrot.slane %v4990, %v5038
    %v5041 = vadd.f32 %v5033, %v5039
    %v5042 = vadd.f32 %v5034, %v5039
    %v5043 = vpack.c.bf16 %v5041, %v5041
    %v5044 = vpack.c.bf16 %v5042, %v5042
    %v5045 = vld [vmem:[%s20] sm:$0xf]
    %v5046 = vld [vmem:[%s20 + $0x4] sm:$0xf]
    %v5047 = vld [vmem:[%s20 + $0x8] sm:$0xf]
    %v5048 = vld [vmem:[%s20 + $0xc] sm:$0xf]
    %v5049 = vld [vmem:[%s20 + $0x10] sm:$0xf]
    %v5050 = vld [vmem:[%s20 + $0x14] sm:$0xf]
    %v5051 = vld [vmem:[%s20 + $0x18] sm:$0xf]
    %v5052 = vld [vmem:[%s20 + $0x1c] sm:$0xf]
    %v5053 = vld [vmem:[%s20 + $0x20] sm:$0xf]
    %v5054 = vld [vmem:[%s20 + $0x24] sm:$0xf]
    %v5055 = vld [vmem:[%s20 + $0x28] sm:$0xf]
    %v5056 = vld [vmem:[%s20 + $0x2c] sm:$0xf]
    %v5057 = vld [vmem:[%s20 + $0x30] sm:$0xf]
    %v5058 = vld [vmem:[%s20 + $0x34] sm:$0xf]
    %v5059 = vld [vmem:[%s20 + $0x38] sm:$0xf]
    %v5060 = vld [vmem:[%s20 + $0x3c] sm:$0xf]
    %v5061 = vld [vmem:[%s21] sm:$0x1]
    %v5063 = vlaneseq
    %v5064 = vshrl.u32 %v5063, 7
    %v5065 = vsub.s32 0, %v5064
    %v5066 = vrot.slane %v5061, %v5065
    %v5070 = vunpack.c.l.b16 %v5043
    %v5071 = vunpack.c.l.b16 %v5044
    %v5072 = vrot.slane %v5071, 7
    %v5073 = vsel %vm4994, %v5072, %v5070
    %v5074 = vpack.c.b16 %v5073, %v5073
    %v5092 = vunpack.c.l.b16 %v5045
    %v5093 = vunpack.c.l.b16 %v5046
    %v5094 = vunpack.c.l.b16 %v5047
    %v5095 = vunpack.c.l.b16 %v5048
    %v5096 = vunpack.c.l.b16 %v5049
    %v5097 = vunpack.c.l.b16 %v5050
    %v5098 = vunpack.c.l.b16 %v5051
    %v5099 = vunpack.c.l.b16 %v5052
    %v5100 = vunpack.c.l.b16 %v5053
    %v5101 = vunpack.c.l.b16 %v5054
    %v5102 = vunpack.c.l.b16 %v5055
    %v5103 = vunpack.c.l.b16 %v5056
    %v5104 = vunpack.c.l.b16 %v5057
    %v5105 = vunpack.c.l.b16 %v5058
    %v5106 = vunpack.c.l.b16 %v5059
    %v5107 = vunpack.c.l.b16 %v5060
    %v5108 = vpack.c.b16 %v5093, %v5092
    %v5109 = vpack.c.b16 %v5095, %v5094
    %v5110 = vpack.c.b16 %v5097, %v5096
    %v5111 = vpack.c.b16 %v5099, %v5098
    %v5112 = vpack.c.b16 %v5101, %v5100
    %v5113 = vpack.c.b16 %v5103, %v5102
    %v5114 = vpack.c.b16 %v5105, %v5104
    %v5115 = vpack.c.b16 %v5107, %v5106
    %5124 = vmatprep.subr.bf16.mxu0 0
    %5125 = vmatpush1.bf16.msra.mxu0 %v5115
    %5126 = vmatprep.subr.bf16.mxu0 0
    %5127 = vmatpush1.bf16.msra.mxu0 %v5114
    %5128 = vmatprep.subr.bf16.mxu0 0
    %5129 = vmatpush1.bf16.msra.mxu0 %v5113
    %5130 = vmatprep.subr.bf16.mxu0 0
    %5131 = vmatpush1.bf16.msra.mxu0 %v5112
    %5132 = vmatprep.subr.bf16.mxu0 0
    %5133 = vmatpush1.bf16.msra.mxu0 %v5111
    %5134 = vmatprep.subr.bf16.mxu0 0
    %5135 = vmatpush1.bf16.msra.mxu0 %v5110
    %5136 = vmatprep.subr.bf16.mxu0 0
    %5137 = vmatpush1.bf16.msra.mxu0 %v5109
    %5138 = vmatprep.subr.bf16.mxu0 0
    %5139 = vmatpush1.bf16.msra.mxu0 %v5108
    %5140 = vmatprep.subr.bf16.mxu0 0
    %5141 = vmatpush2.bf16.msra.mxu0 0
    %5142 = vmatprep.subr.bf16.mxu0 0
    %5143 = vmatpush2.bf16.msra.mxu0 0
    %5144 = vmatprep.subr.bf16.mxu0 0
    %5145 = vmatpush2.bf16.msra.mxu0 0
    %5146 = vmatprep.subr.bf16.mxu0 0
    %5147 = vmatpush2.bf16.msra.mxu0 0
    %5148 = vmatprep.subr.bf16.mxu0 0
    %5149 = vmatpush2.bf16.msra.mxu0 0
    %5150 = vmatprep.subr.bf16.mxu0 0
    %5151 = vmatpush2.bf16.msra.mxu0 0
    %5152 = vmatprep.subr.bf16.mxu0 0
    %5153 = vmatpush2.bf16.msra.mxu0 0
    %5154 = vmatprep.subr.bf16.mxu0 0
    %5155 = vmatpush2.bf16.msra.mxu0 0
    %5156 = vmatprep.mubr.bf16.mxu0 0
    %5157 = vmatmul.mubr.bf16.gmra.mxu0 %v5074
    %v5158 = vpop.f32.mrf.mxu0
    %v5159 = vadd.f32 %v5066, %v5158
    %v5160 = vpop.f32.mrf.mxu0
    %v5161 = vpop.f32.mrf.mxu0
    %v5162 = vpop.f32.mrf.mxu0
    %5163 = vdwg.mxu0
    %5164 = vst [vmem:[#allocation2] sm:$0x3] %v5159
    // Predicated region
    $region90: #{vit_forward.1} parent=1 // pred_check
      _
    $region91: #{vit_forward.1} parent=1 // pred_check_branch
      %5166 = sbr.rel (0) target = $region93
    $region92: #{vit_forward.1} parent=1 // pred_region
      %s5168 = ssub.s32 32, 32
      %5169 = vsyncadd [#allocation3], %s5168
      %s5171 = sshll.u32 [#allocation2], 4
      %s5172 = int_to_ptr.vmem [resolvable:$true] %s5171
      %5174 = dma.vmem_to_hbm [thread:$0]  %s5172, 32, %s22, [#allocation3]
    $region93: #{vit_forward.1} parent=1 // pred_fallthru
      _
    // Predicated region
    $region94: #{vit_forward.1} parent=1 // pred_check
      _
    $region95: #{vit_forward.1} parent=1 // pred_check_branch
      %5176 = sbr.rel (0) target = $region97
    $region96: #{vit_forward.1} parent=1 // pred_region
      %5177 = dma.done [#allocation3], 32
    $region97: #{vit_forward.1} parent=1 // pred_fallthru
      _
    %5178 = vsyncpa [#allocation3], 1

</llo_original>
